<compile_context>
chip_gen: v5e
topology: v5e:2x2
jax: 0.10.0
libtpu: 0.0.40
codegen_flags: <defaults>
</compile_context>

<pallas_src>
import functools

import jax
import jax.numpy as jnp
from jax import lax
from jax.experimental import pallas as pl
from jax.experimental.pallas import tpu as pltpu


# ------------------------------ fused kernel --------------------------------


def _resnext_block_kernel(tile_h, W,
                          x_body_ref, x_top_ref, x_bot_ref,
                          w1_ref, w2_ref, w3_ref,
                          s1_ref, b1_ref, s2_ref, b2_ref, s3_ref, b3_ref,
                          o_ref, h_scr, acc_scr):
    TM = tile_h * W                    # output rows of this tile
    rows = (tile_h + 2) * W            # rows of the haloed conv1 slab

    i = pl.program_id(1)
    top_valid = jnp.where(i > 0, 1.0, 0.0)
    bot_valid = jnp.where(i < pl.num_programs(1) - 1, 1.0, 0.0)

    # ---- stage 1: 1x1 conv + BN + ReLU over the (tile_h + 2)-row halo slab ----
    w1 = w1_ref[...]
    s1 = s1_ref[...]
    b1 = b1_ref[...]

    def conv1(x_bf16):
        y = jnp.dot(x_bf16, w1, preferred_element_type=jnp.float32)
        return jnp.maximum(y * s1 + b1, 0.0)

    # Halo rows outside the image must be ZERO (they stand in for conv2's zero
    # padding of the conv1 output), hence the multiply by the {0,1} flags.
    h_scr[0:W, :] = conv1(x_top_ref[...]) * top_valid
    h_scr[W:W + TM, :] = conv1(x_body_ref[...])
    h_scr[W + TM:rows, :] = conv1(x_bot_ref[...]) * bot_valid

    # ---- stage 2: grouped 3x3 conv (dense block-diagonal weight) + BN + ReLU --
    # Flattened-row shifted matmuls: dy -> sublane-aligned row slice (W % 8 == 0),
    # dx -> pltpu.roll by +-1 row (XLU) + mask of columns that fall off the image.
    h_all = h_scr[...]                                           # (rows, width) f32
    col = lax.broadcasted_iota(jnp.int32, (rows, 1), 0) % W
    h_m = jnp.where(col == 0, 0.0, pltpu.roll(h_all, 1, axis=0))              # x-1
    h_p = jnp.where(col == W - 1, 0.0, pltpu.roll(h_all, rows - 1, axis=0))   # x+1
    taps = (h_m.astype(jnp.bfloat16),
            h_all.astype(jnp.bfloat16),
            h_p.astype(jnp.bfloat16))

    for t in range(9):
        dy, dx = divmod(t, 3)
        src = taps[dx][dy * W:dy * W + TM, :]
        contrib = jnp.dot(src, w2_ref[t], preferred_element_type=jnp.float32)
        if t == 0:
            acc_scr[...] = contrib
        else:
            acc_scr[...] += contrib

    h2 = jnp.maximum(acc_scr[...] * s2_ref[...] + b2_ref[...], 0.0)
    h2 = h2.astype(jnp.bfloat16)

    # ---- stage 3: 1x1 conv + BN (act=False), residual add, final ReLU ---------
    y = jnp.dot(h2, w3_ref[...], preferred_element_type=jnp.float32)
    y = y * s3_ref[...] + b3_ref[...] + x_body_ref[...].astype(jnp.float32)
    o_ref[...] = jnp.maximum(y, 0.0)


# -------------------------------- wrapper ------------------------------------


def _pick_tile_h(H, W, target_rows=1024):
    # Largest divisor of H whose tile (tile_h * W rows) stays within target_rows.
    # Budget note: ~1-2K rows is a good target for v5e/v6e (128 MiB VMEM); halve
    # it on v7x (64 MiB VMEM).
    best = 1
    for t in range(1, H + 1):
        if H % t == 0 and t * W <= target_rows:
            best = t
    return best


def residual_block_forward(x_nchw, params, tile_h=None):
    """ResidualBlock.forward (bottleneck, stride=1, down_sample=None)."""
    N, Cin, H, W = x_nchw.shape
    width = params["w1"].shape[1]
    Cout = params["w3"].shape[1]

    assert Cin == Cout, "identity skip requires in_channels == out_channels"
    assert W % 8 == 0, "W must be a multiple of 8 (sublane-aligned row slices)"
    assert Cin % 128 == 0 and width % 128 == 0 and Cout % 128 == 0, \
        "channel dims must be lane-dense (multiples of 128)"

    if tile_h is None:
        tile_h = _pick_tile_h(H, W)
    tile_h = min(tile_h, H)
    assert H % tile_h == 0, "H must be divisible by tile_h"
    n_h = H // tile_h
    TM = tile_h * W
    M = N * H * W

    # NCHW -> channels-last (M, C) glue; bf16 activations for the MXU / HBM.
    # TODO(synk): keeping the whole model in NHWC would remove these two boundary
    # transposes (one extra HBM pass each); kept here to preserve the NCHW API.
    x2d = jnp.transpose(x_nchw, (0, 2, 3, 1)).reshape(M, Cin).astype(jnp.bfloat16)

    kernel = functools.partial(_resnext_block_kernel, tile_h, W)

    flops = 2 * M * (Cin * width + 9 * width * width + width * Cout)
    bytes_accessed = (M * Cin * 2                       # body rows (bf16)
                      + 2 * N * n_h * W * Cin * 2       # halo rows (bf16)
                      + M * Cout * 4                    # f32 output
                      + (Cin * width + 9 * width * width + width * Cout) * 2
                      + 4 * (4 * width + 2 * Cout))     # folded BN scale/bias

    out2d = pl.pallas_call(
        kernel,
        out_shape=jax.ShapeDtypeStruct((M, Cout), jnp.float32),
        grid_spec=pltpu.PrefetchScalarGridSpec(
            num_scalar_prefetch=0,
            grid=(N, n_h),
            in_specs=[
                # tile body rows: conv1 input and the residual identity
                pl.BlockSpec((TM, Cin), lambda n, i: (n * n_h + i, 0)),
                # one-row halos (image row clamped at the borders; the kernel
                # zeroes the resulting conv1 rows when they fall off the image)
                pl.BlockSpec((W, Cin),
                             lambda n, i: (n * H + jnp.maximum(i * tile_h - 1, 0), 0)),
                pl.BlockSpec((W, Cin),
                             lambda n, i: (n * H + jnp.minimum((i + 1) * tile_h, H - 1), 0)),
                # weights / folded BN params: same block every grid step
                pl.BlockSpec((Cin, width), lambda n, i: (0, 0)),
                pl.BlockSpec((9, width, width), lambda n, i: (0, 0, 0)),
                pl.BlockSpec((width, Cout), lambda n, i: (0, 0)),
                pl.BlockSpec((1, width), lambda n, i: (0, 0)),
                pl.BlockSpec((1, width), lambda n, i: (0, 0)),
                pl.BlockSpec((1, width), lambda n, i: (0, 0)),
                pl.BlockSpec((1, width), lambda n, i: (0, 0)),
                pl.BlockSpec((1, Cout), lambda n, i: (0, 0)),
                pl.BlockSpec((1, Cout), lambda n, i: (0, 0)),
            ],
            out_specs=pl.BlockSpec((TM, Cout), lambda n, i: (n * n_h + i, 0)),
            scratch_shapes=[
                pltpu.VMEM(((tile_h + 2) * W, width), jnp.float32),  # conv1 slab
                pltpu.VMEM((TM, width), jnp.float32),                # 3x3 accumulator
            ],
        ),
        compiler_params=pltpu.CompilerParams(
            dimension_semantics=("parallel", "parallel"),
            vmem_limit_bytes=32 * 1024 * 1024,
        ),
        cost_estimate=pl.CostEstimate(flops=flops, transcendentals=0,
                                      bytes_accessed=bytes_accessed),
    )(x2d, x2d, x2d,
      params["w1_bf16"], params["w2_bf16"], params["w3_bf16"],
      params["s1"], params["b1"], params["s2"], params["b2"],
      params["s3"], params["b3"])

    # (M, Cout) -> NCHW glue.
    return jnp.transpose(out2d.reshape(N, H, W, Cout), (0, 3, 1, 2))


# --------------------------- parameter construction --------------------------


def _bn_fold(key, c, eps=1e-5):
    k = jax.random.split(key, 4)
    gamma = 1.0 + 0.1 * jax.random.normal(k[0], (c,), jnp.float32)
    beta = 0.1 * jax.random.normal(k[1], (c,), jnp.float32)
    running_mean = 0.1 * jax.random.normal(k[2], (c,), jnp.float32)
    running_var = jnp.abs(jax.random.normal(k[3], (c,), jnp.float32)) + 0.5
    scale = gamma / jnp.sqrt(running_var + eps)
    bias = beta - running_mean * scale
    return scale.reshape(1, c), bias.reshape(1, c)


def make_params(key, in_ch, out_ch, groups=32, bottleneck_width=4):
    width = groups * bottleneck_width
    cpg = width // groups
    ks = jax.random.split(key, 6)

    # conv1: PyTorch weight (width, in_ch, 1, 1) stored here as (in_ch, width).
    w1 = 0.1 * jax.random.normal(ks[0], (in_ch, width), jnp.float32)
    # conv2 (grouped): PyTorch weight (width, width//groups, 3, 3).
    w2_oihw = 0.1 * jax.random.normal(ks[1], (width, cpg, 3, 3), jnp.float32)
    # conv3: PyTorch weight (out_ch, width, 1, 1) stored here as (width, out_ch).
    w3 = 0.1 * jax.random.normal(ks[2], (width, out_ch), jnp.float32)

    # Dense block-diagonal (3, 3, width, width) weight for the grouped conv:
    # dense[ky, kx, g*cpg + i_in, o] = w2_oihw[o, i_in, ky, kx] for o in group g.
    # (Fine for width=128 / groups=32; for much larger width prefer per-group
    #  packing to avoid multiplying zeros on the MXU.)
    w2g = w2_oihw.reshape(groups, cpg, cpg, 3, 3)       # (g, o_in_g, i_in_g, ky, kx)
    blocks = jnp.transpose(w2g, (3, 4, 0, 2, 1))        # (ky, kx, g, in, out)
    w2_dense = jnp.zeros((3, 3, width, width), jnp.float32)
    for g in range(groups):
        w2_dense = w2_dense.at[:, :, g * cpg:(g + 1) * cpg,
                               g * cpg:(g + 1) * cpg].set(blocks[:, :, g])

    s1, b1 = _bn_fold(ks[3], width)
    s2, b2 = _bn_fold(ks[4], width)
    s3, b3 = _bn_fold(ks[5], out_ch)

    return dict(
        w1=w1, w2_oihw=w2_oihw, w3=w3,
        w1_bf16=w1.astype(jnp.bfloat16),
        w2_bf16=w2_dense.reshape(9, width, width).astype(jnp.bfloat16),
        w3_bf16=w3.astype(jnp.bfloat16),
        s1=s1, b1=b1, s2=s2, b2=b2, s3=s3, b3=b3,
        groups=groups)


# ------------------------------ plain-JAX reference --------------------------


def reference_forward(x_nchw, params, mxu_dtype=None):
    """Reference. mxu_dtype=jnp.bfloat16 mimics the kernel's bf16 MXU inputs."""
    def conv_block(h, w_oihw, scale, bias, relu, groups=1, padding=0):
        if mxu_dtype is not None:
            h = h.astype(mxu_dtype)
            w_oihw = w_oihw.astype(mxu_dtype)
        y = lax.conv_general_dilated(
            h, w_oihw, (1, 1), [(padding, padding), (padding, padding)],
            dimension_numbers=("NCHW", "OIHW", "NCHW"),
            feature_group_count=groups,
            preferred_element_type=jnp.float32,
            precision=lax.Precision.HIGHEST)
        y = y * scale.reshape(1, -1, 1, 1) + bias.reshape(1, -1, 1, 1)
        return jnp.maximum(y, 0.0) if relu else y

    in_ch = x_nchw.shape[1]
    width = params["w1"].shape[1]
    out_ch = params["w3"].shape[1]
    w1_oihw = params["w1"].T.reshape(width, in_ch, 1, 1)
    w3_oihw = params["w3"].T.reshape(out_ch, width, 1, 1)

    if mxu_dtype is not None:
        identity = x_nchw.astype(mxu_dtype).astype(jnp.float32)
    else:
        identity = x_nchw
    h = conv_block(x_nchw, w1_oihw, params["s1"], params["b1"], True)
    h = conv_block(h, params["w2_oihw"], params["s2"], params["b2"], True,
                   groups=params["groups"], padding=1)
    h = conv_block(h, w3_oihw, params["s3"], params["b3"], False)
    return jnp.maximum(h + identity, 0.0)


# ----------------------------------- main ------------------------------------


if __name__ == "__main__":
    # Small shapes consistent with the module defaults: groups=32,
    # bottleneck_width=4 -> width=128; identity skip needs Cin == Cout; channels
    # chosen as 128 so the lane dim is dense.
    N, C, H, W = 2, 128, 16, 16

    key = jax.random.PRNGKey(0)
    kx, kp = jax.random.split(key)
    x = jax.random.normal(kx, (N, C, H, W), jnp.float32)
    params = make_params(kp, in_ch=C, out_ch=C, groups=32, bottleneck_width=4)

    fwd = jax.jit(residual_block_forward, static_argnames=("tile_h",))
    # tile_h=8 -> 2 H-tiles per image so the halo paths (edge + interior) are exercised.
    out = jax.block_until_ready(fwd(x, params, tile_h=8))

    # Reference 1: same math as the kernel (bf16 MXU inputs, f32 accumulation).
    ref_bf16 = jax.block_until_ready(
        reference_forward(x, params, mxu_dtype=jnp.bfloat16))
    # Reference 2: full-f32 reference of the original module.
    ref_f32 = jax.block_until_ready(reference_forward(x, params))

    assert out.shape == ref_f32.shape == (N, C, H, W)
    err_matched = float(jnp.max(jnp.abs(out - ref_bf16)))
    err_f32 = float(jnp.max(jnp.abs(out - ref_f32)))
    assert err_matched < 5e-3, f"mismatch vs bf16-matched reference: {err_matched}"
    assert err_f32 < 0.5, f"mismatch vs f32 reference: {err_f32}"

    print("KERNEL_OK")
</pallas_src>

<mosaic_0001>
module attributes {stable_mosaic.version = 11 : i64} {
  func.func @_resnext_block_kernel(%arg0: i32, %arg1: i32, %arg2: memref<128x128xbf16, #tpu.memory_space<vmem>>, %arg3: memref<16x128xbf16, #tpu.memory_space<vmem>>, %arg4: memref<16x128xbf16, #tpu.memory_space<vmem>>, %arg5: memref<128x128xbf16, #tpu.memory_space<vmem>>, %arg6: memref<9x128x128xbf16, #tpu.memory_space<vmem>>, %arg7: memref<128x128xbf16, #tpu.memory_space<vmem>>, %arg8: memref<1x128xf32, #tpu.memory_space<vmem>>, %arg9: memref<1x128xf32, #tpu.memory_space<vmem>>, %arg10: memref<1x128xf32, #tpu.memory_space<vmem>>, %arg11: memref<1x128xf32, #tpu.memory_space<vmem>>, %arg12: memref<1x128xf32, #tpu.memory_space<vmem>>, %arg13: memref<1x128xf32, #tpu.memory_space<vmem>>, %arg14: memref<128x128xf32, #tpu.memory_space<vmem>>, %arg15: memref<160x128xf32, #tpu.memory_space<vmem>>, %arg16: memref<128x128xf32, #tpu.memory_space<vmem>>) attributes {dimension_semantics = [#tpu.dimension_semantics<parallel>, #tpu.dimension_semantics<parallel>], iteration_bounds = array<i64: 2, 2>, scalar_prefetch = 0 : i64, scratch_operands = 2 : i64, tpu.core_type = #tpu.core_type<tc>, window_params = [{transform_indices = @transform_0, window_bounds = array<i64: 128, 128>}, {transform_indices = @transform_1, window_bounds = array<i64: 16, 128>}, {transform_indices = @transform_2, window_bounds = array<i64: 16, 128>}, {pipeline_mode = #tpu.pipeline_mode<synchronous>, transform_indices = @transform_3, window_bounds = array<i64: 128, 128>}, {pipeline_mode = #tpu.pipeline_mode<synchronous>, transform_indices = @transform_4, window_bounds = array<i64: 9, 128, 128>}, {pipeline_mode = #tpu.pipeline_mode<synchronous>, transform_indices = @transform_5, window_bounds = array<i64: 128, 128>}, {pipeline_mode = #tpu.pipeline_mode<synchronous>, transform_indices = @transform_6, window_bounds = array<i64: 1, 128>}, {pipeline_mode = #tpu.pipeline_mode<synchronous>, transform_indices = @transform_7, window_bounds = array<i64: 1, 128>}, {pipeline_mode = #tpu.pipeline_mode<synchronous>, transform_indices = @transform_8, window_bounds = array<i64: 1, 128>}, {pipeline_mode = #tpu.pipeline_mode<synchronous>, transform_indices = @transform_9, window_bounds = array<i64: 1, 128>}, {pipeline_mode = #tpu.pipeline_mode<synchronous>, transform_indices = @transform_10, window_bounds = array<i64: 1, 128>}, {pipeline_mode = #tpu.pipeline_mode<synchronous>, transform_indices = @transform_11, window_bounds = array<i64: 1, 128>}, {transform_indices = @transform_12, window_bounds = array<i64: 128, 128>}]} {
    %c0_i32 = arith.constant 0 : i32
    %0 = arith.cmpi sgt, %arg1, %c0_i32 : i32
    %cst = arith.constant 1.000000e+00 : f32
    %cst_0 = arith.constant 0.000000e+00 : f32
    %1 = arith.select %0, %cst, %cst_0 : f32
    %c1_i32 = arith.constant 1 : i32
    %2 = arith.cmpi slt, %arg1, %c1_i32 : i32
    %cst_1 = arith.constant 1.000000e+00 : f32
    %cst_2 = arith.constant 0.000000e+00 : f32
    %3 = arith.select %2, %cst_1, %cst_2 : f32
    %c0 = arith.constant 0 : index
    %c0_3 = arith.constant 0 : index
    %4 = vector.load %arg5[%c0, %c0_3] : memref<128x128xbf16, #tpu.memory_space<vmem>>, vector<128x128xbf16>
    %c0_4 = arith.constant 0 : index
    %c0_5 = arith.constant 0 : index
    %5 = vector.load %arg8[%c0_4, %c0_5] : memref<1x128xf32, #tpu.memory_space<vmem>>, vector<1x128xf32>
    %c0_6 = arith.constant 0 : index
    %c0_7 = arith.constant 0 : index
    %6 = vector.load %arg9[%c0_6, %c0_7] : memref<1x128xf32, #tpu.memory_space<vmem>>, vector<1x128xf32>
    %c0_8 = arith.constant 0 : index
    %c0_9 = arith.constant 0 : index
    %7 = vector.load %arg3[%c0_8, %c0_9] : memref<16x128xbf16, #tpu.memory_space<vmem>>, vector<16x128xbf16>
    %cst_10 = arith.constant dense<0.000000e+00> : vector<16x128xf32>
    %8 = tpu.matmul %7, %4, %cst_10 {dimension_numbers = #tpu.dot_dimension_numbers<[1], [0], [0], [1], [0, 0, 1, 1], [], []>} : vector<16x128xbf16>, vector<128x128xbf16>, vector<16x128xf32> -> vector<16x128xf32>
    %9 = vector.broadcast %5 : vector<1x128xf32> to vector<16x128xf32>
    %10 = arith.mulf %8, %9 : vector<16x128xf32>
    %11 = vector.broadcast %6 : vector<1x128xf32> to vector<16x128xf32>
    %12 = arith.addf %10, %11 : vector<16x128xf32>
    %cst_11 = arith.constant 0.000000e+00 : f32
    %13 = vector.broadcast %cst_11 : f32 to vector<16x128xf32>
    %14 = arith.maximumf %12, %13 : vector<16x128xf32>
    %15 = vector.broadcast %1 : f32 to vector<16x128xf32>
    %16 = arith.mulf %14, %15 : vector<16x128xf32>
    %c0_12 = arith.constant 0 : index
    %c0_13 = arith.constant 0 : index
    %17 = vector.load %arg15[%c0_12, %c0_13] : memref<160x128xf32, #tpu.memory_space<vmem>>, vector<16x128xf32>
    tpu.vector_store %arg15[%c0_12, %c0_13], %16 {strides = array<i32>} : memref<160x128xf32, #tpu.memory_space<vmem>>, vector<16x128xf32>,
    %c0_14 = arith.constant 0 : index
    %c0_15 = arith.constant 0 : index
    %18 = vector.load %arg2[%c0_14, %c0_15] : memref<128x128xbf16, #tpu.memory_space<vmem>>, vector<128x128xbf16>
    %cst_16 = arith.constant dense<0.000000e+00> : vector<128x128xf32>
    %19 = tpu.matmul %18, %4, %cst_16 {dimension_numbers = #tpu.dot_dimension_numbers<[1], [0], [0], [1], [0, 0, 1, 1], [], []>} : vector<128x128xbf16>, vector<128x128xbf16>, vector<128x128xf32> -> vector<128x128xf32>
    %20 = vector.broadcast %5 : vector<1x128xf32> to vector<128x128xf32>
    %21 = arith.mulf %19, %20 : vector<128x128xf32>
    %22 = vector.broadcast %6 : vector<1x128xf32> to vector<128x128xf32>
    %23 = arith.addf %21, %22 : vector<128x128xf32>
    %cst_17 = arith.constant 0.000000e+00 : f32
    %24 = vector.broadcast %cst_17 : f32 to vector<128x128xf32>
    %25 = arith.maximumf %23, %24 : vector<128x128xf32>
    %c16 = arith.constant 16 : index
    %c0_18 = arith.constant 0 : index
    %26 = vector.load %arg15[%c16, %c0_18] : memref<160x128xf32, #tpu.memory_space<vmem>>, vector<128x128xf32>
    tpu.vector_store %arg15[%c16, %c0_18], %25 {strides = array<i32>} : memref<160x128xf32, #tpu.memory_space<vmem>>, vector<128x128xf32>,
    %c0_19 = arith.constant 0 : index
    %c0_20 = arith.constant 0 : index
    %27 = vector.load %arg4[%c0_19, %c0_20] : memref<16x128xbf16, #tpu.memory_space<vmem>>, vector<16x128xbf16>
    %cst_21 = arith.constant dense<0.000000e+00> : vector<16x128xf32>
    %28 = tpu.matmul %27, %4, %cst_21 {dimension_numbers = #tpu.dot_dimension_numbers<[1], [0], [0], [1], [0, 0, 1, 1], [], []>} : vector<16x128xbf16>, vector<128x128xbf16>, vector<16x128xf32> -> vector<16x128xf32>
    %29 = vector.broadcast %5 : vector<1x128xf32> to vector<16x128xf32>
    %30 = arith.mulf %28, %29 : vector<16x128xf32>
    %31 = vector.broadcast %6 : vector<1x128xf32> to vector<16x128xf32>
    %32 = arith.addf %30, %31 : vector<16x128xf32>
    %cst_22 = arith.constant 0.000000e+00 : f32
    %33 = vector.broadcast %cst_22 : f32 to vector<16x128xf32>
    %34 = arith.maximumf %32, %33 : vector<16x128xf32>
    %35 = vector.broadcast %3 : f32 to vector<16x128xf32>
    %36 = arith.mulf %34, %35 : vector<16x128xf32>
    %c144 = arith.constant 144 : index
    %c0_23 = arith.constant 0 : index
    %37 = vector.load %arg15[%c144, %c0_23] : memref<160x128xf32, #tpu.memory_space<vmem>>, vector<16x128xf32>
    tpu.vector_store %arg15[%c144, %c0_23], %36 {strides = array<i32>} : memref<160x128xf32, #tpu.memory_space<vmem>>, vector<16x128xf32>,
    %c0_24 = arith.constant 0 : index
    %c0_25 = arith.constant 0 : index
    %38 = vector.load %arg15[%c0_24, %c0_25] : memref<160x128xf32, #tpu.memory_space<vmem>>, vector<160x128xf32>
    %39 = tpu.iota {dimensions = array<i32: 0>} : vector<160x1xi32>
    %c16_i32 = arith.constant 16 : i32
    %c0_i32_26 = arith.constant 0 : i32
    %40 = arith.cmpi eq, %c16_i32, %c0_i32_26 : i32
    %c1_i32_27 = arith.constant 1 : i32
    %41 = arith.select %40, %c1_i32_27, %c16_i32 : i32
    %42 = vector.broadcast %41 : i32 to vector<160x1xi32>
    %43 = arith.remsi %39, %42 : vector<160x1xi32>
    %c0_i32_28 = arith.constant 0 : i32
    %44 = vector.broadcast %c0_i32_28 : i32 to vector<160x1xi32>
    %45 = arith.cmpi ne, %43, %44 : vector<160x1xi32>
    %c0_i32_29 = arith.constant 0 : i32
    %46 = vector.broadcast %c0_i32_29 : i32 to vector<160x1xi32>
    %47 = arith.cmpi slt, %43, %46 : vector<160x1xi32>
    %c0_i32_30 = arith.constant 0 : i32
    %48 = arith.cmpi slt, %41, %c0_i32_30 : i32
    %49 = vector.broadcast %48 : i1 to vector<160x1xi1>
    %50 = vector.broadcast %49 : vector<160x1xi1> to vector<160x1xi1>
    %51 = arith.xori %47, %50 : vector<160x1xi1>
    %52 = arith.andi %51, %45 : vector<160x1xi1>
    %53 = vector.broadcast %41 : i32 to vector<160x1xi32>
    %54 = arith.addi %43, %53 : vector<160x1xi32>
    %55 = arith.select %52, %54, %43 : vector<160x1xi1>, vector<160x1xi32>
    %c0_i32_31 = arith.constant 0 : i32
    %56 = vector.broadcast %c0_i32_31 : i32 to vector<160x1xi32>
    %57 = arith.cmpi eq, %55, %56 : vector<160x1xi32>
    %c1_i32_32 = arith.constant 1 : i32
    %58 = tpu.dynamic_rotate %38 by %c1_i32_32 dim 0 : vector<160x128xf32>, i32 -> vector<160x128xf32>
    %cst_33 = arith.constant 0.000000e+00 : f32
    %59 = vector.shape_cast %57 : vector<160x1xi1> to vector<160x1xi1>
    %60 = vector.broadcast %59 : vector<160x1xi1> to vector<160x128xi1>
    %61 = vector.broadcast %cst_33 : f32 to vector<160x128xf32>
    %62 = arith.select %60, %61, %58 : vector<160x128xi1>, vector<160x128xf32>
    %c15_i32 = arith.constant 15 : i32
    %63 = vector.broadcast %c15_i32 : i32 to vector<160x1xi32>
    %64 = arith.cmpi eq, %55, %63 : vector<160x1xi32>
    %c159_i32 = arith.constant 159 : i32
    %65 = tpu.dynamic_rotate %38 by %c159_i32 dim 0 : vector<160x128xf32>, i32 -> vector<160x128xf32>
    %cst_34 = arith.constant 0.000000e+00 : f32
    %66 = vector.shape_cast %64 : vector<160x1xi1> to vector<160x1xi1>
    %67 = vector.broadcast %66 : vector<160x1xi1> to vector<160x128xi1>
    %68 = vector.broadcast %cst_34 : f32 to vector<160x128xf32>
    %69 = arith.select %67, %68, %65 : vector<160x128xi1>, vector<160x128xf32>
    %70 = arith.truncf %62 : vector<160x128xf32> to vector<160x128xbf16>
    %71 = arith.truncf %38 : vector<160x128xf32> to vector<160x128xbf16>
    %72 = arith.truncf %69 : vector<160x128xf32> to vector<160x128xbf16>
    %73 = vector.extract_strided_slice %70 {offsets = [0, 0], sizes = [128, 128], strides = [1, 1]} : vector<160x128xbf16> to vector<128x128xbf16>
    %c0_35 = arith.constant 0 : index
    %c0_36 = arith.constant 0 : index
    %c0_37 = arith.constant 0 : index
    %74 = vector.load %arg6[%c0_35, %c0_36, %c0_37] : memref<9x128x128xbf16, #tpu.memory_space<vmem>>, vector<1x128x128xbf16>
    %75 = vector.shape_cast %74 : vector<1x128x128xbf16> to vector<128x128xbf16>
    %cst_38 = arith.constant dense<0.000000e+00> : vector<128x128xf32>
    %76 = tpu.matmul %73, %75, %cst_38 {dimension_numbers = #tpu.dot_dimension_numbers<[1], [0], [0], [1], [0, 0, 1, 1], [], []>} : vector<128x128xbf16>, vector<128x128xbf16>, vector<128x128xf32> -> vector<128x128xf32>
    %c0_39 = arith.constant 0 : index
    %c0_40 = arith.constant 0 : index
    %77 = vector.load %arg16[%c0_39, %c0_40] : memref<128x128xf32, #tpu.memory_space<vmem>>, vector<128x128xf32>
    tpu.vector_store %arg16[%c0_39, %c0_40], %76 {strides = array<i32>} : memref<128x128xf32, #tpu.memory_space<vmem>>, vector<128x128xf32>,
    %78 = vector.extract_strided_slice %71 {offsets = [0, 0], sizes = [128, 128], strides = [1, 1]} : vector<160x128xbf16> to vector<128x128xbf16>
    %c1 = arith.constant 1 : index
    %c0_41 = arith.constant 0 : index
    %c0_42 = arith.constant 0 : index
    %79 = vector.load %arg6[%c1, %c0_41, %c0_42] : memref<9x128x128xbf16, #tpu.memory_space<vmem>>, vector<1x128x128xbf16>
    %80 = vector.shape_cast %79 : vector<1x128x128xbf16> to vector<128x128xbf16>
    %cst_43 = arith.constant dense<0.000000e+00> : vector<128x128xf32>
    %81 = tpu.matmul %78, %80, %cst_43 {dimension_numbers = #tpu.dot_dimension_numbers<[1], [0], [0], [1], [0, 0, 1, 1], [], []>} : vector<128x128xbf16>, vector<128x128xbf16>, vector<128x128xf32> -> vector<128x128xf32>
    %c0_44 = arith.constant 0 : index
    %c0_45 = arith.constant 0 : index
    %82 = vector.load %arg16[%c0_44, %c0_45] : memref<128x128xf32, #tpu.memory_space<vmem>>, vector<128x128xf32>
    %83 = arith.addf %82, %81 : vector<128x128xf32>
    %c0_46 = arith.constant 0 : index
    %c0_47 = arith.constant 0 : index
    %84 = vector.load %arg16[%c0_46, %c0_47] : memref<128x128xf32, #tpu.memory_space<vmem>>, vector<128x128xf32>
    tpu.vector_store %arg16[%c0_46, %c0_47], %83 {strides = array<i32>} : memref<128x128xf32, #tpu.memory_space<vmem>>, vector<128x128xf32>,
    %85 = vector.extract_strided_slice %72 {offsets = [0, 0], sizes = [128, 128], strides = [1, 1]} : vector<160x128xbf16> to vector<128x128xbf16>
    %c2 = arith.constant 2 : index
    %c0_48 = arith.constant 0 : index
    %c0_49 = arith.constant 0 : index
    %86 = vector.load %arg6[%c2, %c0_48, %c0_49] : memref<9x128x128xbf16, #tpu.memory_space<vmem>>, vector<1x128x128xbf16>
    %87 = vector.shape_cast %86 : vector<1x128x128xbf16> to vector<128x128xbf16>
    %cst_50 = arith.constant dense<0.000000e+00> : vector<128x128xf32>
    %88 = tpu.matmul %85, %87, %cst_50 {dimension_numbers = #tpu.dot_dimension_numbers<[1], [0], [0], [1], [0, 0, 1, 1], [], []>} : vector<128x128xbf16>, vector<128x128xbf16>, vector<128x128xf32> -> vector<128x128xf32>
    %c0_51 = arith.constant 0 : index
    %c0_52 = arith.constant 0 : index
    %89 = vector.load %arg16[%c0_51, %c0_52] : memref<128x128xf32, #tpu.memory_space<vmem>>, vector<128x128xf32>
    %90 = arith.addf %89, %88 : vector<128x128xf32>
    %c0_53 = arith.constant 0 : index
    %c0_54 = arith.constant 0 : index
    %91 = vector.load %arg16[%c0_53, %c0_54] : memref<128x128xf32, #tpu.memory_space<vmem>>, vector<128x128xf32>
    tpu.vector_store %arg16[%c0_53, %c0_54], %90 {strides = array<i32>} : memref<128x128xf32, #tpu.memory_space<vmem>>, vector<128x128xf32>,
    %92 = vector.extract_strided_slice %70 {offsets = [16, 0], sizes = [128, 128], strides = [1, 1]} : vector<160x128xbf16> to vector<128x128xbf16>
    %c3 = arith.constant 3 : index
    %c0_55 = arith.constant 0 : index
    %c0_56 = arith.constant 0 : index
    %93 = vector.load %arg6[%c3, %c0_55, %c0_56] : memref<9x128x128xbf16, #tpu.memory_space<vmem>>, vector<1x128x128xbf16>
    %94 = vector.shape_cast %93 : vector<1x128x128xbf16> to vector<128x128xbf16>
    %cst_57 = arith.constant dense<0.000000e+00> : vector<128x128xf32>
    %95 = tpu.matmul %92, %94, %cst_57 {dimension_numbers = #tpu.dot_dimension_numbers<[1], [0], [0], [1], [0, 0, 1, 1], [], []>} : vector<128x128xbf16>, vector<128x128xbf16>, vector<128x128xf32> -> vector<128x128xf32>
    %c0_58 = arith.constant 0 : index
    %c0_59 = arith.constant 0 : index
    %96 = vector.load %arg16[%c0_58, %c0_59] : memref<128x128xf32, #tpu.memory_space<vmem>>, vector<128x128xf32>
    %97 = arith.addf %96, %95 : vector<128x128xf32>
    %c0_60 = arith.constant 0 : index
    %c0_61 = arith.constant 0 : index
    %98 = vector.load %arg16[%c0_60, %c0_61] : memref<128x128xf32, #tpu.memory_space<vmem>>, vector<128x128xf32>
    tpu.vector_store %arg16[%c0_60, %c0_61], %97 {strides = array<i32>} : memref<128x128xf32, #tpu.memory_space<vmem>>, vector<128x128xf32>,
    %99 = vector.extract_strided_slice %71 {offsets = [16, 0], sizes = [128, 128], strides = [1, 1]} : vector<160x128xbf16> to vector<128x128xbf16>
    %c4 = arith.constant 4 : index
    %c0_62 = arith.constant 0 : index
    %c0_63 = arith.constant 0 : index
    %100 = vector.load %arg6[%c4, %c0_62, %c0_63] : memref<9x128x128xbf16, #tpu.memory_space<vmem>>, vector<1x128x128xbf16>
    %101 = vector.shape_cast %100 : vector<1x128x128xbf16> to vector<128x128xbf16>
    %cst_64 = arith.constant dense<0.000000e+00> : vector<128x128xf32>
    %102 = tpu.matmul %99, %101, %cst_64 {dimension_numbers = #tpu.dot_dimension_numbers<[1], [0], [0], [1], [0, 0, 1, 1], [], []>} : vector<128x128xbf16>, vector<128x128xbf16>, vector<128x128xf32> -> vector<128x128xf32>
    %c0_65 = arith.constant 0 : index
    %c0_66 = arith.constant 0 : index
    %103 = vector.load %arg16[%c0_65, %c0_66] : memref<128x128xf32, #tpu.memory_space<vmem>>, vector<128x128xf32>
    %104 = arith.addf %103, %102 : vector<128x128xf32>
    %c0_67 = arith.constant 0 : index
    %c0_68 = arith.constant 0 : index
    %105 = vector.load %arg16[%c0_67, %c0_68] : memref<128x128xf32, #tpu.memory_space<vmem>>, vector<128x128xf32>
    tpu.vector_store %arg16[%c0_67, %c0_68], %104 {strides = array<i32>} : memref<128x128xf32, #tpu.memory_space<vmem>>, vector<128x128xf32>,
    %106 = vector.extract_strided_slice %72 {offsets = [16, 0], sizes = [128, 128], strides = [1, 1]} : vector<160x128xbf16> to vector<128x128xbf16>
    %c5 = arith.constant 5 : index
    %c0_69 = arith.constant 0 : index
    %c0_70 = arith.constant 0 : index
    %107 = vector.load %arg6[%c5, %c0_69, %c0_70] : memref<9x128x128xbf16, #tpu.memory_space<vmem>>, vector<1x128x128xbf16>
    %108 = vector.shape_cast %107 : vector<1x128x128xbf16> to vector<128x128xbf16>
    %cst_71 = arith.constant dense<0.000000e+00> : vector<128x128xf32>
    %109 = tpu.matmul %106, %108, %cst_71 {dimension_numbers = #tpu.dot_dimension_numbers<[1], [0], [0], [1], [0, 0, 1, 1], [], []>} : vector<128x128xbf16>, vector<128x128xbf16>, vector<128x128xf32> -> vector<128x128xf32>
    %c0_72 = arith.constant 0 : index
    %c0_73 = arith.constant 0 : index
    %110 = vector.load %arg16[%c0_72, %c0_73] : memref<128x128xf32, #tpu.memory_space<vmem>>, vector<128x128xf32>
    %111 = arith.addf %110, %109 : vector<128x128xf32>
    %c0_74 = arith.constant 0 : index
    %c0_75 = arith.constant 0 : index
    %112 = vector.load %arg16[%c0_74, %c0_75] : memref<128x128xf32, #tpu.memory_space<vmem>>, vector<128x128xf32>
    tpu.vector_store %arg16[%c0_74, %c0_75], %111 {strides = array<i32>} : memref<128x128xf32, #tpu.memory_space<vmem>>, vector<128x128xf32>,
    %113 = vector.extract_strided_slice %70 {offsets = [32, 0], sizes = [128, 128], strides = [1, 1]} : vector<160x128xbf16> to vector<128x128xbf16>
    %c6 = arith.constant 6 : index
    %c0_76 = arith.constant 0 : index
    %c0_77 = arith.constant 0 : index
    %114 = vector.load %arg6[%c6, %c0_76, %c0_77] : memref<9x128x128xbf16, #tpu.memory_space<vmem>>, vector<1x128x128xbf16>
    %115 = vector.shape_cast %114 : vector<1x128x128xbf16> to vector<128x128xbf16>
    %cst_78 = arith.constant dense<0.000000e+00> : vector<128x128xf32>
    %116 = tpu.matmul %113, %115, %cst_78 {dimension_numbers = #tpu.dot_dimension_numbers<[1], [0], [0], [1], [0, 0, 1, 1], [], []>} : vector<128x128xbf16>, vector<128x128xbf16>, vector<128x128xf32> -> vector<128x128xf32>
    %c0_79 = arith.constant 0 : index
    %c0_80 = arith.constant 0 : index
    %117 = vector.load %arg16[%c0_79, %c0_80] : memref<128x128xf32, #tpu.memory_space<vmem>>, vector<128x128xf32>
    %118 = arith.addf %117, %116 : vector<128x128xf32>
    %c0_81 = arith.constant 0 : index
    %c0_82 = arith.constant 0 : index
    %119 = vector.load %arg16[%c0_81, %c0_82] : memref<128x128xf32, #tpu.memory_space<vmem>>, vector<128x128xf32>
    tpu.vector_store %arg16[%c0_81, %c0_82], %118 {strides = array<i32>} : memref<128x128xf32, #tpu.memory_space<vmem>>, vector<128x128xf32>,
    %120 = vector.extract_strided_slice %71 {offsets = [32, 0], sizes = [128, 128], strides = [1, 1]} : vector<160x128xbf16> to vector<128x128xbf16>
    %c7 = arith.constant 7 : index
    %c0_83 = arith.constant 0 : index
    %c0_84 = arith.constant 0 : index
    %121 = vector.load %arg6[%c7, %c0_83, %c0_84] : memref<9x128x128xbf16, #tpu.memory_space<vmem>>, vector<1x128x128xbf16>
    %122 = vector.shape_cast %121 : vector<1x128x128xbf16> to vector<128x128xbf16>
    %cst_85 = arith.constant dense<0.000000e+00> : vector<128x128xf32>
    %123 = tpu.matmul %120, %122, %cst_85 {dimension_numbers = #tpu.dot_dimension_numbers<[1], [0], [0], [1], [0, 0, 1, 1], [], []>} : vector<128x128xbf16>, vector<128x128xbf16>, vector<128x128xf32> -> vector<128x128xf32>
    %c0_86 = arith.constant 0 : index
    %c0_87 = arith.constant 0 : index
    %124 = vector.load %arg16[%c0_86, %c0_87] : memref<128x128xf32, #tpu.memory_space<vmem>>, vector<128x128xf32>
    %125 = arith.addf %124, %123 : vector<128x128xf32>
    %c0_88 = arith.constant 0 : index
    %c0_89 = arith.constant 0 : index
    %126 = vector.load %arg16[%c0_88, %c0_89] : memref<128x128xf32, #tpu.memory_space<vmem>>, vector<128x128xf32>
    tpu.vector_store %arg16[%c0_88, %c0_89], %125 {strides = array<i32>} : memref<128x128xf32, #tpu.memory_space<vmem>>, vector<128x128xf32>,
    %127 = vector.extract_strided_slice %72 {offsets = [32, 0], sizes = [128, 128], strides = [1, 1]} : vector<160x128xbf16> to vector<128x128xbf16>
    %c8 = arith.constant 8 : index
    %c0_90 = arith.constant 0 : index
    %c0_91 = arith.constant 0 : index
    %128 = vector.load %arg6[%c8, %c0_90, %c0_91] : memref<9x128x128xbf16, #tpu.memory_space<vmem>>, vector<1x128x128xbf16>
    %129 = vector.shape_cast %128 : vector<1x128x128xbf16> to vector<128x128xbf16>
    %cst_92 = arith.constant dense<0.000000e+00> : vector<128x128xf32>
    %130 = tpu.matmul %127, %129, %cst_92 {dimension_numbers = #tpu.dot_dimension_numbers<[1], [0], [0], [1], [0, 0, 1, 1], [], []>} : vector<128x128xbf16>, vector<128x128xbf16>, vector<128x128xf32> -> vector<128x128xf32>
    %c0_93 = arith.constant 0 : index
    %c0_94 = arith.constant 0 : index
    %131 = vector.load %arg16[%c0_93, %c0_94] : memref<128x128xf32, #tpu.memory_space<vmem>>, vector<128x128xf32>
    %132 = arith.addf %131, %130 : vector<128x128xf32>
    %c0_95 = arith.constant 0 : index
    %c0_96 = arith.constant 0 : index
    %133 = vector.load %arg16[%c0_95, %c0_96] : memref<128x128xf32, #tpu.memory_space<vmem>>, vector<128x128xf32>
    tpu.vector_store %arg16[%c0_95, %c0_96], %132 {strides = array<i32>} : memref<128x128xf32, #tpu.memory_space<vmem>>, vector<128x128xf32>,
    %c0_97 = arith.constant 0 : index
    %c0_98 = arith.constant 0 : index
    %134 = vector.load %arg16[%c0_97, %c0_98] : memref<128x128xf32, #tpu.memory_space<vmem>>, vector<128x128xf32>
    %c0_99 = arith.constant 0 : index
    %c0_100 = arith.constant 0 : index
    %135 = vector.load %arg10[%c0_99, %c0_100] : memref<1x128xf32, #tpu.memory_space<vmem>>, vector<1x128xf32>
    %136 = vector.broadcast %135 : vector<1x128xf32> to vector<128x128xf32>
    %137 = arith.mulf %134, %136 : vector<128x128xf32>
    %c0_101 = arith.constant 0 : index
    %c0_102 = arith.constant 0 : index
    %138 = vector.load %arg11[%c0_101, %c0_102] : memref<1x128xf32, #tpu.memory_space<vmem>>, vector<1x128xf32>
    %139 = vector.broadcast %138 : vector<1x128xf32> to vector<128x128xf32>
    %140 = arith.addf %137, %139 : vector<128x128xf32>
    %cst_103 = arith.constant 0.000000e+00 : f32
    %141 = vector.broadcast %cst_103 : f32 to vector<128x128xf32>
    %142 = arith.maximumf %140, %141 : vector<128x128xf32>
    %143 = arith.truncf %142 : vector<128x128xf32> to vector<128x128xbf16>
    %c0_104 = arith.constant 0 : index
    %c0_105 = arith.constant 0 : index
    %144 = vector.load %arg7[%c0_104, %c0_105] : memref<128x128xbf16, #tpu.memory_space<vmem>>, vector<128x128xbf16>
    %cst_106 = arith.constant dense<0.000000e+00> : vector<128x128xf32>
    %145 = tpu.matmul %143, %144, %cst_106 {dimension_numbers = #tpu.dot_dimension_numbers<[1], [0], [0], [1], [0, 0, 1, 1], [], []>} : vector<128x128xbf16>, vector<128x128xbf16>, vector<128x128xf32> -> vector<128x128xf32>
    %c0_107 = arith.constant 0 : index
    %c0_108 = arith.constant 0 : index
    %146 = vector.load %arg12[%c0_107, %c0_108] : memref<1x128xf32, #tpu.memory_space<vmem>>, vector<1x128xf32>
    %147 = vector.broadcast %146 : vector<1x128xf32> to vector<128x128xf32>
    %148 = arith.mulf %145, %147 : vector<128x128xf32>
    %c0_109 = arith.constant 0 : index
    %c0_110 = arith.constant 0 : index
    %149 = vector.load %arg13[%c0_109, %c0_110] : memref<1x128xf32, #tpu.memory_space<vmem>>, vector<1x128xf32>
    %150 = vector.broadcast %149 : vector<1x128xf32> to vector<128x128xf32>
    %151 = arith.addf %148, %150 : vector<128x128xf32>
    %c0_111 = arith.constant 0 : index
    %c0_112 = arith.constant 0 : index
    %152 = vector.load %arg2[%c0_111, %c0_112] : memref<128x128xbf16, #tpu.memory_space<vmem>>, vector<128x128xbf16>
    %153 = arith.extf %152 : vector<128x128xbf16> to vector<128x128xf32>
    %154 = arith.addf %151, %153 : vector<128x128xf32>
    %cst_113 = arith.constant 0.000000e+00 : f32
    %155 = vector.broadcast %cst_113 : f32 to vector<128x128xf32>
    %156 = arith.maximumf %154, %155 : vector<128x128xf32>
    %c0_114 = arith.constant 0 : index
    %c0_115 = arith.constant 0 : index
    %157 = vector.load %arg14[%c0_114, %c0_115] : memref<128x128xf32, #tpu.memory_space<vmem>>, vector<128x128xf32>
    tpu.vector_store %arg14[%c0_114, %c0_115], %156 {strides = array<i32>} : memref<128x128xf32, #tpu.memory_space<vmem>>, vector<128x128xf32>,
    return
  }
  func.func @transform_0(%arg0: i32, %arg1: i32) -> (i32, i32) {
    %c2_i32 = arith.constant 2 : i32
    %0 = arith.muli %arg0, %c2_i32 : i32
    %1 = arith.addi %0, %arg1 : i32
    %c0_i32 = arith.constant 0 : i32
    %c0_i32_0 = arith.constant 0 : i32
    return %1, %c0_i32 : i32, i32
  }
  func.func @transform_1(%arg0: i32, %arg1: i32) -> (i32, i32) {
    %c16_i32 = arith.constant 16 : i32
    %0 = arith.muli %arg0, %c16_i32 : i32
    %c8_i32 = arith.constant 8 : i32
    %1 = arith.muli %arg1, %c8_i32 : i32
    %c1_i32 = arith.constant 1 : i32
    %2 = arith.subi %1, %c1_i32 : i32
    %c0_i32 = arith.constant 0 : i32
    %3 = arith.maxsi %2, %c0_i32 : i32
    %4 = arith.addi %0, %3 : i32
    %c0_i32_0 = arith.constant 0 : i32
    %c0_i32_1 = arith.constant 0 : i32
    return %4, %c0_i32_0 : i32, i32
  }
  func.func @transform_2(%arg0: i32, %arg1: i32) -> (i32, i32) {
    %c16_i32 = arith.constant 16 : i32
    %0 = arith.muli %arg0, %c16_i32 : i32
    %c1_i32 = arith.constant 1 : i32
    %1 = arith.addi %arg1, %c1_i32 : i32
    %c8_i32 = arith.constant 8 : i32
    %2 = arith.muli %1, %c8_i32 : i32
    %c15_i32 = arith.constant 15 : i32
    %3 = arith.minsi %2, %c15_i32 : i32
    %4 = arith.addi %0, %3 : i32
    %c0_i32 = arith.constant 0 : i32
    %c0_i32_0 = arith.constant 0 : i32
    return %4, %c0_i32 : i32, i32
  }
  func.func @transform_3(%arg0: i32, %arg1: i32) -> (i32, i32) {
    %c0_i32 = arith.constant 0 : i32
    %c0_i32_0 = arith.constant 0 : i32
    %c0_i32_1 = arith.constant 0 : i32
    return %c0_i32, %c0_i32_0 : i32, i32
  }
  func.func @transform_4(%arg0: i32, %arg1: i32) -> (i32, i32, i32) {
    %c0_i32 = arith.constant 0 : i32
    %c0_i32_0 = arith.constant 0 : i32
    %c0_i32_1 = arith.constant 0 : i32
    %c0_i32_2 = arith.constant 0 : i32
    return %c0_i32, %c0_i32_0, %c0_i32_1 : i32, i32, i32
  }
  func.func @transform_5(%arg0: i32, %arg1: i32) -> (i32, i32) {
    %c0_i32 = arith.constant 0 : i32
    %c0_i32_0 = arith.constant 0 : i32
    %c0_i32_1 = arith.constant 0 : i32
    return %c0_i32, %c0_i32_0 : i32, i32
  }
  func.func @transform_6(%arg0: i32, %arg1: i32) -> (i32, i32) {
    %c0_i32 = arith.constant 0 : i32
    %c0_i32_0 = arith.constant 0 : i32
    %c0_i32_1 = arith.constant 0 : i32
    return %c0_i32, %c0_i32_0 : i32, i32
  }
  func.func @transform_7(%arg0: i32, %arg1: i32) -> (i32, i32) {
    %c0_i32 = arith.constant 0 : i32
    %c0_i32_0 = arith.constant 0 : i32
    %c0_i32_1 = arith.constant 0 : i32
    return %c0_i32, %c0_i32_0 : i32, i32
  }
  func.func @transform_8(%arg0: i32, %arg1: i32) -> (i32, i32) {
    %c0_i32 = arith.constant 0 : i32
    %c0_i32_0 = arith.constant 0 : i32
    %c0_i32_1 = arith.constant 0 : i32
    return %c0_i32, %c0_i32_0 : i32, i32
  }
  func.func @transform_9(%arg0: i32, %arg1: i32) -> (i32, i32) {
    %c0_i32 = arith.constant 0 : i32
    %c0_i32_0 = arith.constant 0 : i32
    %c0_i32_1 = arith.constant 0 : i32
    return %c0_i32, %c0_i32_0 : i32, i32
  }
  func.func @transform_10(%arg0: i32, %arg1: i32) -> (i32, i32) {
    %c0_i32 = arith.constant 0 : i32
    %c0_i32_0 = arith.constant 0 : i32
    %c0_i32_1 = arith.constant 0 : i32
    return %c0_i32, %c0_i32_0 : i32, i32
  }
  func.func @transform_11(%arg0: i32, %arg1: i32) -> (i32, i32) {
    %c0_i32 = arith.constant 0 : i32
    %c0_i32_0 = arith.constant 0 : i32
    %c0_i32_1 = arith.constant 0 : i32
    return %c0_i32, %c0_i32_0 : i32, i32
  }
  func.func @transform_12(%arg0: i32, %arg1: i32) -> (i32, i32) {
    %c2_i32 = arith.constant 2 : i32
    %0 = arith.muli %arg0, %c2_i32 : i32
    %1 = arith.addi %0, %arg1 : i32
    %c0_i32 = arith.constant 0 : i32
    %c0_i32_0 = arith.constant 0 : i32
    return %1, %c0_i32 : i32, i32
  }
}

</mosaic_0001>

<llo_original>
// kernel: residual_block_forward.1
$region0: #{residual_block_forward.1}
  #allocation0 [shape = 'u32[]', space=smem, size = 0x4, offset = 0x4, fixed_abs, tag = 'smem constant byte address 0x4 - core index']
  #allocation1 [shape = 'u32[72,128]{1,0:T(1,128)}', space=vmem, size = 0x9000, scoped, tag = 'internal scratch']
  #allocation2 [shape = 'f32[160,128]{1,0:T(8,128)}', space=vmem, size = 0x14000, scoped, tag = 'scratch operand']
  #allocation3 [shape = 'f32[128,128]{1,0:T(8,128)}', space=vmem, size = 0x10000, scoped, tag = 'scratch operand']
  %s0 = inlined_call_operand.vmem [shape: bf16[512,128], index: 0, kind: input, shape index: {}, may-alias: {0,1,2}]
  %s1 = inlined_call_operand.vmem [shape: bf16[512,128], index: 1, kind: input, shape index: {}, may-alias: {0,1,2}]
  %s2 = inlined_call_operand.vmem [shape: bf16[512,128], index: 2, kind: input, shape index: {}, may-alias: {0,1,2}]
  %s3 = inlined_call_operand.vmem [shape: bf16[128,128], index: 3, kind: input, shape index: {}]
  %s4 = inlined_call_operand.vmem [shape: bf16[9,128,128], index: 4, kind: input, shape index: {}]
  %s5 = inlined_call_operand.vmem [shape: bf16[128,128], index: 5, kind: input, shape index: {}]
  %s6 = inlined_call_operand.vmem [shape: f32[1,128], index: 6, kind: input, shape index: {}]
  %s7 = inlined_call_operand.vmem [shape: f32[1,128], index: 7, kind: input, shape index: {}]
  %s8 = inlined_call_operand.vmem [shape: f32[1,128], index: 8, kind: input, shape index: {}]
  %s9 = inlined_call_operand.vmem [shape: f32[1,128], index: 9, kind: input, shape index: {}]
  %s10 = inlined_call_operand.vmem [shape: f32[1,128], index: 10, kind: input, shape index: {}]
  %s11 = inlined_call_operand.vmem [shape: f32[1,128], index: 11, kind: input, shape index: {}]
  %s12 = inlined_call_operand.hbm [shape: f32[512,128], index: 12, kind: output, shape index: {}]
  %s13 = sld [smem:[#allocation0]]
  $region81: #{residual_block_forward.1} parent=0
    _
  %s15 = ssub.s32 1, %s13
  %s16 = scalar_select 0, %s15, %s13
  $region1: #{residual_block_forward.1} parent=0
    #allocation4 [shape = 'u8[131072]{0}', space=vmem, size = 0x20000, scoped, tag = 'output window, operand 0']
    #allocation5 [shape = 's32[2]{0}', space=sflag, size = 0x8, scoped, tag = 'scoped memory for residual_block_forward.1']
    %17 = vsyncpa [#allocation5], 0
    %s18 = scalar_lea.sflag [#allocation5], 1
    %19 = vsyncpa %s18, 0
    loop: start=0, step=1, limit=6
    $region2: #{residual_block_forward.1} parent=1 // loop_pre_header
      _
    $region3: #{residual_block_forward.1} parent=1 // loop_header
      %s21 = sphi 0, %s25
      %p22 = scmp.ge.s32.totalorder %s21, 6
      %s28 = sphi 0, %s40
      %s29 = sphi 0, %s36
      %s30 = sphi 0, %s28
      %s31 = sphi 0, %s29
      %s32 = sphi 0, %s30
      %s33 = sphi 0, %s31
      %s47 = sphi 0, %s49
      %s50 = sphi 0, %s47
      %s51 = sphi 0, %s50
      %s67 = sphi 0, %s51
      %s85 = sphi 0, %s87
      %s88 = sphi 0, %s85
      %s89 = sphi 0, %s88
      %s105 = sphi 0, %s89
      %s123 = sphi 0, %s125
      %s126 = sphi 0, %s123
      %s127 = sphi 0, %s126
      %s143 = sphi 0, %s127
      %s147 = sphi 0, %s147
      %s149 = sphi 0, %s147
      %s150 = sphi 0, %s149
      %s164 = sphi 0, %s150
      %s168 = sphi 0, %s168
      %s170 = sphi 0, %s168
      %s171 = sphi 0, %s170
      %s185 = sphi 0, %s171
      %s189 = sphi 0, %s189
      %s191 = sphi 0, %s189
      %s192 = sphi 0, %s191
      %s206 = sphi 0, %s192
      %s210 = sphi 0, %s210
      %s212 = sphi 0, %s210
      %s213 = sphi 0, %s212
      %s227 = sphi 0, %s213
      %s231 = sphi 0, %s231
      %s233 = sphi 0, %s231
      %s234 = sphi 0, %s233
      %s248 = sphi 0, %s234
      %s252 = sphi 0, %s252
      %s254 = sphi 0, %s252
      %s255 = sphi 0, %s254
      %s269 = sphi 0, %s255
      %s273 = sphi 0, %s273
      %s275 = sphi 0, %s273
      %s276 = sphi 0, %s275
      %s290 = sphi 0, %s276
      %s294 = sphi 0, %s294
      %s296 = sphi 0, %s294
      %s297 = sphi 0, %s296
      %s311 = sphi 0, %s297
      %s315 = sphi 0, %s315
      %s317 = sphi 0, %s315
      %s318 = sphi 0, %s317
      %s332 = sphi 0, %s318
      %s342 = sphi 0, %s344
      %s345 = sphi 0, %s342
      %s346 = sphi 0, %s345
      %s362 = sphi 0, %s346
    $region4: #{residual_block_forward.1} parent=1 // loop_header_branch
      %24 = sbr.rel (%p22) target = $region8
    $region5: #{residual_block_forward.1} parent=1 // loop_body
      %s26 = ssub.s32 %s21, 1
      %s27 = ssub.s32 %s21, 2
      %s34 = sadd.s32 1, %s29
      %p35 = scmp.ge.s32.totalorder %s34, 2
      %s36 = scalar_select %p35, 0, %s34
      %s37 = sadd.s32 1, %s28
      %s38 = scalar_select %p35, %s37, %s28
      %p39 = scmp.ge.s32.totalorder %s38, 2
      %s40 = scalar_select %p39, 0, %s38
      %s41 = smul.u32 %s28, 2
      %s42 = sadd.s32 %s41, %s29
      %s43 = smul.u32 %s40, 2
      %s44 = sadd.s32 %s43, %s36
      %s45 = ssub.s32 %s42, %s44
      %p46 = scmp.eq.s32.totalorder %s45, 0
      %s48 = sadd.s32 %s47, 1
      %s49 = scalar_select %p46, %s47, %s48
      %p52 = pneg %p46
      %p53 = scmp.eq.s32.totalorder %s21, 3
      %p54 = por %p52, %p53
      %p55 = scmp.ne.s32.totalorder %s47, %s50
      %p56 = scmp.eq.s32.totalorder %s21, 0
      %p57 = por %p55, %p56
      %p58 = scmp.ne.s32.totalorder %s47, %s50
      %p59 = scmp.eq.s32.totalorder %s26, 3
      %p60 = por %p58, %p59
      %p61 = scmp.ne.s32.totalorder %s50, %s51
      %p62 = scmp.eq.s32.totalorder %s26, 0
      %p63 = por %p61, %p62
      %p64 = scmp.ne.s32.totalorder %s50, %s51
      %p65 = scmp.eq.s32.totalorder %s27, 3
      %p66 = por %p64, %p65
      %p68 = scmp.ne.s32.totalorder %s51, %s67
      %p69 = scmp.eq.s32.totalorder %s27, 0
      %p70 = por %p68, %p69
      %s71 = smul.u32 %s28, 16
      %s72 = smul.u32 %s29, 8
      %s73 = ssub.s32 %s72, 1
      %p74 = scmp.gt.s32.totalorder %s73, 0
      %s75 = scalar_select %p74, %s73, 0
      %s76 = sadd.s32 %s71, %s75
      %s77 = smul.u32 %s40, 16
      %s78 = smul.u32 %s36, 8
      %s79 = ssub.s32 %s78, 1
      %p80 = scmp.gt.s32.totalorder %s79, 0
      %s81 = scalar_select %p80, %s79, 0
      %s82 = sadd.s32 %s77, %s81
      %s83 = ssub.s32 %s76, %s82
      %p84 = scmp.eq.s32.totalorder %s83, 0
      %s86 = sadd.s32 %s85, 1
      %s87 = scalar_select %p84, %s85, %s86
      %p90 = pneg %p84
      %p91 = scmp.eq.s32.totalorder %s21, 3
      %p92 = por %p90, %p91
      %p93 = scmp.ne.s32.totalorder %s85, %s88
      %p94 = scmp.eq.s32.totalorder %s21, 0
      %p95 = por %p93, %p94
      %p96 = scmp.ne.s32.totalorder %s85, %s88
      %p97 = scmp.eq.s32.totalorder %s26, 3
      %p98 = por %p96, %p97
      %p99 = scmp.ne.s32.totalorder %s88, %s89
      %p100 = scmp.eq.s32.totalorder %s26, 0
      %p101 = por %p99, %p100
      %p102 = scmp.ne.s32.totalorder %s88, %s89
      %p103 = scmp.eq.s32.totalorder %s27, 3
      %p104 = por %p102, %p103
      %p106 = scmp.ne.s32.totalorder %s89, %s105
      %p107 = scmp.eq.s32.totalorder %s27, 0
      %p108 = por %p106, %p107
      %s109 = smul.u32 %s28, 16
      %s110 = sadd.s32 %s29, 1
      %s111 = smul.u32 %s110, 8
      %p112 = scmp.lt.s32.totalorder %s111, 15
      %s113 = scalar_select %p112, %s111, 15
      %s114 = sadd.s32 %s109, %s113
      %s115 = smul.u32 %s40, 16
      %s116 = sadd.s32 %s36, 1
      %s117 = smul.u32 %s116, 8
      %p118 = scmp.lt.s32.totalorder %s117, 15
      %s119 = scalar_select %p118, %s117, 15
      %s120 = sadd.s32 %s115, %s119
      %s121 = ssub.s32 %s114, %s120
      %p122 = scmp.eq.s32.totalorder %s121, 0
      %s124 = sadd.s32 %s123, 1
      %s125 = scalar_select %p122, %s123, %s124
      %p128 = pneg %p122
      %p129 = scmp.eq.s32.totalorder %s21, 3
      %p130 = por %p128, %p129
      %p131 = scmp.ne.s32.totalorder %s123, %s126
      %p132 = scmp.eq.s32.totalorder %s21, 0
      %p133 = por %p131, %p132
      %p134 = scmp.ne.s32.totalorder %s123, %s126
      %p135 = scmp.eq.s32.totalorder %s26, 3
      %p136 = por %p134, %p135
      %p137 = scmp.ne.s32.totalorder %s126, %s127
      %p138 = scmp.eq.s32.totalorder %s26, 0
      %p139 = por %p137, %p138
      %p140 = scmp.ne.s32.totalorder %s126, %s127
      %p141 = scmp.eq.s32.totalorder %s27, 3
      %p142 = por %p140, %p141
      %p144 = scmp.ne.s32.totalorder %s127, %s143
      %p145 = scmp.eq.s32.totalorder %s27, 0
      %p146 = por %p144, %p145
      %s148 = sadd.s32 %s147, 1
      %p151 = scmp.eq.s32.totalorder %s21, 3
      %p152 = scmp.ne.s32.totalorder %s147, %s149
      %p153 = scmp.eq.s32.totalorder %s21, 0
      %p154 = por %p152, %p153
      %p155 = scmp.ne.s32.totalorder %s147, %s149
      %p156 = scmp.eq.s32.totalorder %s26, 3
      %p157 = por %p155, %p156
      %p158 = scmp.ne.s32.totalorder %s149, %s150
      %p159 = scmp.eq.s32.totalorder %s26, 0
      %p160 = por %p158, %p159
      %p161 = scmp.ne.s32.totalorder %s149, %s150
      %p162 = scmp.eq.s32.totalorder %s27, 3
      %p163 = por %p161, %p162
      %p165 = scmp.ne.s32.totalorder %s150, %s164
      %p166 = scmp.eq.s32.totalorder %s27, 0
      %p167 = por %p165, %p166
      %s169 = sadd.s32 %s168, 1
      %p172 = scmp.eq.s32.totalorder %s21, 3
      %p173 = scmp.ne.s32.totalorder %s168, %s170
      %p174 = scmp.eq.s32.totalorder %s21, 0
      %p175 = por %p173, %p174
      %p176 = scmp.ne.s32.totalorder %s168, %s170
      %p177 = scmp.eq.s32.totalorder %s26, 3
      %p178 = por %p176, %p177
      %p179 = scmp.ne.s32.totalorder %s170, %s171
      %p180 = scmp.eq.s32.totalorder %s26, 0
      %p181 = por %p179, %p180
      %p182 = scmp.ne.s32.totalorder %s170, %s171
      %p183 = scmp.eq.s32.totalorder %s27, 3
      %p184 = por %p182, %p183
      %p186 = scmp.ne.s32.totalorder %s171, %s185
      %p187 = scmp.eq.s32.totalorder %s27, 0
      %p188 = por %p186, %p187
      %s190 = sadd.s32 %s189, 1
      %p193 = scmp.eq.s32.totalorder %s21, 3
      %p194 = scmp.ne.s32.totalorder %s189, %s191
      %p195 = scmp.eq.s32.totalorder %s21, 0
      %p196 = por %p194, %p195
      %p197 = scmp.ne.s32.totalorder %s189, %s191
      %p198 = scmp.eq.s32.totalorder %s26, 3
      %p199 = por %p197, %p198
      %p200 = scmp.ne.s32.totalorder %s191, %s192
      %p201 = scmp.eq.s32.totalorder %s26, 0
      %p202 = por %p200, %p201
      %p203 = scmp.ne.s32.totalorder %s191, %s192
      %p204 = scmp.eq.s32.totalorder %s27, 3
      %p205 = por %p203, %p204
      %p207 = scmp.ne.s32.totalorder %s192, %s206
      %p208 = scmp.eq.s32.totalorder %s27, 0
      %p209 = por %p207, %p208
      %s211 = sadd.s32 %s210, 1
      %p214 = scmp.eq.s32.totalorder %s21, 3
      %p215 = scmp.ne.s32.totalorder %s210, %s212
      %p216 = scmp.eq.s32.totalorder %s21, 0
      %p217 = por %p215, %p216
      %p218 = scmp.ne.s32.totalorder %s210, %s212
      %p219 = scmp.eq.s32.totalorder %s26, 3
      %p220 = por %p218, %p219
      %p221 = scmp.ne.s32.totalorder %s212, %s213
      %p222 = scmp.eq.s32.totalorder %s26, 0
      %p223 = por %p221, %p222
      %p224 = scmp.ne.s32.totalorder %s212, %s213
      %p225 = scmp.eq.s32.totalorder %s27, 3
      %p226 = por %p224, %p225
      %p228 = scmp.ne.s32.totalorder %s213, %s227
      %p229 = scmp.eq.s32.totalorder %s27, 0
      %p230 = por %p228, %p229
      %s232 = sadd.s32 %s231, 1
      %p235 = scmp.eq.s32.totalorder %s21, 3
      %p236 = scmp.ne.s32.totalorder %s231, %s233
      %p237 = scmp.eq.s32.totalorder %s21, 0
      %p238 = por %p236, %p237
      %p239 = scmp.ne.s32.totalorder %s231, %s233
      %p240 = scmp.eq.s32.totalorder %s26, 3
      %p241 = por %p239, %p240
      %p242 = scmp.ne.s32.totalorder %s233, %s234
      %p243 = scmp.eq.s32.totalorder %s26, 0
      %p244 = por %p242, %p243
      %p245 = scmp.ne.s32.totalorder %s233, %s234
      %p246 = scmp.eq.s32.totalorder %s27, 3
      %p247 = por %p245, %p246
      %p249 = scmp.ne.s32.totalorder %s234, %s248
      %p250 = scmp.eq.s32.totalorder %s27, 0
      %p251 = por %p249, %p250
      %s253 = sadd.s32 %s252, 1
      %p256 = scmp.eq.s32.totalorder %s21, 3
      %p257 = scmp.ne.s32.totalorder %s252, %s254
      %p258 = scmp.eq.s32.totalorder %s21, 0
      %p259 = por %p257, %p258
      %p260 = scmp.ne.s32.totalorder %s252, %s254
      %p261 = scmp.eq.s32.totalorder %s26, 3
      %p262 = por %p260, %p261
      %p263 = scmp.ne.s32.totalorder %s254, %s255
      %p264 = scmp.eq.s32.totalorder %s26, 0
      %p265 = por %p263, %p264
      %p266 = scmp.ne.s32.totalorder %s254, %s255
      %p267 = scmp.eq.s32.totalorder %s27, 3
      %p268 = por %p266, %p267
      %p270 = scmp.ne.s32.totalorder %s255, %s269
      %p271 = scmp.eq.s32.totalorder %s27, 0
      %p272 = por %p270, %p271
      %s274 = sadd.s32 %s273, 1
      %p277 = scmp.eq.s32.totalorder %s21, 3
      %p278 = scmp.ne.s32.totalorder %s273, %s275
      %p279 = scmp.eq.s32.totalorder %s21, 0
      %p280 = por %p278, %p279
      %p281 = scmp.ne.s32.totalorder %s273, %s275
      %p282 = scmp.eq.s32.totalorder %s26, 3
      %p283 = por %p281, %p282
      %p284 = scmp.ne.s32.totalorder %s275, %s276
      %p285 = scmp.eq.s32.totalorder %s26, 0
      %p286 = por %p284, %p285
      %p287 = scmp.ne.s32.totalorder %s275, %s276
      %p288 = scmp.eq.s32.totalorder %s27, 3
      %p289 = por %p287, %p288
      %p291 = scmp.ne.s32.totalorder %s276, %s290
      %p292 = scmp.eq.s32.totalorder %s27, 0
      %p293 = por %p291, %p292
      %s295 = sadd.s32 %s294, 1
      %p298 = scmp.eq.s32.totalorder %s21, 3
      %p299 = scmp.ne.s32.totalorder %s294, %s296
      %p300 = scmp.eq.s32.totalorder %s21, 0
      %p301 = por %p299, %p300
      %p302 = scmp.ne.s32.totalorder %s294, %s296
      %p303 = scmp.eq.s32.totalorder %s26, 3
      %p304 = por %p302, %p303
      %p305 = scmp.ne.s32.totalorder %s296, %s297
      %p306 = scmp.eq.s32.totalorder %s26, 0
      %p307 = por %p305, %p306
      %p308 = scmp.ne.s32.totalorder %s296, %s297
      %p309 = scmp.eq.s32.totalorder %s27, 3
      %p310 = por %p308, %p309
      %p312 = scmp.ne.s32.totalorder %s297, %s311
      %p313 = scmp.eq.s32.totalorder %s27, 0
      %p314 = por %p312, %p313
      %s316 = sadd.s32 %s315, 1
      %p319 = scmp.eq.s32.totalorder %s21, 3
      %p320 = scmp.ne.s32.totalorder %s315, %s317
      %p321 = scmp.eq.s32.totalorder %s21, 0
      %p322 = por %p320, %p321
      %p323 = scmp.ne.s32.totalorder %s315, %s317
      %p324 = scmp.eq.s32.totalorder %s26, 3
      %p325 = por %p323, %p324
      %p326 = scmp.ne.s32.totalorder %s317, %s318
      %p327 = scmp.eq.s32.totalorder %s26, 0
      %p328 = por %p326, %p327
      %p329 = scmp.ne.s32.totalorder %s317, %s318
      %p330 = scmp.eq.s32.totalorder %s27, 3
      %p331 = por %p329, %p330
      %p333 = scmp.ne.s32.totalorder %s318, %s332
      %p334 = scmp.eq.s32.totalorder %s27, 0
      %p335 = por %p333, %p334
      %s336 = smul.u32 %s28, 2
      %s337 = sadd.s32 %s336, %s29
      %s338 = smul.u32 %s40, 2
      %s339 = sadd.s32 %s338, %s36
      %s340 = ssub.s32 %s337, %s339
      %p341 = scmp.eq.s32.totalorder %s340, 0
      %s343 = sadd.s32 %s342, 1
      %s344 = scalar_select %p341, %s342, %s343
      %p347 = pneg %p341
      %p348 = scmp.eq.s32.totalorder %s21, 3
      %p349 = por %p347, %p348
      %p350 = scmp.ne.s32.totalorder %s342, %s345
      %p351 = scmp.eq.s32.totalorder %s21, 0
      %p352 = por %p350, %p351
      %p353 = scmp.ne.s32.totalorder %s342, %s345
      %p354 = scmp.eq.s32.totalorder %s26, 3
      %p355 = por %p353, %p354
      %p356 = scmp.ne.s32.totalorder %s345, %s346
      %p357 = scmp.eq.s32.totalorder %s26, 0
      %p358 = por %p356, %p357
      %p359 = scmp.ne.s32.totalorder %s345, %s346
      %p360 = scmp.eq.s32.totalorder %s27, 3
      %p361 = por %p359, %p360
      %p363 = scmp.ne.s32.totalorder %s346, %s362
      %p364 = scmp.eq.s32.totalorder %s27, 0
      %p365 = por %p363, %p364
      %p366 = scmp.le.s32.totalorder 1, %s21
      %p367 = scmp.lt.s32.totalorder %s21, 5
      %p368 = pnand %p366, %p367
      %p369 = pneg %p368
      // Predicated region
      $region9: #{residual_block_forward.1} parent=5 // pred_check
        _
      $region10: #{residual_block_forward.1} parent=5 // pred_check_branch
        %371 = sbr.rel (%p368) target = $region12
      $region11: #{residual_block_forward.1} parent=5 // pred_region
        %s372 = ssub.s32 %s21, 1
        // Predicated region
        $region13: #{residual_block_forward.1} parent=11 // pred_check
          %p373 = pneg %p160
        $region14: #{residual_block_forward.1} parent=11 // pred_check_branch
          %375 = sbr.rel (%p373) target = $region16
        $region15: #{residual_block_forward.1} parent=11 // pred_region
          _
        $region16: #{residual_block_forward.1} parent=11 // pred_fallthru
          _
        // Predicated region
        $region17: #{residual_block_forward.1} parent=11 // pred_check
          %p376 = pneg %p181
        $region18: #{residual_block_forward.1} parent=11 // pred_check_branch
          %378 = sbr.rel (%p376) target = $region20
        $region19: #{residual_block_forward.1} parent=11 // pred_region
          _
        $region20: #{residual_block_forward.1} parent=11 // pred_fallthru
          _
        // Predicated region
        $region21: #{residual_block_forward.1} parent=11 // pred_check
          %p379 = pneg %p202
        $region22: #{residual_block_forward.1} parent=11 // pred_check_branch
          %381 = sbr.rel (%p379) target = $region24
        $region23: #{residual_block_forward.1} parent=11 // pred_region
          _
        $region24: #{residual_block_forward.1} parent=11 // pred_fallthru
          _
        // Predicated region
        $region25: #{residual_block_forward.1} parent=11 // pred_check
          %p382 = pneg %p223
        $region26: #{residual_block_forward.1} parent=11 // pred_check_branch
          %384 = sbr.rel (%p382) target = $region28
        $region27: #{residual_block_forward.1} parent=11 // pred_region
          _
        $region28: #{residual_block_forward.1} parent=11 // pred_fallthru
          _
        // Predicated region
        $region29: #{residual_block_forward.1} parent=11 // pred_check
          %p385 = pneg %p244
        $region30: #{residual_block_forward.1} parent=11 // pred_check_branch
          %387 = sbr.rel (%p385) target = $region32
        $region31: #{residual_block_forward.1} parent=11 // pred_region
          _
        $region32: #{residual_block_forward.1} parent=11 // pred_fallthru
          _
        // Predicated region
        $region33: #{residual_block_forward.1} parent=11 // pred_check
          %p388 = pneg %p265
        $region34: #{residual_block_forward.1} parent=11 // pred_check_branch
          %390 = sbr.rel (%p388) target = $region36
        $region35: #{residual_block_forward.1} parent=11 // pred_region
          _
        $region36: #{residual_block_forward.1} parent=11 // pred_fallthru
          _
        // Predicated region
        $region37: #{residual_block_forward.1} parent=11 // pred_check
          %p391 = pneg %p286
        $region38: #{residual_block_forward.1} parent=11 // pred_check_branch
          %393 = sbr.rel (%p391) target = $region40
        $region39: #{residual_block_forward.1} parent=11 // pred_region
          _
        $region40: #{residual_block_forward.1} parent=11 // pred_fallthru
          _
        // Predicated region
        $region41: #{residual_block_forward.1} parent=11 // pred_check
          %p394 = pneg %p307
        $region42: #{residual_block_forward.1} parent=11 // pred_check_branch
          %396 = sbr.rel (%p394) target = $region44
        $region43: #{residual_block_forward.1} parent=11 // pred_region
          _
        $region44: #{residual_block_forward.1} parent=11 // pred_fallthru
          _
        // Predicated region
        $region45: #{residual_block_forward.1} parent=11 // pred_check
          %p397 = pneg %p328
        $region46: #{residual_block_forward.1} parent=11 // pred_check_branch
          %399 = sbr.rel (%p397) target = $region48
        $region47: #{residual_block_forward.1} parent=11 // pred_region
          _
        $region48: #{residual_block_forward.1} parent=11 // pred_fallthru
          _
      $region12: #{residual_block_forward.1} parent=5 // pred_fallthru
        _
      %p400 = scmp.lt.s32.totalorder %s21, 4
      // Predicated region
      $region49: #{residual_block_forward.1} parent=5 // pred_check
        %p401 = pneg %p400
      $region50: #{residual_block_forward.1} parent=5 // pred_check_branch
        %403 = sbr.rel (%p401) target = $region52
      $region51: #{residual_block_forward.1} parent=5 // pred_region
        // Predicated region
        $region53: #{residual_block_forward.1} parent=51 // pred_check
          %p404 = pneg %p57
        $region54: #{residual_block_forward.1} parent=51 // pred_check_branch
          %406 = sbr.rel (%p404) target = $region56
        $region55: #{residual_block_forward.1} parent=51 // pred_region
          %s407 = smul.u32 %s28, 2
          %s408 = sadd.s32 %s407, %s29
          %s409 = smul.u32 16, %s408
          %p410 = scmp.lt.s32.totalorder %s409, 63
          %s411 = scalar_select %p410, %s409, 63
          %s412 = smul.addr %s411, 4
          %s413 = scalar_lea.vmem %s0, %s412
          %s414 = smul.u32 %s28, 2
          %s415 = sadd.s32 %s414, %s29
          %s416 = smul.u32 16, %s415
        $region56: #{residual_block_forward.1} parent=51 // pred_fallthru
          _
        // Predicated region
        $region57: #{residual_block_forward.1} parent=51 // pred_check
          %p417 = pneg %p95
        $region58: #{residual_block_forward.1} parent=51 // pred_check_branch
          %419 = sbr.rel (%p417) target = $region60
        $region59: #{residual_block_forward.1} parent=51 // pred_region
          %s420 = smul.u32 %s28, 16
          %s421 = smul.u32 %s29, 8
          %s422 = ssub.s32 %s421, 1
          %p423 = scmp.gt.s32.totalorder %s422, 0
          %s424 = scalar_select %p423, %s422, 0
          %s425 = sadd.s32 %s420, %s424
          %s426 = smul.u32 2, %s425
          %p427 = scmp.lt.s32.totalorder %s426, 63
          %s428 = scalar_select %p427, %s426, 63
          %s429 = smul.addr %s428, 4
          %s430 = scalar_lea.vmem %s1, %s429
          %s431 = smul.u32 %s28, 16
          %s432 = smul.u32 %s29, 8
          %s433 = ssub.s32 %s432, 1
          %p434 = scmp.gt.s32.totalorder %s433, 0
          %s435 = scalar_select %p434, %s433, 0
          %s436 = sadd.s32 %s431, %s435
          %s437 = smul.u32 2, %s436
        $region60: #{residual_block_forward.1} parent=51 // pred_fallthru
          _
        // Predicated region
        $region61: #{residual_block_forward.1} parent=51 // pred_check
          %p438 = pneg %p133
        $region62: #{residual_block_forward.1} parent=51 // pred_check_branch
          %440 = sbr.rel (%p438) target = $region64
        $region63: #{residual_block_forward.1} parent=51 // pred_region
          %s441 = smul.u32 %s28, 16
          %s442 = sadd.s32 %s29, 1
          %s443 = smul.u32 %s442, 8
          %p444 = scmp.lt.s32.totalorder %s443, 15
          %s445 = scalar_select %p444, %s443, 15
          %s446 = sadd.s32 %s441, %s445
          %s447 = smul.u32 2, %s446
          %p448 = scmp.lt.s32.totalorder %s447, 63
          %s449 = scalar_select %p448, %s447, 63
          %s450 = smul.addr %s449, 4
          %s451 = scalar_lea.vmem %s2, %s450
          %s452 = smul.u32 %s28, 16
          %s453 = sadd.s32 %s29, 1
          %s454 = smul.u32 %s453, 8
          %p455 = scmp.lt.s32.totalorder %s454, 15
          %s456 = scalar_select %p455, %s454, 15
          %s457 = sadd.s32 %s452, %s456
          %s458 = smul.u32 2, %s457
        $region64: #{residual_block_forward.1} parent=51 // pred_fallthru
          _
      $region52: #{residual_block_forward.1} parent=5 // pred_fallthru
        _
      %p459 = scmp.le.s32.totalorder 1, %s21
      %p460 = scmp.lt.s32.totalorder %s21, 5
      %p461 = pnand %p459, %p460
      %p462 = pneg %p461
      // Predicated region
      $region65: #{residual_block_forward.1} parent=5 // pred_check
        _
      $region66: #{residual_block_forward.1} parent=5 // pred_check_branch
        %464 = sbr.rel (%p461) target = $region68
      $region67: #{residual_block_forward.1} parent=5 // pred_region
        %s465 = ssub.s32 %s21, 1
        %s466 = smul.u32 %s30, 2
        %s467 = sadd.s32 %s466, %s31
        %s468 = smul.u32 16, %s467
        %p469 = scmp.lt.s32.totalorder %s468, 63
        %s470 = scalar_select %p469, %s468, 63
        %s471 = smul.addr %s470, 4
        %s472 = scalar_lea.vmem %s0, %s471
        %p473 = pneg %p63
        %p474 = pneg %p60
        %s475 = smul.u32 %s30, 16
        %s476 = smul.u32 %s31, 8
        %s477 = ssub.s32 %s476, 1
        %p478 = scmp.gt.s32.totalorder %s477, 0
        %s479 = scalar_select %p478, %s477, 0
        %s480 = sadd.s32 %s475, %s479
        %s481 = smul.u32 2, %s480
        %p482 = scmp.lt.s32.totalorder %s481, 63
        %s483 = scalar_select %p482, %s481, 63
        %s484 = smul.addr %s483, 4
        %s485 = scalar_lea.vmem %s1, %s484
        %p486 = pneg %p101
        %p487 = pneg %p98
        %s488 = smul.u32 %s30, 16
        %s489 = sadd.s32 %s31, 1
        %s490 = smul.u32 %s489, 8
        %p491 = scmp.lt.s32.totalorder %s490, 15
        %s492 = scalar_select %p491, %s490, 15
        %s493 = sadd.s32 %s488, %s492
        %s494 = smul.u32 2, %s493
        %p495 = scmp.lt.s32.totalorder %s494, 63
        %s496 = scalar_select %p495, %s494, 63
        %s497 = smul.addr %s496, 4
        %s498 = scalar_lea.vmem %s2, %s497
        %p499 = pneg %p139
        %p500 = pneg %p136
        %p501 = pneg %p160
        %p502 = pneg %p157
        %p503 = pneg %p181
        %p504 = pneg %p178
        %p505 = pneg %p202
        %p506 = pneg %p199
        %p507 = pneg %p223
        %p508 = pneg %p220
        %p509 = pneg %p244
        %p510 = pneg %p241
        %p511 = pneg %p265
        %p512 = pneg %p262
        %p513 = pneg %p286
        %p514 = pneg %p283
        %p515 = pneg %p307
        %p516 = pneg %p304
        %p517 = pneg %p328
        %p518 = pneg %p325
        %p519 = pneg %p358
        %p520 = pneg %p355
        %s521 = sand.u32 %s345, 1
        %s522 = scalar_lea.sflag [#allocation5], %s521
        %s523 = sand.u32 %s345, 1
        %s524 = smul.addr %s523, 128
        %s525 = scalar_lea.vmem [#allocation4], %s524
        %s526 = smul.u32 %s30, 2
        %s527 = sadd.s32 %s526, %s31
        %s528 = smul.u32 16, %s527
        %p529 = scmp.lt.s32.totalorder %s528, 63
        %s530 = scalar_select %p529, %s528, 63
        %s531 = smul.addr %s530, 4
        %s532 = scalar_lea.vmem %s0, %s531
        %s533 = smul.u32 %s30, 2
        %s534 = sadd.s32 %s533, %s31
        %s535 = smul.u32 16, %s534
        %s536 = smul.u32 %s30, 16
        %s537 = smul.u32 %s31, 8
        %s538 = ssub.s32 %s537, 1
        %p539 = scmp.gt.s32.totalorder %s538, 0
        %s540 = scalar_select %p539, %s538, 0
        %s541 = sadd.s32 %s536, %s540
        %s542 = smul.u32 2, %s541
        %p543 = scmp.lt.s32.totalorder %s542, 63
        %s544 = scalar_select %p543, %s542, 63
        %s545 = smul.addr %s544, 4
        %s546 = scalar_lea.vmem %s1, %s545
        %s547 = smul.u32 %s30, 16
        %s548 = smul.u32 %s31, 8
        %s549 = ssub.s32 %s548, 1
        %p550 = scmp.gt.s32.totalorder %s549, 0
        %s551 = scalar_select %p550, %s549, 0
        %s552 = sadd.s32 %s547, %s551
        %s553 = smul.u32 2, %s552
        %s554 = smul.u32 %s30, 16
        %s555 = sadd.s32 %s31, 1
        %s556 = smul.u32 %s555, 8
        %p557 = scmp.lt.s32.totalorder %s556, 15
        %s558 = scalar_select %p557, %s556, 15
        %s559 = sadd.s32 %s554, %s558
        %s560 = smul.u32 2, %s559
        %p561 = scmp.lt.s32.totalorder %s560, 63
        %s562 = scalar_select %p561, %s560, 63
        %s563 = smul.addr %s562, 4
        %s564 = scalar_lea.vmem %s2, %s563
        %s565 = smul.u32 %s30, 16
        %s566 = sadd.s32 %s31, 1
        %s567 = smul.u32 %s566, 8
        %p568 = scmp.lt.s32.totalorder %s567, 15
        %s569 = scalar_select %p568, %s567, 15
        %s570 = sadd.s32 %s565, %s569
        %s571 = smul.u32 2, %s570
        %s572 = smul.u32 %s30, 2
        %s573 = sadd.s32 %s572, %s31
        %s574 = smul.u32 16, %s573
        %p575 = scmp.gt.s32.totalorder %s31, 0
        %s576 = scalar_select %p575, 1.0, 0.0
        %p577 = scmp.lt.s32.totalorder %s31, 1
        %s578 = scalar_select %p577, 1.0, 0.0
        %v579 = vld [vmem:[%s3] sm:$0xf]
        %v580 = vld [vmem:[%s3 + $0x4] sm:$0xf]
        %v581 = vld [vmem:[%s3 + $0x8] sm:$0xf]
        %v582 = vld [vmem:[%s3 + $0xc] sm:$0xf]
        %v583 = vld [vmem:[%s3 + $0x10] sm:$0xf]
        %v584 = vld [vmem:[%s3 + $0x14] sm:$0xf]
        %v585 = vld [vmem:[%s3 + $0x18] sm:$0xf]
        %v586 = vld [vmem:[%s3 + $0x1c] sm:$0xf]
        %v587 = vld [vmem:[%s3 + $0x20] sm:$0xf]
        %v588 = vld [vmem:[%s3 + $0x24] sm:$0xf]
        %v589 = vld [vmem:[%s3 + $0x28] sm:$0xf]
        %v590 = vld [vmem:[%s3 + $0x2c] sm:$0xf]
        %v591 = vld [vmem:[%s3 + $0x30] sm:$0xf]
        %v592 = vld [vmem:[%s3 + $0x34] sm:$0xf]
        %v593 = vld [vmem:[%s3 + $0x38] sm:$0xf]
        %v594 = vld [vmem:[%s3 + $0x3c] sm:$0xf]
        %v595 = vld [vmem:[%s6] sm:$0x1]
        %v596 = vld [vmem:[%s7] sm:$0x1]
        %v597 = vld [vmem:[%s546] sm:$0xf]
        %v598 = vld [vmem:[%s546 + $0x4] sm:$0xf]
        %v601 = vunpack.c.l.b16 %v597
        %v602 = vunpack.c.l.b16 %v598
        %v603 = vpack.c.b16 %v602, %v601
        %v621 = vunpack.c.l.b16 %v579
        %v622 = vunpack.c.l.b16 %v580
        %v623 = vunpack.c.l.b16 %v581
        %v624 = vunpack.c.l.b16 %v582
        %v625 = vunpack.c.l.b16 %v583
        %v626 = vunpack.c.l.b16 %v584
        %v627 = vunpack.c.l.b16 %v585
        %v628 = vunpack.c.l.b16 %v586
        %v629 = vunpack.c.l.b16 %v587
        %v630 = vunpack.c.l.b16 %v588
        %v631 = vunpack.c.l.b16 %v589
        %v632 = vunpack.c.l.b16 %v590
        %v633 = vunpack.c.l.b16 %v591
        %v634 = vunpack.c.l.b16 %v592
        %v635 = vunpack.c.l.b16 %v593
        %v636 = vunpack.c.l.b16 %v594
        %v637 = vpack.c.b16 %v622, %v621
        %v638 = vpack.c.b16 %v624, %v623
        %v639 = vpack.c.b16 %v626, %v625
        %v640 = vpack.c.b16 %v628, %v627
        %v641 = vpack.c.b16 %v630, %v629
        %v642 = vpack.c.b16 %v632, %v631
        %v643 = vpack.c.b16 %v634, %v633
        %v644 = vpack.c.b16 %v636, %v635
        %653 = vmatpush.bf16.msra.mxu0 %v644
        %654 = vmatpush.bf16.msra.mxu0 %v643
        %655 = vmatpush.bf16.msra.mxu0 %v642
        %656 = vmatpush.bf16.msra.mxu0 %v641
        %657 = vmatpush.bf16.msra.mxu0 %v640
        %658 = vmatpush.bf16.msra.mxu0 %v639
        %659 = vmatpush.bf16.msra.mxu0 %v638
        %660 = vmatpush.bf16.msra.mxu0 %v637
        %661 = vmatmul.bf16.gmra.mxu0 %v603
        %v662 = vpop.f32.mrf.mxu0
        %v663 = vadd.f32 0.0, %v662
        %v664 = vpop.f32.mrf.mxu0
        %v665 = vadd.f32 0.0, %v664
        %666 = vdwg.mxu0
        %v668 = vperm.slane %v595, 0
        %v670 = vmul.f32 %v663, %v668
        %v671 = vmul.f32 %v665, %v668
        %v673 = vperm.slane %v596, 0
        %v675 = vadd.f32 %v670, %v673
        %v676 = vadd.f32 %v671, %v673
        %v677 = vmax.f32 %v675, 0.0
        %v678 = vmax.f32 %v676, 0.0
        %v679 = vstv %s576
        %v680 = vmul.f32 %v677, %v679
        %v681 = vmul.f32 %v678, %v679
        %682 = vst [vmem:[#allocation2] sm:$0xff] %v680
        %683 = vst [vmem:[#allocation2 + $0x8] sm:$0xff] %v681
        %v684 = vld [vmem:[%s532] sm:$0xf]
        %v685 = vld [vmem:[%s532 + $0x4] sm:$0xf]
        %v686 = vld [vmem:[%s532 + $0x8] sm:$0xf]
        %v687 = vld [vmem:[%s532 + $0xc] sm:$0xf]
        %v688 = vld [vmem:[%s532 + $0x10] sm:$0xf]
        %v689 = vld [vmem:[%s532 + $0x14] sm:$0xf]
        %v690 = vld [vmem:[%s532 + $0x18] sm:$0xf]
        %v691 = vld [vmem:[%s532 + $0x1c] sm:$0xf]
        %v692 = vld [vmem:[%s532 + $0x20] sm:$0xf]
        %v693 = vld [vmem:[%s532 + $0x24] sm:$0xf]
        %v694 = vld [vmem:[%s532 + $0x28] sm:$0xf]
        %v695 = vld [vmem:[%s532 + $0x2c] sm:$0xf]
        %v696 = vld [vmem:[%s532 + $0x30] sm:$0xf]
        %v697 = vld [vmem:[%s532 + $0x34] sm:$0xf]
        %v698 = vld [vmem:[%s532 + $0x38] sm:$0xf]
        %v699 = vld [vmem:[%s532 + $0x3c] sm:$0xf]
        %v716 = vunpack.c.l.b16 %v684
        %v717 = vunpack.c.l.b16 %v685
        %v718 = vunpack.c.l.b16 %v686
        %v719 = vunpack.c.l.b16 %v687
        %v720 = vunpack.c.l.b16 %v688
        %v721 = vunpack.c.l.b16 %v689
        %v722 = vunpack.c.l.b16 %v690
        %v723 = vunpack.c.l.b16 %v691
        %v724 = vunpack.c.l.b16 %v692
        %v725 = vunpack.c.l.b16 %v693
        %v726 = vunpack.c.l.b16 %v694
        %v727 = vunpack.c.l.b16 %v695
        %v728 = vunpack.c.l.b16 %v696
        %v729 = vunpack.c.l.b16 %v697
        %v730 = vunpack.c.l.b16 %v698
        %v731 = vunpack.c.l.b16 %v699
        %v732 = vpack.c.b16 %v717, %v716
        %v733 = vpack.c.b16 %v719, %v718
        %v734 = vpack.c.b16 %v721, %v720
        %v735 = vpack.c.b16 %v723, %v722
        %v736 = vpack.c.b16 %v725, %v724
        %v737 = vpack.c.b16 %v727, %v726
        %v738 = vpack.c.b16 %v729, %v728
        %v739 = vpack.c.b16 %v731, %v730
        %748 = vmatpush.bf16.msra.mxu0 %v644
        %749 = vmatpush.bf16.msra.mxu0 %v643
        %750 = vmatpush.bf16.msra.mxu0 %v642
        %751 = vmatpush.bf16.msra.mxu0 %v641
        %752 = vmatpush.bf16.msra.mxu0 %v640
        %753 = vmatpush.bf16.msra.mxu0 %v639
        %754 = vmatpush.bf16.msra.mxu0 %v638
        %755 = vmatpush.bf16.msra.mxu0 %v637
        %756 = vmatmul.bf16.gmra.mxu0 %v732
        %v757 = vpop.f32.mrf.mxu0
        %v758 = vadd.f32 0.0, %v757
        %v759 = vpop.f32.mrf.mxu0
        %v760 = vadd.f32 0.0, %v759
        %761 = vmatmul.bf16.gmra.mxu0 %v733
        %v762 = vpop.f32.mrf.mxu0
        %v763 = vadd.f32 0.0, %v762
        %v764 = vpop.f32.mrf.mxu0
        %v765 = vadd.f32 0.0, %v764
        %766 = vmatmul.bf16.gmra.mxu0 %v734
        %v767 = vpop.f32.mrf.mxu0
        %v768 = vadd.f32 0.0, %v767
        %v769 = vpop.f32.mrf.mxu0
        %v770 = vadd.f32 0.0, %v769
        %771 = vmatmul.bf16.gmra.mxu0 %v735
        %v772 = vpop.f32.mrf.mxu0
        %v773 = vadd.f32 0.0, %v772
        %v774 = vpop.f32.mrf.mxu0
        %v775 = vadd.f32 0.0, %v774
        %776 = vmatmul.bf16.gmra.mxu0 %v736
        %v777 = vpop.f32.mrf.mxu0
        %v778 = vadd.f32 0.0, %v777
        %v779 = vpop.f32.mrf.mxu0
        %v780 = vadd.f32 0.0, %v779
        %781 = vmatmul.bf16.gmra.mxu0 %v737
        %v782 = vpop.f32.mrf.mxu0
        %v783 = vadd.f32 0.0, %v782
        %v784 = vpop.f32.mrf.mxu0
        %v785 = vadd.f32 0.0, %v784
        %786 = vmatmul.bf16.gmra.mxu0 %v738
        %v787 = vpop.f32.mrf.mxu0
        %v788 = vadd.f32 0.0, %v787
        %v789 = vpop.f32.mrf.mxu0
        %v790 = vadd.f32 0.0, %v789
        %791 = vmatmul.bf16.gmra.mxu0 %v739
        %v792 = vpop.f32.mrf.mxu0
        %v793 = vadd.f32 0.0, %v792
        %v794 = vpop.f32.mrf.mxu0
        %v795 = vadd.f32 0.0, %v794
        %796 = vdwg.mxu0
        %v797 = vmul.f32 %v758, %v668
        %v798 = vmul.f32 %v760, %v668
        %v799 = vmul.f32 %v763, %v668
        %v800 = vmul.f32 %v765, %v668
        %v801 = vmul.f32 %v768, %v668
        %v802 = vmul.f32 %v770, %v668
        %v803 = vmul.f32 %v773, %v668
        %v804 = vmul.f32 %v775, %v668
        %v805 = vmul.f32 %v778, %v668
        %v806 = vmul.f32 %v780, %v668
        %v807 = vmul.f32 %v783, %v668
        %v808 = vmul.f32 %v785, %v668
        %v809 = vmul.f32 %v788, %v668
        %v810 = vmul.f32 %v790, %v668
        %v811 = vmul.f32 %v793, %v668
        %v812 = vmul.f32 %v795, %v668
        %v813 = vadd.f32 %v797, %v673
        %v814 = vadd.f32 %v798, %v673
        %v815 = vadd.f32 %v799, %v673
        %v816 = vadd.f32 %v800, %v673
        %v817 = vadd.f32 %v801, %v673
        %v818 = vadd.f32 %v802, %v673
        %v819 = vadd.f32 %v803, %v673
        %v820 = vadd.f32 %v804, %v673
        %v821 = vadd.f32 %v805, %v673
        %v822 = vadd.f32 %v806, %v673
        %v823 = vadd.f32 %v807, %v673
        %v824 = vadd.f32 %v808, %v673
        %v825 = vadd.f32 %v809, %v673
        %v826 = vadd.f32 %v810, %v673
        %v827 = vadd.f32 %v811, %v673
        %v828 = vadd.f32 %v812, %v673
        %v829 = vmax.f32 %v813, 0.0
        %v830 = vmax.f32 %v814, 0.0
        %v831 = vmax.f32 %v815, 0.0
        %v832 = vmax.f32 %v816, 0.0
        %v833 = vmax.f32 %v817, 0.0
        %v834 = vmax.f32 %v818, 0.0
        %v835 = vmax.f32 %v819, 0.0
        %v836 = vmax.f32 %v820, 0.0
        %v837 = vmax.f32 %v821, 0.0
        %v838 = vmax.f32 %v822, 0.0
        %v839 = vmax.f32 %v823, 0.0
        %v840 = vmax.f32 %v824, 0.0
        %v841 = vmax.f32 %v825, 0.0
        %v842 = vmax.f32 %v826, 0.0
        %v843 = vmax.f32 %v827, 0.0
        %v844 = vmax.f32 %v828, 0.0
        %845 = vst [vmem:[#allocation2 + $0x10] sm:$0xff] %v829
        %846 = vst [vmem:[#allocation2 + $0x18] sm:$0xff] %v830
        %847 = vst [vmem:[#allocation2 + $0x20] sm:$0xff] %v831
        %848 = vst [vmem:[#allocation2 + $0x28] sm:$0xff] %v832
        %849 = vst [vmem:[#allocation2 + $0x30] sm:$0xff] %v833
        %850 = vst [vmem:[#allocation2 + $0x38] sm:$0xff] %v834
        %851 = vst [vmem:[#allocation2 + $0x40] sm:$0xff] %v835
        %852 = vst [vmem:[#allocation2 + $0x48] sm:$0xff] %v836
        %853 = vst [vmem:[#allocation2 + $0x50] sm:$0xff] %v837
        %854 = vst [vmem:[#allocation2 + $0x58] sm:$0xff] %v838
        %855 = vst [vmem:[#allocation2 + $0x60] sm:$0xff] %v839
        %856 = vst [vmem:[#allocation2 + $0x68] sm:$0xff] %v840
        %857 = vst [vmem:[#allocation2 + $0x70] sm:$0xff] %v841
        %858 = vst [vmem:[#allocation2 + $0x78] sm:$0xff] %v842
        %859 = vst [vmem:[#allocation2 + $0x80] sm:$0xff] %v843
        %860 = vst [vmem:[#allocation2 + $0x88] sm:$0xff] %v844
        %v861 = vld [vmem:[%s564] sm:$0xf]
        %v862 = vld [vmem:[%s564 + $0x4] sm:$0xf]
        %v865 = vunpack.c.l.b16 %v861
        %v866 = vunpack.c.l.b16 %v862
        %v867 = vpack.c.b16 %v866, %v865
        %869 = vmatpush.bf16.msra.mxu0 %v644
        %870 = vmatpush.bf16.msra.mxu0 %v643
        %871 = vmatpush.bf16.msra.mxu0 %v642
        %872 = vmatpush.bf16.msra.mxu0 %v641
        %873 = vmatpush.bf16.msra.mxu0 %v640
        %874 = vmatpush.bf16.msra.mxu0 %v639
        %875 = vmatpush.bf16.msra.mxu0 %v638
        %876 = vmatpush.bf16.msra.mxu0 %v637
        %877 = vmatmul.bf16.gmra.mxu0 %v867
        %v878 = vpop.f32.mrf.mxu0
        %v879 = vadd.f32 0.0, %v878
        %v880 = vpop.f32.mrf.mxu0
        %v881 = vadd.f32 0.0, %v880
        %882 = vdwg.mxu0
        %v883 = vmul.f32 %v879, %v668
        %v884 = vmul.f32 %v881, %v668
        %v885 = vadd.f32 %v883, %v673
        %v886 = vadd.f32 %v884, %v673
        %v887 = vmax.f32 %v885, 0.0
        %v888 = vmax.f32 %v886, 0.0
        %v889 = vstv %s578
        %v890 = vmul.f32 %v887, %v889
        %v891 = vmul.f32 %v888, %v889
        %892 = vst [vmem:[#allocation2 + $0x90] sm:$0xff] %v890
        %893 = vst [vmem:[#allocation2 + $0x98] sm:$0xff] %v891
        %v894 = vld [vmem:[#allocation2] sm:$0xff]
        %v895 = vld [vmem:[#allocation2 + $0x8] sm:$0xff]
        %v896 = vld [vmem:[#allocation2 + $0x10] sm:$0xff]
        %v897 = vld [vmem:[#allocation2 + $0x18] sm:$0xff]
        %v898 = vld [vmem:[#allocation2 + $0x20] sm:$0xff]
        %v899 = vld [vmem:[#allocation2 + $0x28] sm:$0xff]
        %v900 = vld [vmem:[#allocation2 + $0x30] sm:$0xff]
        %v901 = vld [vmem:[#allocation2 + $0x38] sm:$0xff]
        %v902 = vld [vmem:[#allocation2 + $0x40] sm:$0xff]
        %v903 = vld [vmem:[#allocation2 + $0x48] sm:$0xff]
        %v904 = vld [vmem:[#allocation2 + $0x50] sm:$0xff]
        %v905 = vld [vmem:[#allocation2 + $0x58] sm:$0xff]
        %v906 = vld [vmem:[#allocation2 + $0x60] sm:$0xff]
        %v907 = vld [vmem:[#allocation2 + $0x68] sm:$0xff]
        %v908 = vld [vmem:[#allocation2 + $0x70] sm:$0xff]
        %v909 = vld [vmem:[#allocation2 + $0x78] sm:$0xff]
        %v910 = vld [vmem:[#allocation2 + $0x80] sm:$0xff]
        %v911 = vld [vmem:[#allocation2 + $0x88] sm:$0xff]
        %v912 = vld [vmem:[#allocation2 + $0x90] sm:$0xff]
        %v913 = vld [vmem:[#allocation2 + $0x98] sm:$0xff]
        %v914 = vlaneseq
        %v915 = vshrl.u32 %v914, 7
        %v916 = vadd.s32 %v915, 8
        %v917 = vadd.s32 %v915, 16
        %v918 = vadd.s32 %v915, 24
        %v919 = vadd.s32 %v915, 32
        %v920 = vadd.s32 %v915, 40
        %v921 = vadd.s32 %v915, 48
        %v922 = vadd.s32 %v915, 56
        %v923 = vadd.s32 %v915, 64
        %v924 = vadd.s32 %v915, 72
        %v925 = vadd.s32 %v915, 80
        %v926 = vadd.s32 %v915, 88
        %v927 = vadd.s32 %v915, 96
        %v928 = vadd.s32 %v915, 104
        %v929 = vadd.s32 %v915, 112
        %v930 = vadd.s32 %v915, 120
        %v931 = vadd.s32 %v915, 128
        %v932 = vadd.s32 %v915, 136
        %v933 = vadd.s32 %v915, 144
        %v934 = vadd.s32 %v915, 152
        %vm935 = vcmp.lt.s32.totalorder %v915, 0
        %v936 = vsub.s32 0, %v915
        %v937 = vsel %vm935, %v936, %v915
        %v938 = vshrl.u32 %v937, 4
        %v939 = vand.u32 %v937, 15
        %v940 = vsub.s32 0, %v939
        %v941 = vsel %vm935, %v940, %v939
        %vm942 = vcmp.lt.s32.totalorder %v916, 0
        %v943 = vsub.s32 0, %v916
        %v944 = vsel %vm942, %v943, %v916
        %v945 = vshrl.u32 %v944, 4
        %v946 = vand.u32 %v944, 15
        %v947 = vsub.s32 0, %v946
        %v948 = vsel %vm942, %v947, %v946
        %vm949 = vcmp.lt.s32.totalorder %v917, 0
        %v950 = vsub.s32 0, %v917
        %v951 = vsel %vm949, %v950, %v917
        %v952 = vshrl.u32 %v951, 4
        %v953 = vand.u32 %v951, 15
        %v954 = vsub.s32 0, %v953
        %v955 = vsel %vm949, %v954, %v953
        %vm956 = vcmp.lt.s32.totalorder %v918, 0
        %v957 = vsub.s32 0, %v918
        %v958 = vsel %vm956, %v957, %v918
        %v959 = vshrl.u32 %v958, 4
        %v960 = vand.u32 %v958, 15
        %v961 = vsub.s32 0, %v960
        %v962 = vsel %vm956, %v961, %v960
        %vm963 = vcmp.lt.s32.totalorder %v919, 0
        %v964 = vsub.s32 0, %v919
        %v965 = vsel %vm963, %v964, %v919
        %v966 = vshrl.u32 %v965, 4
        %v967 = vand.u32 %v965, 15
        %v968 = vsub.s32 0, %v967
        %v969 = vsel %vm963, %v968, %v967
        %vm970 = vcmp.lt.s32.totalorder %v920, 0
        %v971 = vsub.s32 0, %v920
        %v972 = vsel %vm970, %v971, %v920
        %v973 = vshrl.u32 %v972, 4
        %v974 = vand.u32 %v972, 15
        %v975 = vsub.s32 0, %v974
        %v976 = vsel %vm970, %v975, %v974
        %vm977 = vcmp.lt.s32.totalorder %v921, 0
        %v978 = vsub.s32 0, %v921
        %v979 = vsel %vm977, %v978, %v921
        %v980 = vshrl.u32 %v979, 4
        %v981 = vand.u32 %v979, 15
        %v982 = vsub.s32 0, %v981
        %v983 = vsel %vm977, %v982, %v981
        %vm984 = vcmp.lt.s32.totalorder %v922, 0
        %v985 = vsub.s32 0, %v922
        %v986 = vsel %vm984, %v985, %v922
        %v987 = vshrl.u32 %v986, 4
        %v988 = vand.u32 %v986, 15
        %v989 = vsub.s32 0, %v988
        %v990 = vsel %vm984, %v989, %v988
        %vm991 = vcmp.lt.s32.totalorder %v923, 0
        %v992 = vsub.s32 0, %v923
        %v993 = vsel %vm991, %v992, %v923
        %v994 = vshrl.u32 %v993, 4
        %v995 = vand.u32 %v993, 15
        %v996 = vsub.s32 0, %v995
        %v997 = vsel %vm991, %v996, %v995
        %vm998 = vcmp.lt.s32.totalorder %v924, 0
        %v999 = vsub.s32 0, %v924
        %v1000 = vsel %vm998, %v999, %v924
        %v1001 = vshrl.u32 %v1000, 4
        %v1002 = vand.u32 %v1000, 15
        %v1003 = vsub.s32 0, %v1002
        %v1004 = vsel %vm998, %v1003, %v1002
        %vm1005 = vcmp.lt.s32.totalorder %v925, 0
        %v1006 = vsub.s32 0, %v925
        %v1007 = vsel %vm1005, %v1006, %v925
        %v1008 = vshrl.u32 %v1007, 4
        %v1009 = vand.u32 %v1007, 15
        %v1010 = vsub.s32 0, %v1009
        %v1011 = vsel %vm1005, %v1010, %v1009
        %vm1012 = vcmp.lt.s32.totalorder %v926, 0
        %v1013 = vsub.s32 0, %v926
        %v1014 = vsel %vm1012, %v1013, %v926
        %v1015 = vshrl.u32 %v1014, 4
        %v1016 = vand.u32 %v1014, 15
        %v1017 = vsub.s32 0, %v1016
        %v1018 = vsel %vm1012, %v1017, %v1016
        %vm1019 = vcmp.lt.s32.totalorder %v927, 0
        %v1020 = vsub.s32 0, %v927
        %v1021 = vsel %vm1019, %v1020, %v927
        %v1022 = vshrl.u32 %v1021, 4
        %v1023 = vand.u32 %v1021, 15
        %v1024 = vsub.s32 0, %v1023
        %v1025 = vsel %vm1019, %v1024, %v1023
        %vm1026 = vcmp.lt.s32.totalorder %v928, 0
        %v1027 = vsub.s32 0, %v928
        %v1028 = vsel %vm1026, %v1027, %v928
        %v1029 = vshrl.u32 %v1028, 4
        %v1030 = vand.u32 %v1028, 15
        %v1031 = vsub.s32 0, %v1030
        %v1032 = vsel %vm1026, %v1031, %v1030
        %vm1033 = vcmp.lt.s32.totalorder %v929, 0
        %v1034 = vsub.s32 0, %v929
        %v1035 = vsel %vm1033, %v1034, %v929
        %v1036 = vshrl.u32 %v1035, 4
        %v1037 = vand.u32 %v1035, 15
        %v1038 = vsub.s32 0, %v1037
        %v1039 = vsel %vm1033, %v1038, %v1037
        %vm1040 = vcmp.lt.s32.totalorder %v930, 0
        %v1041 = vsub.s32 0, %v930
        %v1042 = vsel %vm1040, %v1041, %v930
        %v1043 = vshrl.u32 %v1042, 4
        %v1044 = vand.u32 %v1042, 15
        %v1045 = vsub.s32 0, %v1044
        %v1046 = vsel %vm1040, %v1045, %v1044
        %vm1047 = vcmp.lt.s32.totalorder %v931, 0
        %v1048 = vsub.s32 0, %v931
        %v1049 = vsel %vm1047, %v1048, %v931
        %v1050 = vshrl.u32 %v1049, 4
        %v1051 = vand.u32 %v1049, 15
        %v1052 = vsub.s32 0, %v1051
        %v1053 = vsel %vm1047, %v1052, %v1051
        %vm1054 = vcmp.lt.s32.totalorder %v932, 0
        %v1055 = vsub.s32 0, %v932
        %v1056 = vsel %vm1054, %v1055, %v932
        %v1057 = vshrl.u32 %v1056, 4
        %v1058 = vand.u32 %v1056, 15
        %v1059 = vsub.s32 0, %v1058
        %v1060 = vsel %vm1054, %v1059, %v1058
        %vm1061 = vcmp.lt.s32.totalorder %v933, 0
        %v1062 = vsub.s32 0, %v933
        %v1063 = vsel %vm1061, %v1062, %v933
        %v1064 = vshrl.u32 %v1063, 4
        %v1065 = vand.u32 %v1063, 15
        %v1066 = vsub.s32 0, %v1065
        %v1067 = vsel %vm1061, %v1066, %v1065
        %vm1068 = vcmp.lt.s32.totalorder %v934, 0
        %v1069 = vsub.s32 0, %v934
        %v1070 = vsel %vm1068, %v1069, %v934
        %v1071 = vshrl.u32 %v1070, 4
        %v1072 = vand.u32 %v1070, 15
        %v1073 = vsub.s32 0, %v1072
        %v1074 = vsel %vm1068, %v1073, %v1072
        %vm1075 = vcmp.ne.s32.totalorder %v941, 0
        %vm1076 = vcmp.ne.s32.totalorder %v948, 0
        %vm1077 = vcmp.ne.s32.totalorder %v955, 0
        %vm1078 = vcmp.ne.s32.totalorder %v962, 0
        %vm1079 = vcmp.ne.s32.totalorder %v969, 0
        %vm1080 = vcmp.ne.s32.totalorder %v976, 0
        %vm1081 = vcmp.ne.s32.totalorder %v983, 0
        %vm1082 = vcmp.ne.s32.totalorder %v990, 0
        %vm1083 = vcmp.ne.s32.totalorder %v997, 0
        %vm1084 = vcmp.ne.s32.totalorder %v1004, 0
        %vm1085 = vcmp.ne.s32.totalorder %v1011, 0
        %vm1086 = vcmp.ne.s32.totalorder %v1018, 0
        %vm1087 = vcmp.ne.s32.totalorder %v1025, 0
        %vm1088 = vcmp.ne.s32.totalorder %v1032, 0
        %vm1089 = vcmp.ne.s32.totalorder %v1039, 0
        %vm1090 = vcmp.ne.s32.totalorder %v1046, 0
        %vm1091 = vcmp.ne.s32.totalorder %v1053, 0
        %vm1092 = vcmp.ne.s32.totalorder %v1060, 0
        %vm1093 = vcmp.ne.s32.totalorder %v1067, 0
        %vm1094 = vcmp.ne.s32.totalorder %v1074, 0
        %vm1095 = vcmp.lt.s32.totalorder %v941, 0
        %vm1096 = vcmp.lt.s32.totalorder %v948, 0
        %vm1097 = vcmp.lt.s32.totalorder %v955, 0
        %vm1098 = vcmp.lt.s32.totalorder %v962, 0
        %vm1099 = vcmp.lt.s32.totalorder %v969, 0
        %vm1100 = vcmp.lt.s32.totalorder %v976, 0
        %vm1101 = vcmp.lt.s32.totalorder %v983, 0
        %vm1102 = vcmp.lt.s32.totalorder %v990, 0
        %vm1103 = vcmp.lt.s32.totalorder %v997, 0
        %vm1104 = vcmp.lt.s32.totalorder %v1004, 0
        %vm1105 = vcmp.lt.s32.totalorder %v1011, 0
        %vm1106 = vcmp.lt.s32.totalorder %v1018, 0
        %vm1107 = vcmp.lt.s32.totalorder %v1025, 0
        %vm1108 = vcmp.lt.s32.totalorder %v1032, 0
        %vm1109 = vcmp.lt.s32.totalorder %v1039, 0
        %vm1110 = vcmp.lt.s32.totalorder %v1046, 0
        %vm1111 = vcmp.lt.s32.totalorder %v1053, 0
        %vm1112 = vcmp.lt.s32.totalorder %v1060, 0
        %vm1113 = vcmp.lt.s32.totalorder %v1067, 0
        %vm1114 = vcmp.lt.s32.totalorder %v1074, 0
        %vm1115 = vmand %vm1095, %vm1075
        %vm1116 = vmand %vm1096, %vm1076
        %vm1117 = vmand %vm1097, %vm1077
        %vm1118 = vmand %vm1098, %vm1078
        %vm1119 = vmand %vm1099, %vm1079
        %vm1120 = vmand %vm1100, %vm1080
        %vm1121 = vmand %vm1101, %vm1081
        %vm1122 = vmand %vm1102, %vm1082
        %vm1123 = vmand %vm1103, %vm1083
        %vm1124 = vmand %vm1104, %vm1084
        %vm1125 = vmand %vm1105, %vm1085
        %vm1126 = vmand %vm1106, %vm1086
        %vm1127 = vmand %vm1107, %vm1087
        %vm1128 = vmand %vm1108, %vm1088
        %vm1129 = vmand %vm1109, %vm1089
        %vm1130 = vmand %vm1110, %vm1090
        %vm1131 = vmand %vm1111, %vm1091
        %vm1132 = vmand %vm1112, %vm1092
        %vm1133 = vmand %vm1113, %vm1093
        %vm1134 = vmand %vm1114, %vm1094
        %v1135 = vadd.s32 %v941, 16
        %v1136 = vadd.s32 %v948, 16
        %v1137 = vadd.s32 %v955, 16
        %v1138 = vadd.s32 %v962, 16
        %v1139 = vadd.s32 %v969, 16
        %v1140 = vadd.s32 %v976, 16
        %v1141 = vadd.s32 %v983, 16
        %v1142 = vadd.s32 %v990, 16
        %v1143 = vadd.s32 %v997, 16
        %v1144 = vadd.s32 %v1004, 16
        %v1145 = vadd.s32 %v1011, 16
        %v1146 = vadd.s32 %v1018, 16
        %v1147 = vadd.s32 %v1025, 16
        %v1148 = vadd.s32 %v1032, 16
        %v1149 = vadd.s32 %v1039, 16
        %v1150 = vadd.s32 %v1046, 16
        %v1151 = vadd.s32 %v1053, 16
        %v1152 = vadd.s32 %v1060, 16
        %v1153 = vadd.s32 %v1067, 16
        %v1154 = vadd.s32 %v1074, 16
        %v1155 = vsel %vm1115, %v1135, %v941
        %v1156 = vsel %vm1116, %v1136, %v948
        %v1157 = vsel %vm1117, %v1137, %v955
        %v1158 = vsel %vm1118, %v1138, %v962
        %v1159 = vsel %vm1119, %v1139, %v969
        %v1160 = vsel %vm1120, %v1140, %v976
        %v1161 = vsel %vm1121, %v1141, %v983
        %v1162 = vsel %vm1122, %v1142, %v990
        %v1163 = vsel %vm1123, %v1143, %v997
        %v1164 = vsel %vm1124, %v1144, %v1004
        %v1165 = vsel %vm1125, %v1145, %v1011
        %v1166 = vsel %vm1126, %v1146, %v1018
        %v1167 = vsel %vm1127, %v1147, %v1025
        %v1168 = vsel %vm1128, %v1148, %v1032
        %v1169 = vsel %vm1129, %v1149, %v1039
        %v1170 = vsel %vm1130, %v1150, %v1046
        %v1171 = vsel %vm1131, %v1151, %v1053
        %v1172 = vsel %vm1132, %v1152, %v1060
        %v1173 = vsel %vm1133, %v1153, %v1067
        %v1174 = vsel %vm1134, %v1154, %v1074
        %vm1175 = vcmp.eq.s32.totalorder %v1155, 0
        %vm1176 = vcmp.eq.s32.totalorder %v1156, 0
        %vm1177 = vcmp.eq.s32.totalorder %v1157, 0
        %vm1178 = vcmp.eq.s32.totalorder %v1158, 0
        %vm1179 = vcmp.eq.s32.totalorder %v1159, 0
        %vm1180 = vcmp.eq.s32.totalorder %v1160, 0
        %vm1181 = vcmp.eq.s32.totalorder %v1161, 0
        %vm1182 = vcmp.eq.s32.totalorder %v1162, 0
        %vm1183 = vcmp.eq.s32.totalorder %v1163, 0
        %vm1184 = vcmp.eq.s32.totalorder %v1164, 0
        %vm1185 = vcmp.eq.s32.totalorder %v1165, 0
        %vm1186 = vcmp.eq.s32.totalorder %v1166, 0
        %vm1187 = vcmp.eq.s32.totalorder %v1167, 0
        %vm1188 = vcmp.eq.s32.totalorder %v1168, 0
        %vm1189 = vcmp.eq.s32.totalorder %v1169, 0
        %vm1190 = vcmp.eq.s32.totalorder %v1170, 0
        %vm1191 = vcmp.eq.s32.totalorder %v1171, 0
        %vm1192 = vcmp.eq.s32.totalorder %v1172, 0
        %vm1193 = vcmp.eq.s32.totalorder %v1173, 0
        %vm1194 = vcmp.eq.s32.totalorder %v1174, 0
        %v1195 = vrot.slane %v894, 7
        %v1196 = vrot.slane %v895, 7
        %v1197 = vrot.slane %v896, 7
        %v1198 = vrot.slane %v897, 7
        %v1199 = vrot.slane %v898, 7
        %v1200 = vrot.slane %v899, 7
        %v1201 = vrot.slane %v900, 7
        %v1202 = vrot.slane %v901, 7
        %v1203 = vrot.slane %v902, 7
        %v1204 = vrot.slane %v903, 7
        %v1205 = vrot.slane %v904, 7
        %v1206 = vrot.slane %v905, 7
        %v1207 = vrot.slane %v906, 7
        %v1208 = vrot.slane %v907, 7
        %v1209 = vrot.slane %v908, 7
        %v1210 = vrot.slane %v909, 7
        %v1211 = vrot.slane %v910, 7
        %v1212 = vrot.slane %v911, 7
        %v1213 = vrot.slane %v912, 7
        %v1214 = vrot.slane %v913, 7
        %vm1215 = vcmp.lt.s32.totalorder %v915, 1
        %v1216 = vsel %vm1215, %v1213, %v1214
        %v1217 = vsel %vm1215, %v1212, %v1213
        %v1218 = vsel %vm1215, %v1211, %v1212
        %v1219 = vsel %vm1215, %v1210, %v1211
        %v1220 = vsel %vm1215, %v1209, %v1210
        %v1221 = vsel %vm1215, %v1208, %v1209
        %v1222 = vsel %vm1215, %v1207, %v1208
        %v1223 = vsel %vm1215, %v1206, %v1207
        %v1224 = vsel %vm1215, %v1205, %v1206
        %v1225 = vsel %vm1215, %v1204, %v1205
        %v1226 = vsel %vm1215, %v1203, %v1204
        %v1227 = vsel %vm1215, %v1202, %v1203
        %v1228 = vsel %vm1215, %v1201, %v1202
        %v1229 = vsel %vm1215, %v1200, %v1201
        %v1230 = vsel %vm1215, %v1199, %v1200
        %v1231 = vsel %vm1215, %v1198, %v1199
        %v1232 = vsel %vm1215, %v1197, %v1198
        %v1233 = vsel %vm1215, %v1196, %v1197
        %v1234 = vsel %vm1215, %v1195, %v1196
        %v1235 = vsel %vm1215, %v1214, %v1195
        %v1236 = vsel %vm1175, 1, 0
        %v1237 = vsel %vm1176, 1, 0
        %v1238 = vsel %vm1177, 1, 0
        %v1239 = vsel %vm1178, 1, 0
        %v1240 = vsel %vm1179, 1, 0
        %v1241 = vsel %vm1180, 1, 0
        %v1242 = vsel %vm1181, 1, 0
        %v1243 = vsel %vm1182, 1, 0
        %v1244 = vsel %vm1183, 1, 0
        %v1245 = vsel %vm1184, 1, 0
        %v1246 = vsel %vm1185, 1, 0
        %v1247 = vsel %vm1186, 1, 0
        %v1248 = vsel %vm1187, 1, 0
        %v1249 = vsel %vm1188, 1, 0
        %v1250 = vsel %vm1189, 1, 0
        %v1251 = vsel %vm1190, 1, 0
        %v1252 = vsel %vm1191, 1, 0
        %v1253 = vsel %vm1192, 1, 0
        %v1254 = vsel %vm1193, 1, 0
        %v1255 = vsel %vm1194, 1, 0
        %vm1256 = vcmp.eq.s32.totalorder %v1236, 1
        %vm1257 = vcmp.eq.s32.totalorder %v1237, 1
        %vm1258 = vcmp.eq.s32.totalorder %v1238, 1
        %vm1259 = vcmp.eq.s32.totalorder %v1239, 1
        %vm1260 = vcmp.eq.s32.totalorder %v1240, 1
        %vm1261 = vcmp.eq.s32.totalorder %v1241, 1
        %vm1262 = vcmp.eq.s32.totalorder %v1242, 1
        %vm1263 = vcmp.eq.s32.totalorder %v1243, 1
        %vm1264 = vcmp.eq.s32.totalorder %v1244, 1
        %vm1265 = vcmp.eq.s32.totalorder %v1245, 1
        %vm1266 = vcmp.eq.s32.totalorder %v1246, 1
        %vm1267 = vcmp.eq.s32.totalorder %v1247, 1
        %vm1268 = vcmp.eq.s32.totalorder %v1248, 1
        %vm1269 = vcmp.eq.s32.totalorder %v1249, 1
        %vm1270 = vcmp.eq.s32.totalorder %v1250, 1
        %vm1271 = vcmp.eq.s32.totalorder %v1251, 1
        %vm1272 = vcmp.eq.s32.totalorder %v1252, 1
        %vm1273 = vcmp.eq.s32.totalorder %v1253, 1
        %vm1274 = vcmp.eq.s32.totalorder %v1254, 1
        %vm1275 = vcmp.eq.s32.totalorder %v1255, 1
        %v1276 = vsel %vm1256, 0.0, %v1235
        %v1277 = vsel %vm1257, 0.0, %v1234
        %v1278 = vsel %vm1258, 0.0, %v1233
        %v1279 = vsel %vm1259, 0.0, %v1232
        %v1280 = vsel %vm1260, 0.0, %v1231
        %v1281 = vsel %vm1261, 0.0, %v1230
        %v1282 = vsel %vm1262, 0.0, %v1229
        %v1283 = vsel %vm1263, 0.0, %v1228
        %v1284 = vsel %vm1264, 0.0, %v1227
        %v1285 = vsel %vm1265, 0.0, %v1226
        %v1286 = vsel %vm1266, 0.0, %v1225
        %v1287 = vsel %vm1267, 0.0, %v1224
        %v1288 = vsel %vm1268, 0.0, %v1223
        %v1289 = vsel %vm1269, 0.0, %v1222
        %v1290 = vsel %vm1270, 0.0, %v1221
        %v1291 = vsel %vm1271, 0.0, %v1220
        %v1292 = vsel %vm1272, 0.0, %v1219
        %v1293 = vsel %vm1273, 0.0, %v1218
        %v1294 = vsel %vm1274, 0.0, %v1217
        %v1295 = vsel %vm1275, 0.0, %v1216
        %vm1296 = vcmp.eq.s32.totalorder %v1155, 15
        %vm1297 = vcmp.eq.s32.totalorder %v1156, 15
        %vm1298 = vcmp.eq.s32.totalorder %v1157, 15
        %vm1299 = vcmp.eq.s32.totalorder %v1158, 15
        %vm1300 = vcmp.eq.s32.totalorder %v1159, 15
        %vm1301 = vcmp.eq.s32.totalorder %v1160, 15
        %vm1302 = vcmp.eq.s32.totalorder %v1161, 15
        %vm1303 = vcmp.eq.s32.totalorder %v1162, 15
        %vm1304 = vcmp.eq.s32.totalorder %v1163, 15
        %vm1305 = vcmp.eq.s32.totalorder %v1164, 15
        %vm1306 = vcmp.eq.s32.totalorder %v1165, 15
        %vm1307 = vcmp.eq.s32.totalorder %v1166, 15
        %vm1308 = vcmp.eq.s32.totalorder %v1167, 15
        %vm1309 = vcmp.eq.s32.totalorder %v1168, 15
        %vm1310 = vcmp.eq.s32.totalorder %v1169, 15
        %vm1311 = vcmp.eq.s32.totalorder %v1170, 15
        %vm1312 = vcmp.eq.s32.totalorder %v1171, 15
        %vm1313 = vcmp.eq.s32.totalorder %v1172, 15
        %vm1314 = vcmp.eq.s32.totalorder %v1173, 15
        %vm1315 = vcmp.eq.s32.totalorder %v1174, 15
        %v1316 = vrot.slane %v894, 1
        %v1317 = vrot.slane %v895, 1
        %v1318 = vrot.slane %v896, 1
        %v1319 = vrot.slane %v897, 1
        %v1320 = vrot.slane %v898, 1
        %v1321 = vrot.slane %v899, 1
        %v1322 = vrot.slane %v900, 1
        %v1323 = vrot.slane %v901, 1
        %v1324 = vrot.slane %v902, 1
        %v1325 = vrot.slane %v903, 1
        %v1326 = vrot.slane %v904, 1
        %v1327 = vrot.slane %v905, 1
        %v1328 = vrot.slane %v906, 1
        %v1329 = vrot.slane %v907, 1
        %v1330 = vrot.slane %v908, 1
        %v1331 = vrot.slane %v909, 1
        %v1332 = vrot.slane %v910, 1
        %v1333 = vrot.slane %v911, 1
        %v1334 = vrot.slane %v912, 1
        %v1335 = vrot.slane %v913, 1
        %vm1336 = vcmp.lt.s32.totalorder %v915, 7
        %v1337 = vsel %vm1336, %v1334, %v1335
        %v1338 = vsel %vm1336, %v1333, %v1334
        %v1339 = vsel %vm1336, %v1332, %v1333
        %v1340 = vsel %vm1336, %v1331, %v1332
        %v1341 = vsel %vm1336, %v1330, %v1331
        %v1342 = vsel %vm1336, %v1329, %v1330
        %v1343 = vsel %vm1336, %v1328, %v1329
        %v1344 = vsel %vm1336, %v1327, %v1328
        %v1345 = vsel %vm1336, %v1326, %v1327
        %v1346 = vsel %vm1336, %v1325, %v1326
        %v1347 = vsel %vm1336, %v1324, %v1325
        %v1348 = vsel %vm1336, %v1323, %v1324
        %v1349 = vsel %vm1336, %v1322, %v1323
        %v1350 = vsel %vm1336, %v1321, %v1322
        %v1351 = vsel %vm1336, %v1320, %v1321
        %v1352 = vsel %vm1336, %v1319, %v1320
        %v1353 = vsel %vm1336, %v1318, %v1319
        %v1354 = vsel %vm1336, %v1317, %v1318
        %v1355 = vsel %vm1336, %v1316, %v1317
        %v1356 = vsel %vm1336, %v1335, %v1316
        %v1357 = vsel %vm1296, 1, 0
        %v1358 = vsel %vm1297, 1, 0
        %v1359 = vsel %vm1298, 1, 0
        %v1360 = vsel %vm1299, 1, 0
        %v1361 = vsel %vm1300, 1, 0
        %v1362 = vsel %vm1301, 1, 0
        %v1363 = vsel %vm1302, 1, 0
        %v1364 = vsel %vm1303, 1, 0
        %v1365 = vsel %vm1304, 1, 0
        %v1366 = vsel %vm1305, 1, 0
        %v1367 = vsel %vm1306, 1, 0
        %v1368 = vsel %vm1307, 1, 0
        %v1369 = vsel %vm1308, 1, 0
        %v1370 = vsel %vm1309, 1, 0
        %v1371 = vsel %vm1310, 1, 0
        %v1372 = vsel %vm1311, 1, 0
        %v1373 = vsel %vm1312, 1, 0
        %v1374 = vsel %vm1313, 1, 0
        %v1375 = vsel %vm1314, 1, 0
        %v1376 = vsel %vm1315, 1, 0
        %vm1377 = vcmp.eq.s32.totalorder %v1357, 1
        %vm1378 = vcmp.eq.s32.totalorder %v1358, 1
        %vm1379 = vcmp.eq.s32.totalorder %v1359, 1
        %vm1380 = vcmp.eq.s32.totalorder %v1360, 1
        %vm1381 = vcmp.eq.s32.totalorder %v1361, 1
        %vm1382 = vcmp.eq.s32.totalorder %v1362, 1
        %vm1383 = vcmp.eq.s32.totalorder %v1363, 1
        %vm1384 = vcmp.eq.s32.totalorder %v1364, 1
        %vm1385 = vcmp.eq.s32.totalorder %v1365, 1
        %vm1386 = vcmp.eq.s32.totalorder %v1366, 1
        %vm1387 = vcmp.eq.s32.totalorder %v1367, 1
        %vm1388 = vcmp.eq.s32.totalorder %v1368, 1
        %vm1389 = vcmp.eq.s32.totalorder %v1369, 1
        %vm1390 = vcmp.eq.s32.totalorder %v1370, 1
        %vm1391 = vcmp.eq.s32.totalorder %v1371, 1
        %vm1392 = vcmp.eq.s32.totalorder %v1372, 1
        %vm1393 = vcmp.eq.s32.totalorder %v1373, 1
        %vm1394 = vcmp.eq.s32.totalorder %v1374, 1
        %vm1395 = vcmp.eq.s32.totalorder %v1375, 1
        %vm1396 = vcmp.eq.s32.totalorder %v1376, 1
        %v1397 = vsel %vm1377, 0.0, %v1355
        %v1398 = vsel %vm1378, 0.0, %v1354
        %v1399 = vsel %vm1379, 0.0, %v1353
        %v1400 = vsel %vm1380, 0.0, %v1352
        %v1401 = vsel %vm1381, 0.0, %v1351
        %v1402 = vsel %vm1382, 0.0, %v1350
        %v1403 = vsel %vm1383, 0.0, %v1349
        %v1404 = vsel %vm1384, 0.0, %v1348
        %v1405 = vsel %vm1385, 0.0, %v1347
        %v1406 = vsel %vm1386, 0.0, %v1346
        %v1407 = vsel %vm1387, 0.0, %v1345
        %v1408 = vsel %vm1388, 0.0, %v1344
        %v1409 = vsel %vm1389, 0.0, %v1343
        %v1410 = vsel %vm1390, 0.0, %v1342
        %v1411 = vsel %vm1391, 0.0, %v1341
        %v1412 = vsel %vm1392, 0.0, %v1340
        %v1413 = vsel %vm1393, 0.0, %v1339
        %v1414 = vsel %vm1394, 0.0, %v1338
        %v1415 = vsel %vm1395, 0.0, %v1337
        %v1416 = vsel %vm1396, 0.0, %v1356
        %v1417 = vpack.c.bf16 %v1276, %v1276
        %v1418 = vpack.c.bf16 %v1277, %v1277
        %v1419 = vpack.c.bf16 %v1278, %v1278
        %v1420 = vpack.c.bf16 %v1279, %v1279
        %v1421 = vpack.c.bf16 %v1280, %v1280
        %v1422 = vpack.c.bf16 %v1281, %v1281
        %v1423 = vpack.c.bf16 %v1282, %v1282
        %v1424 = vpack.c.bf16 %v1283, %v1283
        %v1425 = vpack.c.bf16 %v1284, %v1284
        %v1426 = vpack.c.bf16 %v1285, %v1285
        %v1427 = vpack.c.bf16 %v1286, %v1286
        %v1428 = vpack.c.bf16 %v1287, %v1287
        %v1429 = vpack.c.bf16 %v1288, %v1288
        %v1430 = vpack.c.bf16 %v1289, %v1289
        %v1431 = vpack.c.bf16 %v1290, %v1290
        %v1432 = vpack.c.bf16 %v1291, %v1291
        %v1433 = vpack.c.bf16 %v1292, %v1292
        %v1434 = vpack.c.bf16 %v1293, %v1293
        %v1435 = vpack.c.bf16 %v1294, %v1294
        %v1436 = vpack.c.bf16 %v1295, %v1295
        %v1437 = vpack.c.bf16 %v894, %v894
        %v1438 = vpack.c.bf16 %v895, %v895
        %v1439 = vpack.c.bf16 %v896, %v896
        %v1440 = vpack.c.bf16 %v897, %v897
        %v1441 = vpack.c.bf16 %v898, %v898
        %v1442 = vpack.c.bf16 %v899, %v899
        %v1443 = vpack.c.bf16 %v900, %v900
        %v1444 = vpack.c.bf16 %v901, %v901
        %v1445 = vpack.c.bf16 %v902, %v902
        %v1446 = vpack.c.bf16 %v903, %v903
        %v1447 = vpack.c.bf16 %v904, %v904
        %v1448 = vpack.c.bf16 %v905, %v905
        %v1449 = vpack.c.bf16 %v906, %v906
        %v1450 = vpack.c.bf16 %v907, %v907
        %v1451 = vpack.c.bf16 %v908, %v908
        %v1452 = vpack.c.bf16 %v909, %v909
        %v1453 = vpack.c.bf16 %v910, %v910
        %v1454 = vpack.c.bf16 %v911, %v911
        %v1455 = vpack.c.bf16 %v912, %v912
        %v1456 = vpack.c.bf16 %v913, %v913
        %v1457 = vpack.c.bf16 %v1397, %v1397
        %v1458 = vpack.c.bf16 %v1398, %v1398
        %v1459 = vpack.c.bf16 %v1399, %v1399
        %v1460 = vpack.c.bf16 %v1400, %v1400
        %v1461 = vpack.c.bf16 %v1401, %v1401
        %v1462 = vpack.c.bf16 %v1402, %v1402
        %v1463 = vpack.c.bf16 %v1403, %v1403
        %v1464 = vpack.c.bf16 %v1404, %v1404
        %v1465 = vpack.c.bf16 %v1405, %v1405
        %v1466 = vpack.c.bf16 %v1406, %v1406
        %v1467 = vpack.c.bf16 %v1407, %v1407
        %v1468 = vpack.c.bf16 %v1408, %v1408
        %v1469 = vpack.c.bf16 %v1409, %v1409
        %v1470 = vpack.c.bf16 %v1410, %v1410
        %v1471 = vpack.c.bf16 %v1411, %v1411
        %v1472 = vpack.c.bf16 %v1412, %v1412
        %v1473 = vpack.c.bf16 %v1413, %v1413
        %v1474 = vpack.c.bf16 %v1414, %v1414
        %v1475 = vpack.c.bf16 %v1415, %v1415
        %v1476 = vpack.c.bf16 %v1416, %v1416
        %v1477 = vld [vmem:[%s4] sm:$0xf]
        %v1478 = vld [vmem:[%s4 + $0x4] sm:$0xf]
        %v1479 = vld [vmem:[%s4 + $0x8] sm:$0xf]
        %v1480 = vld [vmem:[%s4 + $0xc] sm:$0xf]
        %v1481 = vld [vmem:[%s4 + $0x10] sm:$0xf]
        %v1482 = vld [vmem:[%s4 + $0x14] sm:$0xf]
        %v1483 = vld [vmem:[%s4 + $0x18] sm:$0xf]
        %v1484 = vld [vmem:[%s4 + $0x1c] sm:$0xf]
        %v1485 = vld [vmem:[%s4 + $0x20] sm:$0xf]
        %v1486 = vld [vmem:[%s4 + $0x24] sm:$0xf]
        %v1487 = vld [vmem:[%s4 + $0x28] sm:$0xf]
        %v1488 = vld [vmem:[%s4 + $0x2c] sm:$0xf]
        %v1489 = vld [vmem:[%s4 + $0x30] sm:$0xf]
        %v1490 = vld [vmem:[%s4 + $0x34] sm:$0xf]
        %v1491 = vld [vmem:[%s4 + $0x38] sm:$0xf]
        %v1492 = vld [vmem:[%s4 + $0x3c] sm:$0xf]
        %v1509 = vunpack.c.l.b16 %v1417
        %v1510 = vunpack.c.l.b16 %v1418
        %v1511 = vunpack.c.l.b16 %v1419
        %v1512 = vunpack.c.l.b16 %v1420
        %v1513 = vunpack.c.l.b16 %v1421
        %v1514 = vunpack.c.l.b16 %v1422
        %v1515 = vunpack.c.l.b16 %v1423
        %v1516 = vunpack.c.l.b16 %v1424
        %v1517 = vunpack.c.l.b16 %v1425
        %v1518 = vunpack.c.l.b16 %v1426
        %v1519 = vunpack.c.l.b16 %v1427
        %v1520 = vunpack.c.l.b16 %v1428
        %v1521 = vunpack.c.l.b16 %v1429
        %v1522 = vunpack.c.l.b16 %v1430
        %v1523 = vunpack.c.l.b16 %v1431
        %v1524 = vunpack.c.l.b16 %v1432
        %v1525 = vpack.c.b16 %v1510, %v1509
        %v1526 = vpack.c.b16 %v1512, %v1511
        %v1527 = vpack.c.b16 %v1514, %v1513
        %v1528 = vpack.c.b16 %v1516, %v1515
        %v1529 = vpack.c.b16 %v1518, %v1517
        %v1530 = vpack.c.b16 %v1520, %v1519
        %v1531 = vpack.c.b16 %v1522, %v1521
        %v1532 = vpack.c.b16 %v1524, %v1523
        %v1557 = vunpack.c.l.b16 %v1477
        %v1558 = vunpack.c.l.b16 %v1478
        %v1559 = vunpack.c.l.b16 %v1479
        %v1560 = vunpack.c.l.b16 %v1480
        %v1561 = vunpack.c.l.b16 %v1481
        %v1562 = vunpack.c.l.b16 %v1482
        %v1563 = vunpack.c.l.b16 %v1483
        %v1564 = vunpack.c.l.b16 %v1484
        %v1565 = vunpack.c.l.b16 %v1485
        %v1566 = vunpack.c.l.b16 %v1486
        %v1567 = vunpack.c.l.b16 %v1487
        %v1568 = vunpack.c.l.b16 %v1488
        %v1569 = vunpack.c.l.b16 %v1489
        %v1570 = vunpack.c.l.b16 %v1490
        %v1571 = vunpack.c.l.b16 %v1491
        %v1572 = vunpack.c.l.b16 %v1492
        %v1573 = vpack.c.b16 %v1558, %v1557
        %v1574 = vpack.c.b16 %v1560, %v1559
        %v1575 = vpack.c.b16 %v1562, %v1561
        %v1576 = vpack.c.b16 %v1564, %v1563
        %v1577 = vpack.c.b16 %v1566, %v1565
        %v1578 = vpack.c.b16 %v1568, %v1567
        %v1579 = vpack.c.b16 %v1570, %v1569
        %v1580 = vpack.c.b16 %v1572, %v1571
        %1589 = vmatpush.bf16.msra.mxu0 %v1580
        %1590 = vmatpush.bf16.msra.mxu0 %v1579
        %1591 = vmatpush.bf16.msra.mxu0 %v1578
        %1592 = vmatpush.bf16.msra.mxu0 %v1577
        %1593 = vmatpush.bf16.msra.mxu0 %v1576
        %1594 = vmatpush.bf16.msra.mxu0 %v1575
        %1595 = vmatpush.bf16.msra.mxu0 %v1574
        %1596 = vmatpush.bf16.msra.mxu0 %v1573
        %1597 = vmatmul.bf16.gmra.mxu0 %v1525
        %v1598 = vpop.f32.mrf.mxu0
        %v1599 = vadd.f32 0.0, %v1598
        %v1600 = vpop.f32.mrf.mxu0
        %v1601 = vadd.f32 0.0, %v1600
        %1602 = vmatmul.bf16.gmra.mxu0 %v1526
        %v1603 = vpop.f32.mrf.mxu0
        %v1604 = vadd.f32 0.0, %v1603
        %v1605 = vpop.f32.mrf.mxu0
        %v1606 = vadd.f32 0.0, %v1605
        %1607 = vmatmul.bf16.gmra.mxu0 %v1527
        %v1608 = vpop.f32.mrf.mxu0
        %v1609 = vadd.f32 0.0, %v1608
        %v1610 = vpop.f32.mrf.mxu0
        %v1611 = vadd.f32 0.0, %v1610
        %1612 = vmatmul.bf16.gmra.mxu0 %v1528
        %v1613 = vpop.f32.mrf.mxu0
        %v1614 = vadd.f32 0.0, %v1613
        %v1615 = vpop.f32.mrf.mxu0
        %v1616 = vadd.f32 0.0, %v1615
        %1617 = vmatmul.bf16.gmra.mxu0 %v1529
        %v1618 = vpop.f32.mrf.mxu0
        %v1619 = vadd.f32 0.0, %v1618
        %v1620 = vpop.f32.mrf.mxu0
        %v1621 = vadd.f32 0.0, %v1620
        %1622 = vmatmul.bf16.gmra.mxu0 %v1530
        %v1623 = vpop.f32.mrf.mxu0
        %v1624 = vadd.f32 0.0, %v1623
        %v1625 = vpop.f32.mrf.mxu0
        %v1626 = vadd.f32 0.0, %v1625
        %1627 = vmatmul.bf16.gmra.mxu0 %v1531
        %v1628 = vpop.f32.mrf.mxu0
        %v1629 = vadd.f32 0.0, %v1628
        %v1630 = vpop.f32.mrf.mxu0
        %v1631 = vadd.f32 0.0, %v1630
        %1632 = vmatmul.bf16.gmra.mxu0 %v1532
        %v1633 = vpop.f32.mrf.mxu0
        %v1634 = vadd.f32 0.0, %v1633
        %v1635 = vpop.f32.mrf.mxu0
        %v1636 = vadd.f32 0.0, %v1635
        %1637 = vdwg.mxu0
        %1638 = vst [vmem:[#allocation3] sm:$0xff] %v1599
        %1639 = vst [vmem:[#allocation3 + $0x8] sm:$0xff] %v1601
        %1640 = vst [vmem:[#allocation3 + $0x10] sm:$0xff] %v1604
        %1641 = vst [vmem:[#allocation3 + $0x18] sm:$0xff] %v1606
        %1642 = vst [vmem:[#allocation3 + $0x20] sm:$0xff] %v1609
        %1643 = vst [vmem:[#allocation3 + $0x28] sm:$0xff] %v1611
        %1644 = vst [vmem:[#allocation3 + $0x30] sm:$0xff] %v1614
        %1645 = vst [vmem:[#allocation3 + $0x38] sm:$0xff] %v1616
        %1646 = vst [vmem:[#allocation3 + $0x40] sm:$0xff] %v1619
        %1647 = vst [vmem:[#allocation3 + $0x48] sm:$0xff] %v1621
        %1648 = vst [vmem:[#allocation3 + $0x50] sm:$0xff] %v1624
        %1649 = vst [vmem:[#allocation3 + $0x58] sm:$0xff] %v1626
        %1650 = vst [vmem:[#allocation3 + $0x60] sm:$0xff] %v1629
        %1651 = vst [vmem:[#allocation3 + $0x68] sm:$0xff] %v1631
        %1652 = vst [vmem:[#allocation3 + $0x70] sm:$0xff] %v1634
        %1653 = vst [vmem:[#allocation3 + $0x78] sm:$0xff] %v1636
        %s1654 = scalar_lea.vmem %s4, 64
        %v1655 = vld [vmem:[%s1654] sm:$0xf]
        %v1656 = vld [vmem:[%s1654 + $0x4] sm:$0xf]
        %v1657 = vld [vmem:[%s1654 + $0x8] sm:$0xf]
        %v1658 = vld [vmem:[%s1654 + $0xc] sm:$0xf]
        %v1659 = vld [vmem:[%s1654 + $0x10] sm:$0xf]
        %v1660 = vld [vmem:[%s1654 + $0x14] sm:$0xf]
        %v1661 = vld [vmem:[%s1654 + $0x18] sm:$0xf]
        %v1662 = vld [vmem:[%s1654 + $0x1c] sm:$0xf]
        %v1663 = vld [vmem:[%s1654 + $0x20] sm:$0xf]
        %v1664 = vld [vmem:[%s1654 + $0x24] sm:$0xf]
        %v1665 = vld [vmem:[%s1654 + $0x28] sm:$0xf]
        %v1666 = vld [vmem:[%s1654 + $0x2c] sm:$0xf]
        %v1667 = vld [vmem:[%s1654 + $0x30] sm:$0xf]
        %v1668 = vld [vmem:[%s1654 + $0x34] sm:$0xf]
        %v1669 = vld [vmem:[%s1654 + $0x38] sm:$0xf]
        %v1670 = vld [vmem:[%s1654 + $0x3c] sm:$0xf]
        %v1687 = vunpack.c.l.b16 %v1437
        %v1688 = vunpack.c.l.b16 %v1438
        %v1689 = vunpack.c.l.b16 %v1439
        %v1690 = vunpack.c.l.b16 %v1440
        %v1691 = vunpack.c.l.b16 %v1441
        %v1692 = vunpack.c.l.b16 %v1442
        %v1693 = vunpack.c.l.b16 %v1443
        %v1694 = vunpack.c.l.b16 %v1444
        %v1695 = vunpack.c.l.b16 %v1445
        %v1696 = vunpack.c.l.b16 %v1446
        %v1697 = vunpack.c.l.b16 %v1447
        %v1698 = vunpack.c.l.b16 %v1448
        %v1699 = vunpack.c.l.b16 %v1449
        %v1700 = vunpack.c.l.b16 %v1450
        %v1701 = vunpack.c.l.b16 %v1451
        %v1702 = vunpack.c.l.b16 %v1452
        %v1703 = vpack.c.b16 %v1688, %v1687
        %v1704 = vpack.c.b16 %v1690, %v1689
        %v1705 = vpack.c.b16 %v1692, %v1691
        %v1706 = vpack.c.b16 %v1694, %v1693
        %v1707 = vpack.c.b16 %v1696, %v1695
        %v1708 = vpack.c.b16 %v1698, %v1697
        %v1709 = vpack.c.b16 %v1700, %v1699
        %v1710 = vpack.c.b16 %v1702, %v1701
        %v1735 = vunpack.c.l.b16 %v1655
        %v1736 = vunpack.c.l.b16 %v1656
        %v1737 = vunpack.c.l.b16 %v1657
        %v1738 = vunpack.c.l.b16 %v1658
        %v1739 = vunpack.c.l.b16 %v1659
        %v1740 = vunpack.c.l.b16 %v1660
        %v1741 = vunpack.c.l.b16 %v1661
        %v1742 = vunpack.c.l.b16 %v1662
        %v1743 = vunpack.c.l.b16 %v1663
        %v1744 = vunpack.c.l.b16 %v1664
        %v1745 = vunpack.c.l.b16 %v1665
        %v1746 = vunpack.c.l.b16 %v1666
        %v1747 = vunpack.c.l.b16 %v1667
        %v1748 = vunpack.c.l.b16 %v1668
        %v1749 = vunpack.c.l.b16 %v1669
        %v1750 = vunpack.c.l.b16 %v1670
        %v1751 = vpack.c.b16 %v1736, %v1735
        %v1752 = vpack.c.b16 %v1738, %v1737
        %v1753 = vpack.c.b16 %v1740, %v1739
        %v1754 = vpack.c.b16 %v1742, %v1741
        %v1755 = vpack.c.b16 %v1744, %v1743
        %v1756 = vpack.c.b16 %v1746, %v1745
        %v1757 = vpack.c.b16 %v1748, %v1747
        %v1758 = vpack.c.b16 %v1750, %v1749
        %1767 = vmatpush.bf16.msra.mxu0 %v1758
        %1768 = vmatpush.bf16.msra.mxu0 %v1757
        %1769 = vmatpush.bf16.msra.mxu0 %v1756
        %1770 = vmatpush.bf16.msra.mxu0 %v1755
        %1771 = vmatpush.bf16.msra.mxu0 %v1754
        %1772 = vmatpush.bf16.msra.mxu0 %v1753
        %1773 = vmatpush.bf16.msra.mxu0 %v1752
        %1774 = vmatpush.bf16.msra.mxu0 %v1751
        %1775 = vmatmul.bf16.gmra.mxu0 %v1703
        %v1776 = vpop.f32.mrf.mxu0
        %v1777 = vadd.f32 0.0, %v1776
        %v1778 = vpop.f32.mrf.mxu0
        %v1779 = vadd.f32 0.0, %v1778
        %1780 = vmatmul.bf16.gmra.mxu0 %v1704
        %v1781 = vpop.f32.mrf.mxu0
        %v1782 = vadd.f32 0.0, %v1781
        %v1783 = vpop.f32.mrf.mxu0
        %v1784 = vadd.f32 0.0, %v1783
        %1785 = vmatmul.bf16.gmra.mxu0 %v1705
        %v1786 = vpop.f32.mrf.mxu0
        %v1787 = vadd.f32 0.0, %v1786
        %v1788 = vpop.f32.mrf.mxu0
        %v1789 = vadd.f32 0.0, %v1788
        %1790 = vmatmul.bf16.gmra.mxu0 %v1706
        %v1791 = vpop.f32.mrf.mxu0
        %v1792 = vadd.f32 0.0, %v1791
        %v1793 = vpop.f32.mrf.mxu0
        %v1794 = vadd.f32 0.0, %v1793
        %1795 = vmatmul.bf16.gmra.mxu0 %v1707
        %v1796 = vpop.f32.mrf.mxu0
        %v1797 = vadd.f32 0.0, %v1796
        %v1798 = vpop.f32.mrf.mxu0
        %v1799 = vadd.f32 0.0, %v1798
        %1800 = vmatmul.bf16.gmra.mxu0 %v1708
        %v1801 = vpop.f32.mrf.mxu0
        %v1802 = vadd.f32 0.0, %v1801
        %v1803 = vpop.f32.mrf.mxu0
        %v1804 = vadd.f32 0.0, %v1803
        %1805 = vmatmul.bf16.gmra.mxu0 %v1709
        %v1806 = vpop.f32.mrf.mxu0
        %v1807 = vadd.f32 0.0, %v1806
        %v1808 = vpop.f32.mrf.mxu0
        %v1809 = vadd.f32 0.0, %v1808
        %1810 = vmatmul.bf16.gmra.mxu0 %v1710
        %v1811 = vpop.f32.mrf.mxu0
        %v1812 = vadd.f32 0.0, %v1811
        %v1813 = vpop.f32.mrf.mxu0
        %v1814 = vadd.f32 0.0, %v1813
        %1815 = vdwg.mxu0
        %v1816 = vld [vmem:[#allocation3] sm:$0xff]
        %v1817 = vld [vmem:[#allocation3 + $0x8] sm:$0xff]
        %v1818 = vld [vmem:[#allocation3 + $0x10] sm:$0xff]
        %v1819 = vld [vmem:[#allocation3 + $0x18] sm:$0xff]
        %v1820 = vld [vmem:[#allocation3 + $0x20] sm:$0xff]
        %v1821 = vld [vmem:[#allocation3 + $0x28] sm:$0xff]
        %v1822 = vld [vmem:[#allocation3 + $0x30] sm:$0xff]
        %v1823 = vld [vmem:[#allocation3 + $0x38] sm:$0xff]
        %v1824 = vld [vmem:[#allocation3 + $0x40] sm:$0xff]
        %v1825 = vld [vmem:[#allocation3 + $0x48] sm:$0xff]
        %v1826 = vld [vmem:[#allocation3 + $0x50] sm:$0xff]
        %v1827 = vld [vmem:[#allocation3 + $0x58] sm:$0xff]
        %v1828 = vld [vmem:[#allocation3 + $0x60] sm:$0xff]
        %v1829 = vld [vmem:[#allocation3 + $0x68] sm:$0xff]
        %v1830 = vld [vmem:[#allocation3 + $0x70] sm:$0xff]
        %v1831 = vld [vmem:[#allocation3 + $0x78] sm:$0xff]
        %v1832 = vadd.f32 %v1816, %v1777
        %v1833 = vadd.f32 %v1817, %v1779
        %v1834 = vadd.f32 %v1818, %v1782
        %v1835 = vadd.f32 %v1819, %v1784
        %v1836 = vadd.f32 %v1820, %v1787
        %v1837 = vadd.f32 %v1821, %v1789
        %v1838 = vadd.f32 %v1822, %v1792
        %v1839 = vadd.f32 %v1823, %v1794
        %v1840 = vadd.f32 %v1824, %v1797
        %v1841 = vadd.f32 %v1825, %v1799
        %v1842 = vadd.f32 %v1826, %v1802
        %v1843 = vadd.f32 %v1827, %v1804
        %v1844 = vadd.f32 %v1828, %v1807
        %v1845 = vadd.f32 %v1829, %v1809
        %v1846 = vadd.f32 %v1830, %v1812
        %v1847 = vadd.f32 %v1831, %v1814
        %1848 = vst [vmem:[#allocation3] sm:$0xff] %v1832
        %1849 = vst [vmem:[#allocation3 + $0x8] sm:$0xff] %v1833
        %1850 = vst [vmem:[#allocation3 + $0x10] sm:$0xff] %v1834
        %1851 = vst [vmem:[#allocation3 + $0x18] sm:$0xff] %v1835
        %1852 = vst [vmem:[#allocation3 + $0x20] sm:$0xff] %v1836
        %1853 = vst [vmem:[#allocation3 + $0x28] sm:$0xff] %v1837
        %1854 = vst [vmem:[#allocation3 + $0x30] sm:$0xff] %v1838
        %1855 = vst [vmem:[#allocation3 + $0x38] sm:$0xff] %v1839
        %1856 = vst [vmem:[#allocation3 + $0x40] sm:$0xff] %v1840
        %1857 = vst [vmem:[#allocation3 + $0x48] sm:$0xff] %v1841
        %1858 = vst [vmem:[#allocation3 + $0x50] sm:$0xff] %v1842
        %1859 = vst [vmem:[#allocation3 + $0x58] sm:$0xff] %v1843
        %1860 = vst [vmem:[#allocation3 + $0x60] sm:$0xff] %v1844
        %1861 = vst [vmem:[#allocation3 + $0x68] sm:$0xff] %v1845
        %1862 = vst [vmem:[#allocation3 + $0x70] sm:$0xff] %v1846
        %1863 = vst [vmem:[#allocation3 + $0x78] sm:$0xff] %v1847
        %s1864 = scalar_lea.vmem %s4, 128
        %v1865 = vld [vmem:[%s1864] sm:$0xf]
        %v1866 = vld [vmem:[%s1864 + $0x4] sm:$0xf]
        %v1867 = vld [vmem:[%s1864 + $0x8] sm:$0xf]
        %v1868 = vld [vmem:[%s1864 + $0xc] sm:$0xf]
        %v1869 = vld [vmem:[%s1864 + $0x10] sm:$0xf]
        %v1870 = vld [vmem:[%s1864 + $0x14] sm:$0xf]
        %v1871 = vld [vmem:[%s1864 + $0x18] sm:$0xf]
        %v1872 = vld [vmem:[%s1864 + $0x1c] sm:$0xf]
        %v1873 = vld [vmem:[%s1864 + $0x20] sm:$0xf]
        %v1874 = vld [vmem:[%s1864 + $0x24] sm:$0xf]
        %v1875 = vld [vmem:[%s1864 + $0x28] sm:$0xf]
        %v1876 = vld [vmem:[%s1864 + $0x2c] sm:$0xf]
        %v1877 = vld [vmem:[%s1864 + $0x30] sm:$0xf]
        %v1878 = vld [vmem:[%s1864 + $0x34] sm:$0xf]
        %v1879 = vld [vmem:[%s1864 + $0x38] sm:$0xf]
        %v1880 = vld [vmem:[%s1864 + $0x3c] sm:$0xf]
        %v1897 = vunpack.c.l.b16 %v1457
        %v1898 = vunpack.c.l.b16 %v1458
        %v1899 = vunpack.c.l.b16 %v1459
        %v1900 = vunpack.c.l.b16 %v1460
        %v1901 = vunpack.c.l.b16 %v1461
        %v1902 = vunpack.c.l.b16 %v1462
        %v1903 = vunpack.c.l.b16 %v1463
        %v1904 = vunpack.c.l.b16 %v1464
        %v1905 = vunpack.c.l.b16 %v1465
        %v1906 = vunpack.c.l.b16 %v1466
        %v1907 = vunpack.c.l.b16 %v1467
        %v1908 = vunpack.c.l.b16 %v1468
        %v1909 = vunpack.c.l.b16 %v1469
        %v1910 = vunpack.c.l.b16 %v1470
        %v1911 = vunpack.c.l.b16 %v1471
        %v1912 = vunpack.c.l.b16 %v1472
        %v1913 = vpack.c.b16 %v1898, %v1897
        %v1914 = vpack.c.b16 %v1900, %v1899
        %v1915 = vpack.c.b16 %v1902, %v1901
        %v1916 = vpack.c.b16 %v1904, %v1903
        %v1917 = vpack.c.b16 %v1906, %v1905
        %v1918 = vpack.c.b16 %v1908, %v1907
        %v1919 = vpack.c.b16 %v1910, %v1909
        %v1920 = vpack.c.b16 %v1912, %v1911
        %v1945 = vunpack.c.l.b16 %v1865
        %v1946 = vunpack.c.l.b16 %v1866
        %v1947 = vunpack.c.l.b16 %v1867
        %v1948 = vunpack.c.l.b16 %v1868
        %v1949 = vunpack.c.l.b16 %v1869
        %v1950 = vunpack.c.l.b16 %v1870
        %v1951 = vunpack.c.l.b16 %v1871
        %v1952 = vunpack.c.l.b16 %v1872
        %v1953 = vunpack.c.l.b16 %v1873
        %v1954 = vunpack.c.l.b16 %v1874
        %v1955 = vunpack.c.l.b16 %v1875
        %v1956 = vunpack.c.l.b16 %v1876
        %v1957 = vunpack.c.l.b16 %v1877
        %v1958 = vunpack.c.l.b16 %v1878
        %v1959 = vunpack.c.l.b16 %v1879
        %v1960 = vunpack.c.l.b16 %v1880
        %v1961 = vpack.c.b16 %v1946, %v1945
        %v1962 = vpack.c.b16 %v1948, %v1947
        %v1963 = vpack.c.b16 %v1950, %v1949
        %v1964 = vpack.c.b16 %v1952, %v1951
        %v1965 = vpack.c.b16 %v1954, %v1953
        %v1966 = vpack.c.b16 %v1956, %v1955
        %v1967 = vpack.c.b16 %v1958, %v1957
        %v1968 = vpack.c.b16 %v1960, %v1959
        %1977 = vmatpush.bf16.msra.mxu0 %v1968
        %1978 = vmatpush.bf16.msra.mxu0 %v1967
        %1979 = vmatpush.bf16.msra.mxu0 %v1966
        %1980 = vmatpush.bf16.msra.mxu0 %v1965
        %1981 = vmatpush.bf16.msra.mxu0 %v1964
        %1982 = vmatpush.bf16.msra.mxu0 %v1963
        %1983 = vmatpush.bf16.msra.mxu0 %v1962
        %1984 = vmatpush.bf16.msra.mxu0 %v1961
        %1985 = vmatmul.bf16.gmra.mxu0 %v1913
        %v1986 = vpop.f32.mrf.mxu0
        %v1987 = vadd.f32 0.0, %v1986
        %v1988 = vpop.f32.mrf.mxu0
        %v1989 = vadd.f32 0.0, %v1988
        %1990 = vmatmul.bf16.gmra.mxu0 %v1914
        %v1991 = vpop.f32.mrf.mxu0
        %v1992 = vadd.f32 0.0, %v1991
        %v1993 = vpop.f32.mrf.mxu0
        %v1994 = vadd.f32 0.0, %v1993
        %1995 = vmatmul.bf16.gmra.mxu0 %v1915
        %v1996 = vpop.f32.mrf.mxu0
        %v1997 = vadd.f32 0.0, %v1996
        %v1998 = vpop.f32.mrf.mxu0
        %v1999 = vadd.f32 0.0, %v1998
        %2000 = vmatmul.bf16.gmra.mxu0 %v1916
        %v2001 = vpop.f32.mrf.mxu0
        %v2002 = vadd.f32 0.0, %v2001
        %v2003 = vpop.f32.mrf.mxu0
        %v2004 = vadd.f32 0.0, %v2003
        %2005 = vmatmul.bf16.gmra.mxu0 %v1917
        %v2006 = vpop.f32.mrf.mxu0
        %v2007 = vadd.f32 0.0, %v2006
        %v2008 = vpop.f32.mrf.mxu0
        %v2009 = vadd.f32 0.0, %v2008
        %2010 = vmatmul.bf16.gmra.mxu0 %v1918
        %v2011 = vpop.f32.mrf.mxu0
        %v2012 = vadd.f32 0.0, %v2011
        %v2013 = vpop.f32.mrf.mxu0
        %v2014 = vadd.f32 0.0, %v2013
        %2015 = vmatmul.bf16.gmra.mxu0 %v1919
        %v2016 = vpop.f32.mrf.mxu0
        %v2017 = vadd.f32 0.0, %v2016
        %v2018 = vpop.f32.mrf.mxu0
        %v2019 = vadd.f32 0.0, %v2018
        %2020 = vmatmul.bf16.gmra.mxu0 %v1920
        %v2021 = vpop.f32.mrf.mxu0
        %v2022 = vadd.f32 0.0, %v2021
        %v2023 = vpop.f32.mrf.mxu0
        %v2024 = vadd.f32 0.0, %v2023
        %2025 = vdwg.mxu0
        %v2026 = vld [vmem:[#allocation3] sm:$0xff]
        %v2027 = vld [vmem:[#allocation3 + $0x8] sm:$0xff]
        %v2028 = vld [vmem:[#allocation3 + $0x10] sm:$0xff]
        %v2029 = vld [vmem:[#allocation3 + $0x18] sm:$0xff]
        %v2030 = vld [vmem:[#allocation3 + $0x20] sm:$0xff]
        %v2031 = vld [vmem:[#allocation3 + $0x28] sm:$0xff]
        %v2032 = vld [vmem:[#allocation3 + $0x30] sm:$0xff]
        %v2033 = vld [vmem:[#allocation3 + $0x38] sm:$0xff]
        %v2034 = vld [vmem:[#allocation3 + $0x40] sm:$0xff]
        %v2035 = vld [vmem:[#allocation3 + $0x48] sm:$0xff]
        %v2036 = vld [vmem:[#allocation3 + $0x50] sm:$0xff]
        %v2037 = vld [vmem:[#allocation3 + $0x58] sm:$0xff]
        %v2038 = vld [vmem:[#allocation3 + $0x60] sm:$0xff]
        %v2039 = vld [vmem:[#allocation3 + $0x68] sm:$0xff]
        %v2040 = vld [vmem:[#allocation3 + $0x70] sm:$0xff]
        %v2041 = vld [vmem:[#allocation3 + $0x78] sm:$0xff]
        %v2042 = vadd.f32 %v2026, %v1987
        %v2043 = vadd.f32 %v2027, %v1989
        %v2044 = vadd.f32 %v2028, %v1992
        %v2045 = vadd.f32 %v2029, %v1994
        %v2046 = vadd.f32 %v2030, %v1997
        %v2047 = vadd.f32 %v2031, %v1999
        %v2048 = vadd.f32 %v2032, %v2002
        %v2049 = vadd.f32 %v2033, %v2004
        %v2050 = vadd.f32 %v2034, %v2007
        %v2051 = vadd.f32 %v2035, %v2009
        %v2052 = vadd.f32 %v2036, %v2012
        %v2053 = vadd.f32 %v2037, %v2014
        %v2054 = vadd.f32 %v2038, %v2017
        %v2055 = vadd.f32 %v2039, %v2019
        %v2056 = vadd.f32 %v2040, %v2022
        %v2057 = vadd.f32 %v2041, %v2024
        %2058 = vst [vmem:[#allocation3] sm:$0xff] %v2042
        %2059 = vst [vmem:[#allocation3 + $0x8] sm:$0xff] %v2043
        %2060 = vst [vmem:[#allocation3 + $0x10] sm:$0xff] %v2044
        %2061 = vst [vmem:[#allocation3 + $0x18] sm:$0xff] %v2045
        %2062 = vst [vmem:[#allocation3 + $0x20] sm:$0xff] %v2046
        %2063 = vst [vmem:[#allocation3 + $0x28] sm:$0xff] %v2047
        %2064 = vst [vmem:[#allocation3 + $0x30] sm:$0xff] %v2048
        %2065 = vst [vmem:[#allocation3 + $0x38] sm:$0xff] %v2049
        %2066 = vst [vmem:[#allocation3 + $0x40] sm:$0xff] %v2050
        %2067 = vst [vmem:[#allocation3 + $0x48] sm:$0xff] %v2051
        %2068 = vst [vmem:[#allocation3 + $0x50] sm:$0xff] %v2052
        %2069 = vst [vmem:[#allocation3 + $0x58] sm:$0xff] %v2053
        %2070 = vst [vmem:[#allocation3 + $0x60] sm:$0xff] %v2054
        %2071 = vst [vmem:[#allocation3 + $0x68] sm:$0xff] %v2055
        %2072 = vst [vmem:[#allocation3 + $0x70] sm:$0xff] %v2056
        %2073 = vst [vmem:[#allocation3 + $0x78] sm:$0xff] %v2057
        %s2074 = scalar_lea.vmem %s4, 192
        %v2075 = vld [vmem:[%s2074] sm:$0xf]
        %v2076 = vld [vmem:[%s2074 + $0x4] sm:$0xf]
        %v2077 = vld [vmem:[%s2074 + $0x8] sm:$0xf]
        %v2078 = vld [vmem:[%s2074 + $0xc] sm:$0xf]
        %v2079 = vld [vmem:[%s2074 + $0x10] sm:$0xf]
        %v2080 = vld [vmem:[%s2074 + $0x14] sm:$0xf]
        %v2081 = vld [vmem:[%s2074 + $0x18] sm:$0xf]
        %v2082 = vld [vmem:[%s2074 + $0x1c] sm:$0xf]
        %v2083 = vld [vmem:[%s2074 + $0x20] sm:$0xf]
        %v2084 = vld [vmem:[%s2074 + $0x24] sm:$0xf]
        %v2085 = vld [vmem:[%s2074 + $0x28] sm:$0xf]
        %v2086 = vld [vmem:[%s2074 + $0x2c] sm:$0xf]
        %v2087 = vld [vmem:[%s2074 + $0x30] sm:$0xf]
        %v2088 = vld [vmem:[%s2074 + $0x34] sm:$0xf]
        %v2089 = vld [vmem:[%s2074 + $0x38] sm:$0xf]
        %v2090 = vld [vmem:[%s2074 + $0x3c] sm:$0xf]
        %v2093 = vunpack.c.l.b16 %v1433
        %v2094 = vunpack.c.l.b16 %v1434
        %v2095 = vpack.c.b16 %v2094, %v2093
        %v2113 = vunpack.c.l.b16 %v2075
        %v2114 = vunpack.c.l.b16 %v2076
        %v2115 = vunpack.c.l.b16 %v2077
        %v2116 = vunpack.c.l.b16 %v2078
        %v2117 = vunpack.c.l.b16 %v2079
        %v2118 = vunpack.c.l.b16 %v2080
        %v2119 = vunpack.c.l.b16 %v2081
        %v2120 = vunpack.c.l.b16 %v2082
        %v2121 = vunpack.c.l.b16 %v2083
        %v2122 = vunpack.c.l.b16 %v2084
        %v2123 = vunpack.c.l.b16 %v2085
        %v2124 = vunpack.c.l.b16 %v2086
        %v2125 = vunpack.c.l.b16 %v2087
        %v2126 = vunpack.c.l.b16 %v2088
        %v2127 = vunpack.c.l.b16 %v2089
        %v2128 = vunpack.c.l.b16 %v2090
        %v2129 = vpack.c.b16 %v2114, %v2113
        %v2130 = vpack.c.b16 %v2116, %v2115
        %v2131 = vpack.c.b16 %v2118, %v2117
        %v2132 = vpack.c.b16 %v2120, %v2119
        %v2133 = vpack.c.b16 %v2122, %v2121
        %v2134 = vpack.c.b16 %v2124, %v2123
        %v2135 = vpack.c.b16 %v2126, %v2125
        %v2136 = vpack.c.b16 %v2128, %v2127
        %2145 = vmatpush.bf16.msra.mxu0 %v2136
        %2146 = vmatpush.bf16.msra.mxu0 %v2135
        %2147 = vmatpush.bf16.msra.mxu0 %v2134
        %2148 = vmatpush.bf16.msra.mxu0 %v2133
        %2149 = vmatpush.bf16.msra.mxu0 %v2132
        %2150 = vmatpush.bf16.msra.mxu0 %v2131
        %2151 = vmatpush.bf16.msra.mxu0 %v2130
        %2152 = vmatpush.bf16.msra.mxu0 %v2129
        %2153 = vmatmul.bf16.gmra.mxu0 %v1526
        %v2154 = vpop.f32.mrf.mxu0
        %v2155 = vadd.f32 0.0, %v2154
        %v2156 = vpop.f32.mrf.mxu0
        %v2157 = vadd.f32 0.0, %v2156
        %2158 = vmatmul.bf16.gmra.mxu0 %v1527
        %v2159 = vpop.f32.mrf.mxu0
        %v2160 = vadd.f32 0.0, %v2159
        %v2161 = vpop.f32.mrf.mxu0
        %v2162 = vadd.f32 0.0, %v2161
        %2163 = vmatmul.bf16.gmra.mxu0 %v1528
        %v2164 = vpop.f32.mrf.mxu0
        %v2165 = vadd.f32 0.0, %v2164
        %v2166 = vpop.f32.mrf.mxu0
        %v2167 = vadd.f32 0.0, %v2166
        %2168 = vmatmul.bf16.gmra.mxu0 %v1529
        %v2169 = vpop.f32.mrf.mxu0
        %v2170 = vadd.f32 0.0, %v2169
        %v2171 = vpop.f32.mrf.mxu0
        %v2172 = vadd.f32 0.0, %v2171
        %2173 = vmatmul.bf16.gmra.mxu0 %v1530
        %v2174 = vpop.f32.mrf.mxu0
        %v2175 = vadd.f32 0.0, %v2174
        %v2176 = vpop.f32.mrf.mxu0
        %v2177 = vadd.f32 0.0, %v2176
        %2178 = vmatmul.bf16.gmra.mxu0 %v1531
        %v2179 = vpop.f32.mrf.mxu0
        %v2180 = vadd.f32 0.0, %v2179
        %v2181 = vpop.f32.mrf.mxu0
        %v2182 = vadd.f32 0.0, %v2181
        %2183 = vmatmul.bf16.gmra.mxu0 %v1532
        %v2184 = vpop.f32.mrf.mxu0
        %v2185 = vadd.f32 0.0, %v2184
        %v2186 = vpop.f32.mrf.mxu0
        %v2187 = vadd.f32 0.0, %v2186
        %2188 = vmatmul.bf16.gmra.mxu0 %v2095
        %v2189 = vpop.f32.mrf.mxu0
        %v2190 = vadd.f32 0.0, %v2189
        %v2191 = vpop.f32.mrf.mxu0
        %v2192 = vadd.f32 0.0, %v2191
        %2193 = vdwg.mxu0
        %v2194 = vld [vmem:[#allocation3] sm:$0xff]
        %v2195 = vld [vmem:[#allocation3 + $0x8] sm:$0xff]
        %v2196 = vld [vmem:[#allocation3 + $0x10] sm:$0xff]
        %v2197 = vld [vmem:[#allocation3 + $0x18] sm:$0xff]
        %v2198 = vld [vmem:[#allocation3 + $0x20] sm:$0xff]
        %v2199 = vld [vmem:[#allocation3 + $0x28] sm:$0xff]
        %v2200 = vld [vmem:[#allocation3 + $0x30] sm:$0xff]
        %v2201 = vld [vmem:[#allocation3 + $0x38] sm:$0xff]
        %v2202 = vld [vmem:[#allocation3 + $0x40] sm:$0xff]
        %v2203 = vld [vmem:[#allocation3 + $0x48] sm:$0xff]
        %v2204 = vld [vmem:[#allocation3 + $0x50] sm:$0xff]
        %v2205 = vld [vmem:[#allocation3 + $0x58] sm:$0xff]
        %v2206 = vld [vmem:[#allocation3 + $0x60] sm:$0xff]
        %v2207 = vld [vmem:[#allocation3 + $0x68] sm:$0xff]
        %v2208 = vld [vmem:[#allocation3 + $0x70] sm:$0xff]
        %v2209 = vld [vmem:[#allocation3 + $0x78] sm:$0xff]
        %v2210 = vadd.f32 %v2194, %v2155
        %v2211 = vadd.f32 %v2195, %v2157
        %v2212 = vadd.f32 %v2196, %v2160
        %v2213 = vadd.f32 %v2197, %v2162
        %v2214 = vadd.f32 %v2198, %v2165
        %v2215 = vadd.f32 %v2199, %v2167
        %v2216 = vadd.f32 %v2200, %v2170
        %v2217 = vadd.f32 %v2201, %v2172
        %v2218 = vadd.f32 %v2202, %v2175
        %v2219 = vadd.f32 %v2203, %v2177
        %v2220 = vadd.f32 %v2204, %v2180
        %v2221 = vadd.f32 %v2205, %v2182
        %v2222 = vadd.f32 %v2206, %v2185
        %v2223 = vadd.f32 %v2207, %v2187
        %v2224 = vadd.f32 %v2208, %v2190
        %v2225 = vadd.f32 %v2209, %v2192
        %2226 = vst [vmem:[#allocation3] sm:$0xff] %v2210
        %2227 = vst [vmem:[#allocation3 + $0x8] sm:$0xff] %v2211
        %2228 = vst [vmem:[#allocation3 + $0x10] sm:$0xff] %v2212
        %2229 = vst [vmem:[#allocation3 + $0x18] sm:$0xff] %v2213
        %2230 = vst [vmem:[#allocation3 + $0x20] sm:$0xff] %v2214
        %2231 = vst [vmem:[#allocation3 + $0x28] sm:$0xff] %v2215
        %2232 = vst [vmem:[#allocation3 + $0x30] sm:$0xff] %v2216
        %2233 = vst [vmem:[#allocation3 + $0x38] sm:$0xff] %v2217
        %2234 = vst [vmem:[#allocation3 + $0x40] sm:$0xff] %v2218
        %2235 = vst [vmem:[#allocation3 + $0x48] sm:$0xff] %v2219
        %2236 = vst [vmem:[#allocation3 + $0x50] sm:$0xff] %v2220
        %2237 = vst [vmem:[#allocation3 + $0x58] sm:$0xff] %v2221
        %2238 = vst [vmem:[#allocation3 + $0x60] sm:$0xff] %v2222
        %2239 = vst [vmem:[#allocation3 + $0x68] sm:$0xff] %v2223
        %2240 = vst [vmem:[#allocation3 + $0x70] sm:$0xff] %v2224
        %2241 = vst [vmem:[#allocation3 + $0x78] sm:$0xff] %v2225
        %s2242 = scalar_lea.vmem %s4, 256
        %v2243 = vld [vmem:[%s2242] sm:$0xf]
        %v2244 = vld [vmem:[%s2242 + $0x4] sm:$0xf]
        %v2245 = vld [vmem:[%s2242 + $0x8] sm:$0xf]
        %v2246 = vld [vmem:[%s2242 + $0xc] sm:$0xf]
        %v2247 = vld [vmem:[%s2242 + $0x10] sm:$0xf]
        %v2248 = vld [vmem:[%s2242 + $0x14] sm:$0xf]
        %v2249 = vld [vmem:[%s2242 + $0x18] sm:$0xf]
        %v2250 = vld [vmem:[%s2242 + $0x1c] sm:$0xf]
        %v2251 = vld [vmem:[%s2242 + $0x20] sm:$0xf]
        %v2252 = vld [vmem:[%s2242 + $0x24] sm:$0xf]
        %v2253 = vld [vmem:[%s2242 + $0x28] sm:$0xf]
        %v2254 = vld [vmem:[%s2242 + $0x2c] sm:$0xf]
        %v2255 = vld [vmem:[%s2242 + $0x30] sm:$0xf]
        %v2256 = vld [vmem:[%s2242 + $0x34] sm:$0xf]
        %v2257 = vld [vmem:[%s2242 + $0x38] sm:$0xf]
        %v2258 = vld [vmem:[%s2242 + $0x3c] sm:$0xf]
        %v2261 = vunpack.c.l.b16 %v1453
        %v2262 = vunpack.c.l.b16 %v1454
        %v2263 = vpack.c.b16 %v2262, %v2261
        %v2281 = vunpack.c.l.b16 %v2243
        %v2282 = vunpack.c.l.b16 %v2244
        %v2283 = vunpack.c.l.b16 %v2245
        %v2284 = vunpack.c.l.b16 %v2246
        %v2285 = vunpack.c.l.b16 %v2247
        %v2286 = vunpack.c.l.b16 %v2248
        %v2287 = vunpack.c.l.b16 %v2249
        %v2288 = vunpack.c.l.b16 %v2250
        %v2289 = vunpack.c.l.b16 %v2251
        %v2290 = vunpack.c.l.b16 %v2252
        %v2291 = vunpack.c.l.b16 %v2253
        %v2292 = vunpack.c.l.b16 %v2254
        %v2293 = vunpack.c.l.b16 %v2255
        %v2294 = vunpack.c.l.b16 %v2256
        %v2295 = vunpack.c.l.b16 %v2257
        %v2296 = vunpack.c.l.b16 %v2258
        %v2297 = vpack.c.b16 %v2282, %v2281
        %v2298 = vpack.c.b16 %v2284, %v2283
        %v2299 = vpack.c.b16 %v2286, %v2285
        %v2300 = vpack.c.b16 %v2288, %v2287
        %v2301 = vpack.c.b16 %v2290, %v2289
        %v2302 = vpack.c.b16 %v2292, %v2291
        %v2303 = vpack.c.b16 %v2294, %v2293
        %v2304 = vpack.c.b16 %v2296, %v2295
        %2313 = vmatpush.bf16.msra.mxu0 %v2304
        %2314 = vmatpush.bf16.msra.mxu0 %v2303
        %2315 = vmatpush.bf16.msra.mxu0 %v2302
        %2316 = vmatpush.bf16.msra.mxu0 %v2301
        %2317 = vmatpush.bf16.msra.mxu0 %v2300
        %2318 = vmatpush.bf16.msra.mxu0 %v2299
        %2319 = vmatpush.bf16.msra.mxu0 %v2298
        %2320 = vmatpush.bf16.msra.mxu0 %v2297
        %2321 = vmatmul.bf16.gmra.mxu0 %v1704
        %v2322 = vpop.f32.mrf.mxu0
        %v2323 = vadd.f32 0.0, %v2322
        %v2324 = vpop.f32.mrf.mxu0
        %v2325 = vadd.f32 0.0, %v2324
        %2326 = vmatmul.bf16.gmra.mxu0 %v1705
        %v2327 = vpop.f32.mrf.mxu0
        %v2328 = vadd.f32 0.0, %v2327
        %v2329 = vpop.f32.mrf.mxu0
        %v2330 = vadd.f32 0.0, %v2329
        %2331 = vmatmul.bf16.gmra.mxu0 %v1706
        %v2332 = vpop.f32.mrf.mxu0
        %v2333 = vadd.f32 0.0, %v2332
        %v2334 = vpop.f32.mrf.mxu0
        %v2335 = vadd.f32 0.0, %v2334
        %2336 = vmatmul.bf16.gmra.mxu0 %v1707
        %v2337 = vpop.f32.mrf.mxu0
        %v2338 = vadd.f32 0.0, %v2337
        %v2339 = vpop.f32.mrf.mxu0
        %v2340 = vadd.f32 0.0, %v2339
        %2341 = vmatmul.bf16.gmra.mxu0 %v1708
        %v2342 = vpop.f32.mrf.mxu0
        %v2343 = vadd.f32 0.0, %v2342
        %v2344 = vpop.f32.mrf.mxu0
        %v2345 = vadd.f32 0.0, %v2344
        %2346 = vmatmul.bf16.gmra.mxu0 %v1709
        %v2347 = vpop.f32.mrf.mxu0
        %v2348 = vadd.f32 0.0, %v2347
        %v2349 = vpop.f32.mrf.mxu0
        %v2350 = vadd.f32 0.0, %v2349
        %2351 = vmatmul.bf16.gmra.mxu0 %v1710
        %v2352 = vpop.f32.mrf.mxu0
        %v2353 = vadd.f32 0.0, %v2352
        %v2354 = vpop.f32.mrf.mxu0
        %v2355 = vadd.f32 0.0, %v2354
        %2356 = vmatmul.bf16.gmra.mxu0 %v2263
        %v2357 = vpop.f32.mrf.mxu0
        %v2358 = vadd.f32 0.0, %v2357
        %v2359 = vpop.f32.mrf.mxu0
        %v2360 = vadd.f32 0.0, %v2359
        %2361 = vdwg.mxu0
        %v2362 = vld [vmem:[#allocation3] sm:$0xff]
        %v2363 = vld [vmem:[#allocation3 + $0x8] sm:$0xff]
        %v2364 = vld [vmem:[#allocation3 + $0x10] sm:$0xff]
        %v2365 = vld [vmem:[#allocation3 + $0x18] sm:$0xff]
        %v2366 = vld [vmem:[#allocation3 + $0x20] sm:$0xff]
        %v2367 = vld [vmem:[#allocation3 + $0x28] sm:$0xff]
        %v2368 = vld [vmem:[#allocation3 + $0x30] sm:$0xff]
        %v2369 = vld [vmem:[#allocation3 + $0x38] sm:$0xff]
        %v2370 = vld [vmem:[#allocation3 + $0x40] sm:$0xff]
        %v2371 = vld [vmem:[#allocation3 + $0x48] sm:$0xff]
        %v2372 = vld [vmem:[#allocation3 + $0x50] sm:$0xff]
        %v2373 = vld [vmem:[#allocation3 + $0x58] sm:$0xff]
        %v2374 = vld [vmem:[#allocation3 + $0x60] sm:$0xff]
        %v2375 = vld [vmem:[#allocation3 + $0x68] sm:$0xff]
        %v2376 = vld [vmem:[#allocation3 + $0x70] sm:$0xff]
        %v2377 = vld [vmem:[#allocation3 + $0x78] sm:$0xff]
        %v2378 = vadd.f32 %v2362, %v2323
        %v2379 = vadd.f32 %v2363, %v2325
        %v2380 = vadd.f32 %v2364, %v2328
        %v2381 = vadd.f32 %v2365, %v2330
        %v2382 = vadd.f32 %v2366, %v2333
        %v2383 = vadd.f32 %v2367, %v2335
        %v2384 = vadd.f32 %v2368, %v2338
        %v2385 = vadd.f32 %v2369, %v2340
        %v2386 = vadd.f32 %v2370, %v2343
        %v2387 = vadd.f32 %v2371, %v2345
        %v2388 = vadd.f32 %v2372, %v2348
        %v2389 = vadd.f32 %v2373, %v2350
        %v2390 = vadd.f32 %v2374, %v2353
        %v2391 = vadd.f32 %v2375, %v2355
        %v2392 = vadd.f32 %v2376, %v2358
        %v2393 = vadd.f32 %v2377, %v2360
        %2394 = vst [vmem:[#allocation3] sm:$0xff] %v2378
        %2395 = vst [vmem:[#allocation3 + $0x8] sm:$0xff] %v2379
        %2396 = vst [vmem:[#allocation3 + $0x10] sm:$0xff] %v2380
        %2397 = vst [vmem:[#allocation3 + $0x18] sm:$0xff] %v2381
        %2398 = vst [vmem:[#allocation3 + $0x20] sm:$0xff] %v2382
        %2399 = vst [vmem:[#allocation3 + $0x28] sm:$0xff] %v2383
        %2400 = vst [vmem:[#allocation3 + $0x30] sm:$0xff] %v2384
        %2401 = vst [vmem:[#allocation3 + $0x38] sm:$0xff] %v2385
        %2402 = vst [vmem:[#allocation3 + $0x40] sm:$0xff] %v2386
        %2403 = vst [vmem:[#allocation3 + $0x48] sm:$0xff] %v2387
        %2404 = vst [vmem:[#allocation3 + $0x50] sm:$0xff] %v2388
        %2405 = vst [vmem:[#allocation3 + $0x58] sm:$0xff] %v2389
        %2406 = vst [vmem:[#allocation3 + $0x60] sm:$0xff] %v2390
        %2407 = vst [vmem:[#allocation3 + $0x68] sm:$0xff] %v2391
        %2408 = vst [vmem:[#allocation3 + $0x70] sm:$0xff] %v2392
        %2409 = vst [vmem:[#allocation3 + $0x78] sm:$0xff] %v2393
        %s2410 = scalar_lea.vmem %s4, 320
        %v2411 = vld [vmem:[%s2410] sm:$0xf]
        %v2412 = vld [vmem:[%s2410 + $0x4] sm:$0xf]
        %v2413 = vld [vmem:[%s2410 + $0x8] sm:$0xf]
        %v2414 = vld [vmem:[%s2410 + $0xc] sm:$0xf]
        %v2415 = vld [vmem:[%s2410 + $0x10] sm:$0xf]
        %v2416 = vld [vmem:[%s2410 + $0x14] sm:$0xf]
        %v2417 = vld [vmem:[%s2410 + $0x18] sm:$0xf]
        %v2418 = vld [vmem:[%s2410 + $0x1c] sm:$0xf]
        %v2419 = vld [vmem:[%s2410 + $0x20] sm:$0xf]
        %v2420 = vld [vmem:[%s2410 + $0x24] sm:$0xf]
        %v2421 = vld [vmem:[%s2410 + $0x28] sm:$0xf]
        %v2422 = vld [vmem:[%s2410 + $0x2c] sm:$0xf]
        %v2423 = vld [vmem:[%s2410 + $0x30] sm:$0xf]
        %v2424 = vld [vmem:[%s2410 + $0x34] sm:$0xf]
        %v2425 = vld [vmem:[%s2410 + $0x38] sm:$0xf]
        %v2426 = vld [vmem:[%s2410 + $0x3c] sm:$0xf]
        %v2429 = vunpack.c.l.b16 %v1473
        %v2430 = vunpack.c.l.b16 %v1474
        %v2431 = vpack.c.b16 %v2430, %v2429
        %v2449 = vunpack.c.l.b16 %v2411
        %v2450 = vunpack.c.l.b16 %v2412
        %v2451 = vunpack.c.l.b16 %v2413
        %v2452 = vunpack.c.l.b16 %v2414
        %v2453 = vunpack.c.l.b16 %v2415
        %v2454 = vunpack.c.l.b16 %v2416
        %v2455 = vunpack.c.l.b16 %v2417
        %v2456 = vunpack.c.l.b16 %v2418
        %v2457 = vunpack.c.l.b16 %v2419
        %v2458 = vunpack.c.l.b16 %v2420
        %v2459 = vunpack.c.l.b16 %v2421
        %v2460 = vunpack.c.l.b16 %v2422
        %v2461 = vunpack.c.l.b16 %v2423
        %v2462 = vunpack.c.l.b16 %v2424
        %v2463 = vunpack.c.l.b16 %v2425
        %v2464 = vunpack.c.l.b16 %v2426
        %v2465 = vpack.c.b16 %v2450, %v2449
        %v2466 = vpack.c.b16 %v2452, %v2451
        %v2467 = vpack.c.b16 %v2454, %v2453
        %v2468 = vpack.c.b16 %v2456, %v2455
        %v2469 = vpack.c.b16 %v2458, %v2457
        %v2470 = vpack.c.b16 %v2460, %v2459
        %v2471 = vpack.c.b16 %v2462, %v2461
        %v2472 = vpack.c.b16 %v2464, %v2463
        %2481 = vmatpush.bf16.msra.mxu0 %v2472
        %2482 = vmatpush.bf16.msra.mxu0 %v2471
        %2483 = vmatpush.bf16.msra.mxu0 %v2470
        %2484 = vmatpush.bf16.msra.mxu0 %v2469
        %2485 = vmatpush.bf16.msra.mxu0 %v2468
        %2486 = vmatpush.bf16.msra.mxu0 %v2467
        %2487 = vmatpush.bf16.msra.mxu0 %v2466
        %2488 = vmatpush.bf16.msra.mxu0 %v2465
        %2489 = vmatmul.bf16.gmra.mxu0 %v1914
        %v2490 = vpop.f32.mrf.mxu0
        %v2491 = vadd.f32 0.0, %v2490
        %v2492 = vpop.f32.mrf.mxu0
        %v2493 = vadd.f32 0.0, %v2492
        %2494 = vmatmul.bf16.gmra.mxu0 %v1915
        %v2495 = vpop.f32.mrf.mxu0
        %v2496 = vadd.f32 0.0, %v2495
        %v2497 = vpop.f32.mrf.mxu0
        %v2498 = vadd.f32 0.0, %v2497
        %2499 = vmatmul.bf16.gmra.mxu0 %v1916
        %v2500 = vpop.f32.mrf.mxu0
        %v2501 = vadd.f32 0.0, %v2500
        %v2502 = vpop.f32.mrf.mxu0
        %v2503 = vadd.f32 0.0, %v2502
        %2504 = vmatmul.bf16.gmra.mxu0 %v1917
        %v2505 = vpop.f32.mrf.mxu0
        %v2506 = vadd.f32 0.0, %v2505
        %v2507 = vpop.f32.mrf.mxu0
        %v2508 = vadd.f32 0.0, %v2507
        %2509 = vmatmul.bf16.gmra.mxu0 %v1918
        %v2510 = vpop.f32.mrf.mxu0
        %v2511 = vadd.f32 0.0, %v2510
        %v2512 = vpop.f32.mrf.mxu0
        %v2513 = vadd.f32 0.0, %v2512
        %2514 = vmatmul.bf16.gmra.mxu0 %v1919
        %v2515 = vpop.f32.mrf.mxu0
        %v2516 = vadd.f32 0.0, %v2515
        %v2517 = vpop.f32.mrf.mxu0
        %v2518 = vadd.f32 0.0, %v2517
        %2519 = vmatmul.bf16.gmra.mxu0 %v1920
        %v2520 = vpop.f32.mrf.mxu0
        %v2521 = vadd.f32 0.0, %v2520
        %v2522 = vpop.f32.mrf.mxu0
        %v2523 = vadd.f32 0.0, %v2522
        %2524 = vmatmul.bf16.gmra.mxu0 %v2431
        %v2525 = vpop.f32.mrf.mxu0
        %v2526 = vadd.f32 0.0, %v2525
        %v2527 = vpop.f32.mrf.mxu0
        %v2528 = vadd.f32 0.0, %v2527
        %2529 = vdwg.mxu0
        %v2530 = vld [vmem:[#allocation3] sm:$0xff]
        %v2531 = vld [vmem:[#allocation3 + $0x8] sm:$0xff]
        %v2532 = vld [vmem:[#allocation3 + $0x10] sm:$0xff]
        %v2533 = vld [vmem:[#allocation3 + $0x18] sm:$0xff]
        %v2534 = vld [vmem:[#allocation3 + $0x20] sm:$0xff]
        %v2535 = vld [vmem:[#allocation3 + $0x28] sm:$0xff]
        %v2536 = vld [vmem:[#allocation3 + $0x30] sm:$0xff]
        %v2537 = vld [vmem:[#allocation3 + $0x38] sm:$0xff]
        %v2538 = vld [vmem:[#allocation3 + $0x40] sm:$0xff]
        %v2539 = vld [vmem:[#allocation3 + $0x48] sm:$0xff]
        %v2540 = vld [vmem:[#allocation3 + $0x50] sm:$0xff]
        %v2541 = vld [vmem:[#allocation3 + $0x58] sm:$0xff]
        %v2542 = vld [vmem:[#allocation3 + $0x60] sm:$0xff]
        %v2543 = vld [vmem:[#allocation3 + $0x68] sm:$0xff]
        %v2544 = vld [vmem:[#allocation3 + $0x70] sm:$0xff]
        %v2545 = vld [vmem:[#allocation3 + $0x78] sm:$0xff]
        %v2546 = vadd.f32 %v2530, %v2491
        %v2547 = vadd.f32 %v2531, %v2493
        %v2548 = vadd.f32 %v2532, %v2496
        %v2549 = vadd.f32 %v2533, %v2498
        %v2550 = vadd.f32 %v2534, %v2501
        %v2551 = vadd.f32 %v2535, %v2503
        %v2552 = vadd.f32 %v2536, %v2506
        %v2553 = vadd.f32 %v2537, %v2508
        %v2554 = vadd.f32 %v2538, %v2511
        %v2555 = vadd.f32 %v2539, %v2513
        %v2556 = vadd.f32 %v2540, %v2516
        %v2557 = vadd.f32 %v2541, %v2518
        %v2558 = vadd.f32 %v2542, %v2521
        %v2559 = vadd.f32 %v2543, %v2523
        %v2560 = vadd.f32 %v2544, %v2526
        %v2561 = vadd.f32 %v2545, %v2528
        %2562 = vst [vmem:[#allocation3] sm:$0xff] %v2546
        %2563 = vst [vmem:[#allocation3 + $0x8] sm:$0xff] %v2547
        %2564 = vst [vmem:[#allocation3 + $0x10] sm:$0xff] %v2548
        %2565 = vst [vmem:[#allocation3 + $0x18] sm:$0xff] %v2549
        %2566 = vst [vmem:[#allocation3 + $0x20] sm:$0xff] %v2550
        %2567 = vst [vmem:[#allocation3 + $0x28] sm:$0xff] %v2551
        %2568 = vst [vmem:[#allocation3 + $0x30] sm:$0xff] %v2552
        %2569 = vst [vmem:[#allocation3 + $0x38] sm:$0xff] %v2553
        %2570 = vst [vmem:[#allocation3 + $0x40] sm:$0xff] %v2554
        %2571 = vst [vmem:[#allocation3 + $0x48] sm:$0xff] %v2555
        %2572 = vst [vmem:[#allocation3 + $0x50] sm:$0xff] %v2556
        %2573 = vst [vmem:[#allocation3 + $0x58] sm:$0xff] %v2557
        %2574 = vst [vmem:[#allocation3 + $0x60] sm:$0xff] %v2558
        %2575 = vst [vmem:[#allocation3 + $0x68] sm:$0xff] %v2559
        %2576 = vst [vmem:[#allocation3 + $0x70] sm:$0xff] %v2560
        %2577 = vst [vmem:[#allocation3 + $0x78] sm:$0xff] %v2561
        %s2578 = scalar_lea.vmem %s4, 384
        %v2579 = vld [vmem:[%s2578] sm:$0xf]
        %v2580 = vld [vmem:[%s2578 + $0x4] sm:$0xf]
        %v2581 = vld [vmem:[%s2578 + $0x8] sm:$0xf]
        %v2582 = vld [vmem:[%s2578 + $0xc] sm:$0xf]
        %v2583 = vld [vmem:[%s2578 + $0x10] sm:$0xf]
        %v2584 = vld [vmem:[%s2578 + $0x14] sm:$0xf]
        %v2585 = vld [vmem:[%s2578 + $0x18] sm:$0xf]
        %v2586 = vld [vmem:[%s2578 + $0x1c] sm:$0xf]
        %v2587 = vld [vmem:[%s2578 + $0x20] sm:$0xf]
        %v2588 = vld [vmem:[%s2578 + $0x24] sm:$0xf]
        %v2589 = vld [vmem:[%s2578 + $0x28] sm:$0xf]
        %v2590 = vld [vmem:[%s2578 + $0x2c] sm:$0xf]
        %v2591 = vld [vmem:[%s2578 + $0x30] sm:$0xf]
        %v2592 = vld [vmem:[%s2578 + $0x34] sm:$0xf]
        %v2593 = vld [vmem:[%s2578 + $0x38] sm:$0xf]
        %v2594 = vld [vmem:[%s2578 + $0x3c] sm:$0xf]
        %v2597 = vunpack.c.l.b16 %v1435
        %v2598 = vunpack.c.l.b16 %v1436
        %v2599 = vpack.c.b16 %v2598, %v2597
        %v2617 = vunpack.c.l.b16 %v2579
        %v2618 = vunpack.c.l.b16 %v2580
        %v2619 = vunpack.c.l.b16 %v2581
        %v2620 = vunpack.c.l.b16 %v2582
        %v2621 = vunpack.c.l.b16 %v2583
        %v2622 = vunpack.c.l.b16 %v2584
        %v2623 = vunpack.c.l.b16 %v2585
        %v2624 = vunpack.c.l.b16 %v2586
        %v2625 = vunpack.c.l.b16 %v2587
        %v2626 = vunpack.c.l.b16 %v2588
        %v2627 = vunpack.c.l.b16 %v2589
        %v2628 = vunpack.c.l.b16 %v2590
        %v2629 = vunpack.c.l.b16 %v2591
        %v2630 = vunpack.c.l.b16 %v2592
        %v2631 = vunpack.c.l.b16 %v2593
        %v2632 = vunpack.c.l.b16 %v2594
        %v2633 = vpack.c.b16 %v2618, %v2617
        %v2634 = vpack.c.b16 %v2620, %v2619
        %v2635 = vpack.c.b16 %v2622, %v2621
        %v2636 = vpack.c.b16 %v2624, %v2623
        %v2637 = vpack.c.b16 %v2626, %v2625
        %v2638 = vpack.c.b16 %v2628, %v2627
        %v2639 = vpack.c.b16 %v2630, %v2629
        %v2640 = vpack.c.b16 %v2632, %v2631
        %2649 = vmatpush.bf16.msra.mxu0 %v2640
        %2650 = vmatpush.bf16.msra.mxu0 %v2639
        %2651 = vmatpush.bf16.msra.mxu0 %v2638
        %2652 = vmatpush.bf16.msra.mxu0 %v2637
        %2653 = vmatpush.bf16.msra.mxu0 %v2636
        %2654 = vmatpush.bf16.msra.mxu0 %v2635
        %2655 = vmatpush.bf16.msra.mxu0 %v2634
        %2656 = vmatpush.bf16.msra.mxu0 %v2633
        %2657 = vmatmul.bf16.gmra.mxu0 %v1527
        %v2658 = vpop.f32.mrf.mxu0
        %v2659 = vadd.f32 0.0, %v2658
        %v2660 = vpop.f32.mrf.mxu0
        %v2661 = vadd.f32 0.0, %v2660
        %2662 = vmatmul.bf16.gmra.mxu0 %v1528
        %v2663 = vpop.f32.mrf.mxu0
        %v2664 = vadd.f32 0.0, %v2663
        %v2665 = vpop.f32.mrf.mxu0
        %v2666 = vadd.f32 0.0, %v2665
        %2667 = vmatmul.bf16.gmra.mxu0 %v1529
        %v2668 = vpop.f32.mrf.mxu0
        %v2669 = vadd.f32 0.0, %v2668
        %v2670 = vpop.f32.mrf.mxu0
        %v2671 = vadd.f32 0.0, %v2670
        %2672 = vmatmul.bf16.gmra.mxu0 %v1530
        %v2673 = vpop.f32.mrf.mxu0
        %v2674 = vadd.f32 0.0, %v2673
        %v2675 = vpop.f32.mrf.mxu0
        %v2676 = vadd.f32 0.0, %v2675
        %2677 = vmatmul.bf16.gmra.mxu0 %v1531
        %v2678 = vpop.f32.mrf.mxu0
        %v2679 = vadd.f32 0.0, %v2678
        %v2680 = vpop.f32.mrf.mxu0
        %v2681 = vadd.f32 0.0, %v2680
        %2682 = vmatmul.bf16.gmra.mxu0 %v1532
        %v2683 = vpop.f32.mrf.mxu0
        %v2684 = vadd.f32 0.0, %v2683
        %v2685 = vpop.f32.mrf.mxu0
        %v2686 = vadd.f32 0.0, %v2685
        %2687 = vmatmul.bf16.gmra.mxu0 %v2095
        %v2688 = vpop.f32.mrf.mxu0
        %v2689 = vadd.f32 0.0, %v2688
        %v2690 = vpop.f32.mrf.mxu0
        %v2691 = vadd.f32 0.0, %v2690
        %2692 = vmatmul.bf16.gmra.mxu0 %v2599
        %v2693 = vpop.f32.mrf.mxu0
        %v2694 = vadd.f32 0.0, %v2693
        %v2695 = vpop.f32.mrf.mxu0
        %v2696 = vadd.f32 0.0, %v2695
        %2697 = vdwg.mxu0
        %v2698 = vld [vmem:[#allocation3] sm:$0xff]
        %v2699 = vld [vmem:[#allocation3 + $0x8] sm:$0xff]
        %v2700 = vld [vmem:[#allocation3 + $0x10] sm:$0xff]
        %v2701 = vld [vmem:[#allocation3 + $0x18] sm:$0xff]
        %v2702 = vld [vmem:[#allocation3 + $0x20] sm:$0xff]
        %v2703 = vld [vmem:[#allocation3 + $0x28] sm:$0xff]
        %v2704 = vld [vmem:[#allocation3 + $0x30] sm:$0xff]
        %v2705 = vld [vmem:[#allocation3 + $0x38] sm:$0xff]
        %v2706 = vld [vmem:[#allocation3 + $0x40] sm:$0xff]
        %v2707 = vld [vmem:[#allocation3 + $0x48] sm:$0xff]
        %v2708 = vld [vmem:[#allocation3 + $0x50] sm:$0xff]
        %v2709 = vld [vmem:[#allocation3 + $0x58] sm:$0xff]
        %v2710 = vld [vmem:[#allocation3 + $0x60] sm:$0xff]
        %v2711 = vld [vmem:[#allocation3 + $0x68] sm:$0xff]
        %v2712 = vld [vmem:[#allocation3 + $0x70] sm:$0xff]
        %v2713 = vld [vmem:[#allocation3 + $0x78] sm:$0xff]
        %v2714 = vadd.f32 %v2698, %v2659
        %v2715 = vadd.f32 %v2699, %v2661
        %v2716 = vadd.f32 %v2700, %v2664
        %v2717 = vadd.f32 %v2701, %v2666
        %v2718 = vadd.f32 %v2702, %v2669
        %v2719 = vadd.f32 %v2703, %v2671
        %v2720 = vadd.f32 %v2704, %v2674
        %v2721 = vadd.f32 %v2705, %v2676
        %v2722 = vadd.f32 %v2706, %v2679
        %v2723 = vadd.f32 %v2707, %v2681
        %v2724 = vadd.f32 %v2708, %v2684
        %v2725 = vadd.f32 %v2709, %v2686
        %v2726 = vadd.f32 %v2710, %v2689
        %v2727 = vadd.f32 %v2711, %v2691
        %v2728 = vadd.f32 %v2712, %v2694
        %v2729 = vadd.f32 %v2713, %v2696
        %2730 = vst [vmem:[#allocation3] sm:$0xff] %v2714
        %2731 = vst [vmem:[#allocation3 + $0x8] sm:$0xff] %v2715
        %2732 = vst [vmem:[#allocation3 + $0x10] sm:$0xff] %v2716
        %2733 = vst [vmem:[#allocation3 + $0x18] sm:$0xff] %v2717
        %2734 = vst [vmem:[#allocation3 + $0x20] sm:$0xff] %v2718
        %2735 = vst [vmem:[#allocation3 + $0x28] sm:$0xff] %v2719
        %2736 = vst [vmem:[#allocation3 + $0x30] sm:$0xff] %v2720
        %2737 = vst [vmem:[#allocation3 + $0x38] sm:$0xff] %v2721
        %2738 = vst [vmem:[#allocation3 + $0x40] sm:$0xff] %v2722
        %2739 = vst [vmem:[#allocation3 + $0x48] sm:$0xff] %v2723
        %2740 = vst [vmem:[#allocation3 + $0x50] sm:$0xff] %v2724
        %2741 = vst [vmem:[#allocation3 + $0x58] sm:$0xff] %v2725
        %2742 = vst [vmem:[#allocation3 + $0x60] sm:$0xff] %v2726
        %2743 = vst [vmem:[#allocation3 + $0x68] sm:$0xff] %v2727
        %2744 = vst [vmem:[#allocation3 + $0x70] sm:$0xff] %v2728
        %2745 = vst [vmem:[#allocation3 + $0x78] sm:$0xff] %v2729
        %s2746 = scalar_lea.vmem %s4, 448
        %v2747 = vld [vmem:[%s2746] sm:$0xf]
        %v2748 = vld [vmem:[%s2746 + $0x4] sm:$0xf]
        %v2749 = vld [vmem:[%s2746 + $0x8] sm:$0xf]
        %v2750 = vld [vmem:[%s2746 + $0xc] sm:$0xf]
        %v2751 = vld [vmem:[%s2746 + $0x10] sm:$0xf]
        %v2752 = vld [vmem:[%s2746 + $0x14] sm:$0xf]
        %v2753 = vld [vmem:[%s2746 + $0x18] sm:$0xf]
        %v2754 = vld [vmem:[%s2746 + $0x1c] sm:$0xf]
        %v2755 = vld [vmem:[%s2746 + $0x20] sm:$0xf]
        %v2756 = vld [vmem:[%s2746 + $0x24] sm:$0xf]
        %v2757 = vld [vmem:[%s2746 + $0x28] sm:$0xf]
        %v2758 = vld [vmem:[%s2746 + $0x2c] sm:$0xf]
        %v2759 = vld [vmem:[%s2746 + $0x30] sm:$0xf]
        %v2760 = vld [vmem:[%s2746 + $0x34] sm:$0xf]
        %v2761 = vld [vmem:[%s2746 + $0x38] sm:$0xf]
        %v2762 = vld [vmem:[%s2746 + $0x3c] sm:$0xf]
        %v2765 = vunpack.c.l.b16 %v1455
        %v2766 = vunpack.c.l.b16 %v1456
        %v2767 = vpack.c.b16 %v2766, %v2765
        %v2785 = vunpack.c.l.b16 %v2747
        %v2786 = vunpack.c.l.b16 %v2748
        %v2787 = vunpack.c.l.b16 %v2749
        %v2788 = vunpack.c.l.b16 %v2750
        %v2789 = vunpack.c.l.b16 %v2751
        %v2790 = vunpack.c.l.b16 %v2752
        %v2791 = vunpack.c.l.b16 %v2753
        %v2792 = vunpack.c.l.b16 %v2754
        %v2793 = vunpack.c.l.b16 %v2755
        %v2794 = vunpack.c.l.b16 %v2756
        %v2795 = vunpack.c.l.b16 %v2757
        %v2796 = vunpack.c.l.b16 %v2758
        %v2797 = vunpack.c.l.b16 %v2759
        %v2798 = vunpack.c.l.b16 %v2760
        %v2799 = vunpack.c.l.b16 %v2761
        %v2800 = vunpack.c.l.b16 %v2762
        %v2801 = vpack.c.b16 %v2786, %v2785
        %v2802 = vpack.c.b16 %v2788, %v2787
        %v2803 = vpack.c.b16 %v2790, %v2789
        %v2804 = vpack.c.b16 %v2792, %v2791
        %v2805 = vpack.c.b16 %v2794, %v2793
        %v2806 = vpack.c.b16 %v2796, %v2795
        %v2807 = vpack.c.b16 %v2798, %v2797
        %v2808 = vpack.c.b16 %v2800, %v2799
        %2817 = vmatpush.bf16.msra.mxu0 %v2808
        %2818 = vmatpush.bf16.msra.mxu0 %v2807
        %2819 = vmatpush.bf16.msra.mxu0 %v2806
        %2820 = vmatpush.bf16.msra.mxu0 %v2805
        %2821 = vmatpush.bf16.msra.mxu0 %v2804
        %2822 = vmatpush.bf16.msra.mxu0 %v2803
        %2823 = vmatpush.bf16.msra.mxu0 %v2802
        %2824 = vmatpush.bf16.msra.mxu0 %v2801
        %2825 = vmatmul.bf16.gmra.mxu0 %v1705
        %v2826 = vpop.f32.mrf.mxu0
        %v2827 = vadd.f32 0.0, %v2826
        %v2828 = vpop.f32.mrf.mxu0
        %v2829 = vadd.f32 0.0, %v2828
        %2830 = vmatmul.bf16.gmra.mxu0 %v1706
        %v2831 = vpop.f32.mrf.mxu0
        %v2832 = vadd.f32 0.0, %v2831
        %v2833 = vpop.f32.mrf.mxu0
        %v2834 = vadd.f32 0.0, %v2833
        %2835 = vmatmul.bf16.gmra.mxu0 %v1707
        %v2836 = vpop.f32.mrf.mxu0
        %v2837 = vadd.f32 0.0, %v2836
        %v2838 = vpop.f32.mrf.mxu0
        %v2839 = vadd.f32 0.0, %v2838
        %2840 = vmatmul.bf16.gmra.mxu0 %v1708
        %v2841 = vpop.f32.mrf.mxu0
        %v2842 = vadd.f32 0.0, %v2841
        %v2843 = vpop.f32.mrf.mxu0
        %v2844 = vadd.f32 0.0, %v2843
        %2845 = vmatmul.bf16.gmra.mxu0 %v1709
        %v2846 = vpop.f32.mrf.mxu0
        %v2847 = vadd.f32 0.0, %v2846
        %v2848 = vpop.f32.mrf.mxu0
        %v2849 = vadd.f32 0.0, %v2848
        %2850 = vmatmul.bf16.gmra.mxu0 %v1710
        %v2851 = vpop.f32.mrf.mxu0
        %v2852 = vadd.f32 0.0, %v2851
        %v2853 = vpop.f32.mrf.mxu0
        %v2854 = vadd.f32 0.0, %v2853
        %2855 = vmatmul.bf16.gmra.mxu0 %v2263
        %v2856 = vpop.f32.mrf.mxu0
        %v2857 = vadd.f32 0.0, %v2856
        %v2858 = vpop.f32.mrf.mxu0
        %v2859 = vadd.f32 0.0, %v2858
        %2860 = vmatmul.bf16.gmra.mxu0 %v2767
        %v2861 = vpop.f32.mrf.mxu0
        %v2862 = vadd.f32 0.0, %v2861
        %v2863 = vpop.f32.mrf.mxu0
        %v2864 = vadd.f32 0.0, %v2863
        %2865 = vdwg.mxu0
        %v2866 = vld [vmem:[#allocation3] sm:$0xff]
        %v2867 = vld [vmem:[#allocation3 + $0x8] sm:$0xff]
        %v2868 = vld [vmem:[#allocation3 + $0x10] sm:$0xff]
        %v2869 = vld [vmem:[#allocation3 + $0x18] sm:$0xff]
        %v2870 = vld [vmem:[#allocation3 + $0x20] sm:$0xff]
        %v2871 = vld [vmem:[#allocation3 + $0x28] sm:$0xff]
        %v2872 = vld [vmem:[#allocation3 + $0x30] sm:$0xff]
        %v2873 = vld [vmem:[#allocation3 + $0x38] sm:$0xff]
        %v2874 = vld [vmem:[#allocation3 + $0x40] sm:$0xff]
        %v2875 = vld [vmem:[#allocation3 + $0x48] sm:$0xff]
        %v2876 = vld [vmem:[#allocation3 + $0x50] sm:$0xff]
        %v2877 = vld [vmem:[#allocation3 + $0x58] sm:$0xff]
        %v2878 = vld [vmem:[#allocation3 + $0x60] sm:$0xff]
        %v2879 = vld [vmem:[#allocation3 + $0x68] sm:$0xff]
        %v2880 = vld [vmem:[#allocation3 + $0x70] sm:$0xff]
        %v2881 = vld [vmem:[#allocation3 + $0x78] sm:$0xff]
        %v2882 = vadd.f32 %v2866, %v2827
        %v2883 = vadd.f32 %v2867, %v2829
        %v2884 = vadd.f32 %v2868, %v2832
        %v2885 = vadd.f32 %v2869, %v2834
        %v2886 = vadd.f32 %v2870, %v2837
        %v2887 = vadd.f32 %v2871, %v2839
        %v2888 = vadd.f32 %v2872, %v2842
        %v2889 = vadd.f32 %v2873, %v2844
        %v2890 = vadd.f32 %v2874, %v2847
        %v2891 = vadd.f32 %v2875, %v2849
        %v2892 = vadd.f32 %v2876, %v2852
        %v2893 = vadd.f32 %v2877, %v2854
        %v2894 = vadd.f32 %v2878, %v2857
        %v2895 = vadd.f32 %v2879, %v2859
        %v2896 = vadd.f32 %v2880, %v2862
        %v2897 = vadd.f32 %v2881, %v2864
        %2898 = vst [vmem:[#allocation3] sm:$0xff] %v2882
        %2899 = vst [vmem:[#allocation3 + $0x8] sm:$0xff] %v2883
        %2900 = vst [vmem:[#allocation3 + $0x10] sm:$0xff] %v2884
        %2901 = vst [vmem:[#allocation3 + $0x18] sm:$0xff] %v2885
        %2902 = vst [vmem:[#allocation3 + $0x20] sm:$0xff] %v2886
        %2903 = vst [vmem:[#allocation3 + $0x28] sm:$0xff] %v2887
        %2904 = vst [vmem:[#allocation3 + $0x30] sm:$0xff] %v2888
        %2905 = vst [vmem:[#allocation3 + $0x38] sm:$0xff] %v2889
        %2906 = vst [vmem:[#allocation3 + $0x40] sm:$0xff] %v2890
        %2907 = vst [vmem:[#allocation3 + $0x48] sm:$0xff] %v2891
        %2908 = vst [vmem:[#allocation3 + $0x50] sm:$0xff] %v2892
        %2909 = vst [vmem:[#allocation3 + $0x58] sm:$0xff] %v2893
        %2910 = vst [vmem:[#allocation3 + $0x60] sm:$0xff] %v2894
        %2911 = vst [vmem:[#allocation3 + $0x68] sm:$0xff] %v2895
        %2912 = vst [vmem:[#allocation3 + $0x70] sm:$0xff] %v2896
        %2913 = vst [vmem:[#allocation3 + $0x78] sm:$0xff] %v2897
        %s2914 = scalar_lea.vmem %s4, 512
        %v2915 = vld [vmem:[%s2914] sm:$0xf]
        %v2916 = vld [vmem:[%s2914 + $0x4] sm:$0xf]
        %v2917 = vld [vmem:[%s2914 + $0x8] sm:$0xf]
        %v2918 = vld [vmem:[%s2914 + $0xc] sm:$0xf]
        %v2919 = vld [vmem:[%s2914 + $0x10] sm:$0xf]
        %v2920 = vld [vmem:[%s2914 + $0x14] sm:$0xf]
        %v2921 = vld [vmem:[%s2914 + $0x18] sm:$0xf]
        %v2922 = vld [vmem:[%s2914 + $0x1c] sm:$0xf]
        %v2923 = vld [vmem:[%s2914 + $0x20] sm:$0xf]
        %v2924 = vld [vmem:[%s2914 + $0x24] sm:$0xf]
        %v2925 = vld [vmem:[%s2914 + $0x28] sm:$0xf]
        %v2926 = vld [vmem:[%s2914 + $0x2c] sm:$0xf]
        %v2927 = vld [vmem:[%s2914 + $0x30] sm:$0xf]
        %v2928 = vld [vmem:[%s2914 + $0x34] sm:$0xf]
        %v2929 = vld [vmem:[%s2914 + $0x38] sm:$0xf]
        %v2930 = vld [vmem:[%s2914 + $0x3c] sm:$0xf]
        %v2933 = vunpack.c.l.b16 %v1475
        %v2934 = vunpack.c.l.b16 %v1476
        %v2935 = vpack.c.b16 %v2934, %v2933
        %v2953 = vunpack.c.l.b16 %v2915
        %v2954 = vunpack.c.l.b16 %v2916
        %v2955 = vunpack.c.l.b16 %v2917
        %v2956 = vunpack.c.l.b16 %v2918
        %v2957 = vunpack.c.l.b16 %v2919
        %v2958 = vunpack.c.l.b16 %v2920
        %v2959 = vunpack.c.l.b16 %v2921
        %v2960 = vunpack.c.l.b16 %v2922
        %v2961 = vunpack.c.l.b16 %v2923
        %v2962 = vunpack.c.l.b16 %v2924
        %v2963 = vunpack.c.l.b16 %v2925
        %v2964 = vunpack.c.l.b16 %v2926
        %v2965 = vunpack.c.l.b16 %v2927
        %v2966 = vunpack.c.l.b16 %v2928
        %v2967 = vunpack.c.l.b16 %v2929
        %v2968 = vunpack.c.l.b16 %v2930
        %v2969 = vpack.c.b16 %v2954, %v2953
        %v2970 = vpack.c.b16 %v2956, %v2955
        %v2971 = vpack.c.b16 %v2958, %v2957
        %v2972 = vpack.c.b16 %v2960, %v2959
        %v2973 = vpack.c.b16 %v2962, %v2961
        %v2974 = vpack.c.b16 %v2964, %v2963
        %v2975 = vpack.c.b16 %v2966, %v2965
        %v2976 = vpack.c.b16 %v2968, %v2967
        %2985 = vmatpush.bf16.msra.mxu0 %v2976
        %2986 = vmatpush.bf16.msra.mxu0 %v2975
        %2987 = vmatpush.bf16.msra.mxu0 %v2974
        %2988 = vmatpush.bf16.msra.mxu0 %v2973
        %2989 = vmatpush.bf16.msra.mxu0 %v2972
        %2990 = vmatpush.bf16.msra.mxu0 %v2971
        %2991 = vmatpush.bf16.msra.mxu0 %v2970
        %2992 = vmatpush.bf16.msra.mxu0 %v2969
        %2993 = vmatmul.bf16.gmra.mxu0 %v1915
        %v2994 = vpop.f32.mrf.mxu0
        %v2995 = vadd.f32 0.0, %v2994
        %v2996 = vpop.f32.mrf.mxu0
        %v2997 = vadd.f32 0.0, %v2996
        %2998 = vmatmul.bf16.gmra.mxu0 %v1916
        %v2999 = vpop.f32.mrf.mxu0
        %v3000 = vadd.f32 0.0, %v2999
        %v3001 = vpop.f32.mrf.mxu0
        %v3002 = vadd.f32 0.0, %v3001
        %3003 = vmatmul.bf16.gmra.mxu0 %v1917
        %v3004 = vpop.f32.mrf.mxu0
        %v3005 = vadd.f32 0.0, %v3004
        %v3006 = vpop.f32.mrf.mxu0
        %v3007 = vadd.f32 0.0, %v3006
        %3008 = vmatmul.bf16.gmra.mxu0 %v1918
        %v3009 = vpop.f32.mrf.mxu0
        %v3010 = vadd.f32 0.0, %v3009
        %v3011 = vpop.f32.mrf.mxu0
        %v3012 = vadd.f32 0.0, %v3011
        %3013 = vmatmul.bf16.gmra.mxu0 %v1919
        %v3014 = vpop.f32.mrf.mxu0
        %v3015 = vadd.f32 0.0, %v3014
        %v3016 = vpop.f32.mrf.mxu0
        %v3017 = vadd.f32 0.0, %v3016
        %3018 = vmatmul.bf16.gmra.mxu0 %v1920
        %v3019 = vpop.f32.mrf.mxu0
        %v3020 = vadd.f32 0.0, %v3019
        %v3021 = vpop.f32.mrf.mxu0
        %v3022 = vadd.f32 0.0, %v3021
        %3023 = vmatmul.bf16.gmra.mxu0 %v2431
        %v3024 = vpop.f32.mrf.mxu0
        %v3025 = vadd.f32 0.0, %v3024
        %v3026 = vpop.f32.mrf.mxu0
        %v3027 = vadd.f32 0.0, %v3026
        %3028 = vmatmul.bf16.gmra.mxu0 %v2935
        %v3029 = vpop.f32.mrf.mxu0
        %v3030 = vadd.f32 0.0, %v3029
        %v3031 = vpop.f32.mrf.mxu0
        %v3032 = vadd.f32 0.0, %v3031
        %3033 = vdwg.mxu0
        %v3034 = vld [vmem:[#allocation3] sm:$0xff]
        %v3035 = vld [vmem:[#allocation3 + $0x8] sm:$0xff]
        %v3036 = vld [vmem:[#allocation3 + $0x10] sm:$0xff]
        %v3037 = vld [vmem:[#allocation3 + $0x18] sm:$0xff]
        %v3038 = vld [vmem:[#allocation3 + $0x20] sm:$0xff]
        %v3039 = vld [vmem:[#allocation3 + $0x28] sm:$0xff]
        %v3040 = vld [vmem:[#allocation3 + $0x30] sm:$0xff]
        %v3041 = vld [vmem:[#allocation3 + $0x38] sm:$0xff]
        %v3042 = vld [vmem:[#allocation3 + $0x40] sm:$0xff]
        %v3043 = vld [vmem:[#allocation3 + $0x48] sm:$0xff]
        %v3044 = vld [vmem:[#allocation3 + $0x50] sm:$0xff]
        %v3045 = vld [vmem:[#allocation3 + $0x58] sm:$0xff]
        %v3046 = vld [vmem:[#allocation3 + $0x60] sm:$0xff]
        %v3047 = vld [vmem:[#allocation3 + $0x68] sm:$0xff]
        %v3048 = vld [vmem:[#allocation3 + $0x70] sm:$0xff]
        %v3049 = vld [vmem:[#allocation3 + $0x78] sm:$0xff]
        %v3050 = vadd.f32 %v3034, %v2995
        %v3051 = vadd.f32 %v3035, %v2997
        %v3052 = vadd.f32 %v3036, %v3000
        %v3053 = vadd.f32 %v3037, %v3002
        %v3054 = vadd.f32 %v3038, %v3005
        %v3055 = vadd.f32 %v3039, %v3007
        %v3056 = vadd.f32 %v3040, %v3010
        %v3057 = vadd.f32 %v3041, %v3012
        %v3058 = vadd.f32 %v3042, %v3015
        %v3059 = vadd.f32 %v3043, %v3017
        %v3060 = vadd.f32 %v3044, %v3020
        %v3061 = vadd.f32 %v3045, %v3022
        %v3062 = vadd.f32 %v3046, %v3025
        %v3063 = vadd.f32 %v3047, %v3027
        %v3064 = vadd.f32 %v3048, %v3030
        %v3065 = vadd.f32 %v3049, %v3032
        %3066 = vst [vmem:[#allocation3] sm:$0xff] %v3050
        %3067 = vst [vmem:[#allocation3 + $0x8] sm:$0xff] %v3051
        %3068 = vst [vmem:[#allocation3 + $0x10] sm:$0xff] %v3052
        %3069 = vst [vmem:[#allocation3 + $0x18] sm:$0xff] %v3053
        %3070 = vst [vmem:[#allocation3 + $0x20] sm:$0xff] %v3054
        %3071 = vst [vmem:[#allocation3 + $0x28] sm:$0xff] %v3055
        %3072 = vst [vmem:[#allocation3 + $0x30] sm:$0xff] %v3056
        %3073 = vst [vmem:[#allocation3 + $0x38] sm:$0xff] %v3057
        %3074 = vst [vmem:[#allocation3 + $0x40] sm:$0xff] %v3058
        %3075 = vst [vmem:[#allocation3 + $0x48] sm:$0xff] %v3059
        %3076 = vst [vmem:[#allocation3 + $0x50] sm:$0xff] %v3060
        %3077 = vst [vmem:[#allocation3 + $0x58] sm:$0xff] %v3061
        %3078 = vst [vmem:[#allocation3 + $0x60] sm:$0xff] %v3062
        %3079 = vst [vmem:[#allocation3 + $0x68] sm:$0xff] %v3063
        %3080 = vst [vmem:[#allocation3 + $0x70] sm:$0xff] %v3064
        %3081 = vst [vmem:[#allocation3 + $0x78] sm:$0xff] %v3065
        %v3082 = vld [vmem:[#allocation3] sm:$0xff]
        %v3083 = vld [vmem:[#allocation3 + $0x8] sm:$0xff]
        %v3084 = vld [vmem:[#allocation3 + $0x10] sm:$0xff]
        %v3085 = vld [vmem:[#allocation3 + $0x18] sm:$0xff]
        %v3086 = vld [vmem:[#allocation3 + $0x20] sm:$0xff]
        %v3087 = vld [vmem:[#allocation3 + $0x28] sm:$0xff]
        %v3088 = vld [vmem:[#allocation3 + $0x30] sm:$0xff]
        %v3089 = vld [vmem:[#allocation3 + $0x38] sm:$0xff]
        %v3090 = vld [vmem:[#allocation3 + $0x40] sm:$0xff]
        %v3091 = vld [vmem:[#allocation3 + $0x48] sm:$0xff]
        %v3092 = vld [vmem:[#allocation3 + $0x50] sm:$0xff]
        %v3093 = vld [vmem:[#allocation3 + $0x58] sm:$0xff]
        %v3094 = vld [vmem:[#allocation3 + $0x60] sm:$0xff]
        %v3095 = vld [vmem:[#allocation3 + $0x68] sm:$0xff]
        %v3096 = vld [vmem:[#allocation3 + $0x70] sm:$0xff]
        %v3097 = vld [vmem:[#allocation3 + $0x78] sm:$0xff]
        %v3098 = vld [vmem:[%s8] sm:$0x1]
        %v3100 = vperm.slane %v3098, 0
        %v3102 = vmul.f32 %v3082, %v3100
        %v3103 = vmul.f32 %v3083, %v3100
        %v3104 = vmul.f32 %v3084, %v3100
        %v3105 = vmul.f32 %v3085, %v3100
        %v3106 = vmul.f32 %v3086, %v3100
        %v3107 = vmul.f32 %v3087, %v3100
        %v3108 = vmul.f32 %v3088, %v3100
        %v3109 = vmul.f32 %v3089, %v3100
        %v3110 = vmul.f32 %v3090, %v3100
        %v3111 = vmul.f32 %v3091, %v3100
        %v3112 = vmul.f32 %v3092, %v3100
        %v3113 = vmul.f32 %v3093, %v3100
        %v3114 = vmul.f32 %v3094, %v3100
        %v3115 = vmul.f32 %v3095, %v3100
        %v3116 = vmul.f32 %v3096, %v3100
        %v3117 = vmul.f32 %v3097, %v3100
        %v3118 = vld [vmem:[%s9] sm:$0x1]
        %v3120 = vperm.slane %v3118, 0
        %v3122 = vadd.f32 %v3102, %v3120
        %v3123 = vadd.f32 %v3103, %v3120
        %v3124 = vadd.f32 %v3104, %v3120
        %v3125 = vadd.f32 %v3105, %v3120
        %v3126 = vadd.f32 %v3106, %v3120
        %v3127 = vadd.f32 %v3107, %v3120
        %v3128 = vadd.f32 %v3108, %v3120
        %v3129 = vadd.f32 %v3109, %v3120
        %v3130 = vadd.f32 %v3110, %v3120
        %v3131 = vadd.f32 %v3111, %v3120
        %v3132 = vadd.f32 %v3112, %v3120
        %v3133 = vadd.f32 %v3113, %v3120
        %v3134 = vadd.f32 %v3114, %v3120
        %v3135 = vadd.f32 %v3115, %v3120
        %v3136 = vadd.f32 %v3116, %v3120
        %v3137 = vadd.f32 %v3117, %v3120
        %v3138 = vmax.f32 %v3122, 0.0
        %v3139 = vmax.f32 %v3123, 0.0
        %v3140 = vmax.f32 %v3124, 0.0
        %v3141 = vmax.f32 %v3125, 0.0
        %v3142 = vmax.f32 %v3126, 0.0
        %v3143 = vmax.f32 %v3127, 0.0
        %v3144 = vmax.f32 %v3128, 0.0
        %v3145 = vmax.f32 %v3129, 0.0
        %v3146 = vmax.f32 %v3130, 0.0
        %v3147 = vmax.f32 %v3131, 0.0
        %v3148 = vmax.f32 %v3132, 0.0
        %v3149 = vmax.f32 %v3133, 0.0
        %v3150 = vmax.f32 %v3134, 0.0
        %v3151 = vmax.f32 %v3135, 0.0
        %v3152 = vmax.f32 %v3136, 0.0
        %v3153 = vmax.f32 %v3137, 0.0
        %v3154 = vpack.c.bf16 %v3139, %v3138
        %v3155 = vpack.c.bf16 %v3141, %v3140
        %v3156 = vpack.c.bf16 %v3143, %v3142
        %v3157 = vpack.c.bf16 %v3145, %v3144
        %v3158 = vpack.c.bf16 %v3147, %v3146
        %v3159 = vpack.c.bf16 %v3149, %v3148
        %v3160 = vpack.c.bf16 %v3151, %v3150
        %v3161 = vpack.c.bf16 %v3153, %v3152
        %v3162 = vld [vmem:[%s5] sm:$0xf]
        %v3163 = vld [vmem:[%s5 + $0x4] sm:$0xf]
        %v3164 = vld [vmem:[%s5 + $0x8] sm:$0xf]
        %v3165 = vld [vmem:[%s5 + $0xc] sm:$0xf]
        %v3166 = vld [vmem:[%s5 + $0x10] sm:$0xf]
        %v3167 = vld [vmem:[%s5 + $0x14] sm:$0xf]
        %v3168 = vld [vmem:[%s5 + $0x18] sm:$0xf]
        %v3169 = vld [vmem:[%s5 + $0x1c] sm:$0xf]
        %v3170 = vld [vmem:[%s5 + $0x20] sm:$0xf]
        %v3171 = vld [vmem:[%s5 + $0x24] sm:$0xf]
        %v3172 = vld [vmem:[%s5 + $0x28] sm:$0xf]
        %v3173 = vld [vmem:[%s5 + $0x2c] sm:$0xf]
        %v3174 = vld [vmem:[%s5 + $0x30] sm:$0xf]
        %v3175 = vld [vmem:[%s5 + $0x34] sm:$0xf]
        %v3176 = vld [vmem:[%s5 + $0x38] sm:$0xf]
        %v3177 = vld [vmem:[%s5 + $0x3c] sm:$0xf]
        %v3194 = vunpack.c.l.b16 %v3162
        %v3195 = vunpack.c.l.b16 %v3163
        %v3196 = vunpack.c.l.b16 %v3164
        %v3197 = vunpack.c.l.b16 %v3165
        %v3198 = vunpack.c.l.b16 %v3166
        %v3199 = vunpack.c.l.b16 %v3167
        %v3200 = vunpack.c.l.b16 %v3168
        %v3201 = vunpack.c.l.b16 %v3169
        %v3202 = vunpack.c.l.b16 %v3170
        %v3203 = vunpack.c.l.b16 %v3171
        %v3204 = vunpack.c.l.b16 %v3172
        %v3205 = vunpack.c.l.b16 %v3173
        %v3206 = vunpack.c.l.b16 %v3174
        %v3207 = vunpack.c.l.b16 %v3175
        %v3208 = vunpack.c.l.b16 %v3176
        %v3209 = vunpack.c.l.b16 %v3177
        %v3210 = vpack.c.b16 %v3195, %v3194
        %v3211 = vpack.c.b16 %v3197, %v3196
        %v3212 = vpack.c.b16 %v3199, %v3198
        %v3213 = vpack.c.b16 %v3201, %v3200
        %v3214 = vpack.c.b16 %v3203, %v3202
        %v3215 = vpack.c.b16 %v3205, %v3204
        %v3216 = vpack.c.b16 %v3207, %v3206
        %v3217 = vpack.c.b16 %v3209, %v3208
        %3226 = vmatpush.bf16.msra.mxu0 %v3217
        %3227 = vmatpush.bf16.msra.mxu0 %v3216
        %3228 = vmatpush.bf16.msra.mxu0 %v3215
        %3229 = vmatpush.bf16.msra.mxu0 %v3214
        %3230 = vmatpush.bf16.msra.mxu0 %v3213
        %3231 = vmatpush.bf16.msra.mxu0 %v3212
        %3232 = vmatpush.bf16.msra.mxu0 %v3211
        %3233 = vmatpush.bf16.msra.mxu0 %v3210
        %3234 = vmatmul.bf16.gmra.mxu0 %v3154
        %v3235 = vpop.f32.mrf.mxu0
        %v3236 = vadd.f32 0.0, %v3235
        %v3237 = vpop.f32.mrf.mxu0
        %v3238 = vadd.f32 0.0, %v3237
        %3239 = vmatmul.bf16.gmra.mxu0 %v3155
        %v3240 = vpop.f32.mrf.mxu0
        %v3241 = vadd.f32 0.0, %v3240
        %v3242 = vpop.f32.mrf.mxu0
        %v3243 = vadd.f32 0.0, %v3242
        %3244 = vmatmul.bf16.gmra.mxu0 %v3156
        %v3245 = vpop.f32.mrf.mxu0
        %v3246 = vadd.f32 0.0, %v3245
        %v3247 = vpop.f32.mrf.mxu0
        %v3248 = vadd.f32 0.0, %v3247
        %3249 = vmatmul.bf16.gmra.mxu0 %v3157
        %v3250 = vpop.f32.mrf.mxu0
        %v3251 = vadd.f32 0.0, %v3250
        %v3252 = vpop.f32.mrf.mxu0
        %v3253 = vadd.f32 0.0, %v3252
        %3254 = vmatmul.bf16.gmra.mxu0 %v3158
        %v3255 = vpop.f32.mrf.mxu0
        %v3256 = vadd.f32 0.0, %v3255
        %v3257 = vpop.f32.mrf.mxu0
        %v3258 = vadd.f32 0.0, %v3257
        %3259 = vmatmul.bf16.gmra.mxu0 %v3159
        %v3260 = vpop.f32.mrf.mxu0
        %v3261 = vadd.f32 0.0, %v3260
        %v3262 = vpop.f32.mrf.mxu0
        %v3263 = vadd.f32 0.0, %v3262
        %3264 = vmatmul.bf16.gmra.mxu0 %v3160
        %v3265 = vpop.f32.mrf.mxu0
        %v3266 = vadd.f32 0.0, %v3265
        %v3267 = vpop.f32.mrf.mxu0
        %v3268 = vadd.f32 0.0, %v3267
        %3269 = vmatmul.bf16.gmra.mxu0 %v3161
        %v3270 = vpop.f32.mrf.mxu0
        %v3271 = vadd.f32 0.0, %v3270
        %v3272 = vpop.f32.mrf.mxu0
        %v3273 = vadd.f32 0.0, %v3272
        %3274 = vdwg.mxu0
        %v3275 = vld [vmem:[%s10] sm:$0x1]
        %v3277 = vperm.slane %v3275, 0
        %v3279 = vmul.f32 %v3236, %v3277
        %v3280 = vmul.f32 %v3238, %v3277
        %v3281 = vmul.f32 %v3241, %v3277
        %v3282 = vmul.f32 %v3243, %v3277
        %v3283 = vmul.f32 %v3246, %v3277
        %v3284 = vmul.f32 %v3248, %v3277
        %v3285 = vmul.f32 %v3251, %v3277
        %v3286 = vmul.f32 %v3253, %v3277
        %v3287 = vmul.f32 %v3256, %v3277
        %v3288 = vmul.f32 %v3258, %v3277
        %v3289 = vmul.f32 %v3261, %v3277
        %v3290 = vmul.f32 %v3263, %v3277
        %v3291 = vmul.f32 %v3266, %v3277
        %v3292 = vmul.f32 %v3268, %v3277
        %v3293 = vmul.f32 %v3271, %v3277
        %v3294 = vmul.f32 %v3273, %v3277
        %v3295 = vld [vmem:[%s11] sm:$0x1]
        %v3297 = vperm.slane %v3295, 0
        %v3299 = vadd.f32 %v3279, %v3297
        %v3300 = vadd.f32 %v3280, %v3297
        %v3301 = vadd.f32 %v3281, %v3297
        %v3302 = vadd.f32 %v3282, %v3297
        %v3303 = vadd.f32 %v3283, %v3297
        %v3304 = vadd.f32 %v3284, %v3297
        %v3305 = vadd.f32 %v3285, %v3297
        %v3306 = vadd.f32 %v3286, %v3297
        %v3307 = vadd.f32 %v3287, %v3297
        %v3308 = vadd.f32 %v3288, %v3297
        %v3309 = vadd.f32 %v3289, %v3297
        %v3310 = vadd.f32 %v3290, %v3297
        %v3311 = vadd.f32 %v3291, %v3297
        %v3312 = vadd.f32 %v3292, %v3297
        %v3313 = vadd.f32 %v3293, %v3297
        %v3314 = vadd.f32 %v3294, %v3297
        %v3315 = vld [vmem:[%s532] sm:$0xf]
        %v3316 = vld [vmem:[%s532 + $0x4] sm:$0xf]
        %v3317 = vld [vmem:[%s532 + $0x8] sm:$0xf]
        %v3318 = vld [vmem:[%s532 + $0xc] sm:$0xf]
        %v3319 = vld [vmem:[%s532 + $0x10] sm:$0xf]
        %v3320 = vld [vmem:[%s532 + $0x14] sm:$0xf]
        %v3321 = vld [vmem:[%s532 + $0x18] sm:$0xf]
        %v3322 = vld [vmem:[%s532 + $0x1c] sm:$0xf]
        %v3323 = vld [vmem:[%s532 + $0x20] sm:$0xf]
        %v3324 = vld [vmem:[%s532 + $0x24] sm:$0xf]
        %v3325 = vld [vmem:[%s532 + $0x28] sm:$0xf]
        %v3326 = vld [vmem:[%s532 + $0x2c] sm:$0xf]
        %v3327 = vld [vmem:[%s532 + $0x30] sm:$0xf]
        %v3328 = vld [vmem:[%s532 + $0x34] sm:$0xf]
        %v3329 = vld [vmem:[%s532 + $0x38] sm:$0xf]
        %v3330 = vld [vmem:[%s532 + $0x3c] sm:$0xf]
        %v3331 = vunpack.c.l.bf16 %v3315
        %v3332 = vunpack.c.l.bf16 %v3316
        %v3333 = vunpack.c.l.bf16 %v3317
        %v3334 = vunpack.c.l.bf16 %v3318
        %v3335 = vunpack.c.l.bf16 %v3319
        %v3336 = vunpack.c.l.bf16 %v3320
        %v3337 = vunpack.c.l.bf16 %v3321
        %v3338 = vunpack.c.l.bf16 %v3322
        %v3339 = vunpack.c.l.bf16 %v3323
        %v3340 = vunpack.c.l.bf16 %v3324
        %v3341 = vunpack.c.l.bf16 %v3325
        %v3342 = vunpack.c.l.bf16 %v3326
        %v3343 = vunpack.c.l.bf16 %v3327
        %v3344 = vunpack.c.l.bf16 %v3328
        %v3345 = vunpack.c.l.bf16 %v3329
        %v3346 = vunpack.c.l.bf16 %v3330
        %v3347 = vadd.f32 %v3299, %v3331
        %v3348 = vadd.f32 %v3300, %v3332
        %v3349 = vadd.f32 %v3301, %v3333
        %v3350 = vadd.f32 %v3302, %v3334
        %v3351 = vadd.f32 %v3303, %v3335
        %v3352 = vadd.f32 %v3304, %v3336
        %v3353 = vadd.f32 %v3305, %v3337
        %v3354 = vadd.f32 %v3306, %v3338
        %v3355 = vadd.f32 %v3307, %v3339
        %v3356 = vadd.f32 %v3308, %v3340
        %v3357 = vadd.f32 %v3309, %v3341
        %v3358 = vadd.f32 %v3310, %v3342
        %v3359 = vadd.f32 %v3311, %v3343
        %v3360 = vadd.f32 %v3312, %v3344
        %v3361 = vadd.f32 %v3313, %v3345
        %v3362 = vadd.f32 %v3314, %v3346
        %v3363 = vmax.f32 %v3347, 0.0
        %v3364 = vmax.f32 %v3348, 0.0
        %v3365 = vmax.f32 %v3349, 0.0
        %v3366 = vmax.f32 %v3350, 0.0
        %v3367 = vmax.f32 %v3351, 0.0
        %v3368 = vmax.f32 %v3352, 0.0
        %v3369 = vmax.f32 %v3353, 0.0
        %v3370 = vmax.f32 %v3354, 0.0
        %v3371 = vmax.f32 %v3355, 0.0
        %v3372 = vmax.f32 %v3356, 0.0
        %v3373 = vmax.f32 %v3357, 0.0
        %v3374 = vmax.f32 %v3358, 0.0
        %v3375 = vmax.f32 %v3359, 0.0
        %v3376 = vmax.f32 %v3360, 0.0
        %v3377 = vmax.f32 %v3361, 0.0
        %v3378 = vmax.f32 %v3362, 0.0
        %3379 = vst [vmem:[%s525] sm:$0xff] %v3363
        %3380 = vst [vmem:[%s525 + $0x8] sm:$0xff] %v3364
        %3381 = vst [vmem:[%s525 + $0x10] sm:$0xff] %v3365
        %3382 = vst [vmem:[%s525 + $0x18] sm:$0xff] %v3366
        %3383 = vst [vmem:[%s525 + $0x20] sm:$0xff] %v3367
        %3384 = vst [vmem:[%s525 + $0x28] sm:$0xff] %v3368
        %3385 = vst [vmem:[%s525 + $0x30] sm:$0xff] %v3369
        %3386 = vst [vmem:[%s525 + $0x38] sm:$0xff] %v3370
        %3387 = vst [vmem:[%s525 + $0x40] sm:$0xff] %v3371
        %3388 = vst [vmem:[%s525 + $0x48] sm:$0xff] %v3372
        %3389 = vst [vmem:[%s525 + $0x50] sm:$0xff] %v3373
        %3390 = vst [vmem:[%s525 + $0x58] sm:$0xff] %v3374
        %3391 = vst [vmem:[%s525 + $0x60] sm:$0xff] %v3375
        %3392 = vst [vmem:[%s525 + $0x68] sm:$0xff] %v3376
        %3393 = vst [vmem:[%s525 + $0x70] sm:$0xff] %v3377
        %3394 = vst [vmem:[%s525 + $0x78] sm:$0xff] %v3378
        %s3395 = sand.u32 %s345, 1
        %s3396 = scalar_lea.sflag [#allocation5], %s3395
        %s3397 = sand.u32 %s345, 1
        %s3398 = smul.addr %s3397, 128
        %s3399 = scalar_lea.vmem [#allocation4], %s3398
        // Predicated region
        $region69: #{residual_block_forward.1} parent=67 // pred_check
          %p3400 = pneg %p355
        $region70: #{residual_block_forward.1} parent=67 // pred_check_branch
          %3402 = sbr.rel (%p3400) target = $region72
        $region71: #{residual_block_forward.1} parent=67 // pred_region
          %s3403 = smul.u32 %s30, 2
          %s3404 = sadd.s32 %s3403, %s31
          %s3405 = smul.u32 16, %s3404
          %3407 = vsyncadd %s3396, 0
          %s3408 = smul.addr %s3405, 8
          %s3409 = scalar_lea.hbm %s12, %s3408
          %s3410 = sshll.u32 %s3399, 4
          %s3411 = int_to_ptr.vmem [resolvable:$true] %s3410
          %s3412 = sshll.u32 %s3409, 4
          %s3413 = int_to_ptr.hbm [resolvable:$true] %s3412
          %3418 = dma.vmem_to_hbm [thread:$0]  %s3411, 2048, %s3413, %s3396, 128, 128, 8
        $region72: #{residual_block_forward.1} parent=67 // pred_fallthru
          _
      $region68: #{residual_block_forward.1} parent=5 // pred_fallthru
        _
      %p3419 = scmp.le.s32.totalorder 2, %s21
      // Predicated region
      $region73: #{residual_block_forward.1} parent=5 // pred_check
        %p3420 = pneg %p3419
      $region74: #{residual_block_forward.1} parent=5 // pred_check_branch
        %3422 = sbr.rel (%p3420) target = $region76
      $region75: #{residual_block_forward.1} parent=5 // pred_region
        %s3423 = ssub.s32 %s21, 2
        // Predicated region
        $region77: #{residual_block_forward.1} parent=75 // pred_check
          %p3424 = pneg %p361
        $region78: #{residual_block_forward.1} parent=75 // pred_check_branch
          %3426 = sbr.rel (%p3424) target = $region80
        $region79: #{residual_block_forward.1} parent=75 // pred_region
          %s3427 = sand.u32 %s346, 1
          %s3428 = scalar_lea.sflag [#allocation5], %s3427
          %s3429 = sand.u32 %s346, 1
          %s3430 = smul.addr %s3429, 128
          %s3431 = scalar_lea.vmem [#allocation4], %s3430
          %3433 = dma.done %s3428, 2048
        $region80: #{residual_block_forward.1} parent=75 // pred_fallthru
          _
      $region76: #{residual_block_forward.1} parent=5 // pred_fallthru
        _
    $region6: #{residual_block_forward.1} parent=1 // loop_footer
      %s25 = sadd.s32 1, %s21
    $region7: #{residual_block_forward.1} parent=1 // loop_footer_branch
      %20 = sbr.rel target = $region3
    $region8: #{residual_block_forward.1} parent=1 // loop_exit
      _
    %3434 = vsyncpa [#allocation5], 1
    %s3435 = scalar_lea.sflag [#allocation5], 1
    %3436 = vsyncpa %s3435, 1

</llo_original>
